<compile_context>
chip_gen: v7x
topology: tpu7x:2x2x1
jax: 0.10.0
libtpu: 0.0.40
codegen_flags: <defaults>
</compile_context>

<pallas_src>
import jax
import jax.numpy as jnp
from jax import lax
from jax.experimental import pallas as pl
from jax.experimental.pallas import tpu as pltpu

NEG_SLOPE = 0.2
C1, C2, C3 = 16, 32, 32          # conv channel widths from the nn.Module
KH = KW = 5                      # conv kernel size


def leaky(x):
    return jnp.where(x > 0, x, NEG_SLOPE * x)


# --------------------------------------------------------------------------
# Plain-JAX parameter preprocessing (tiny, weights-only; done once per call).
# Expands a (5,5,Cin,Cout) HWIO conv weight into 5 block-banded matrices
#   Wbig[di][j*Cin + ci, oj*Cout + co] = w[di, j-oj, ci, co]   (0 <= j-oj < 5)
# so that a full conv row becomes one (rows, W_in*Cin) @ (W_in*Cin, OW*Cout) matmul.
# --------------------------------------------------------------------------
def expand_conv_weight(w, w_in):
    kh, kw, cin, cout = w.shape
    ow = w_in - kw + 1
    out = jnp.zeros((kh, w_in * cin, ow * cout), jnp.float32)
    for dj in range(kw):
        for oj in range(ow):
            j = oj + dj
            out = out.at[:, j * cin:(j + 1) * cin,
                         oj * cout:(oj + 1) * cout].set(w[:, dj].astype(jnp.float32))
    return out


# --------------------------------------------------------------------------
# Fused kernel factory (tb samples per grid step; H, W static).
# Activation slabs live in padded VMEM scratch:
#   a0: (tb*H + 8, W)           rows r = t*H + i,  lanes = image column j
#   h1: (tb*H + 8, OW1*16)      lanes = oj*16 + c
#   h2: (tb*H + 8, OW2*32)      lanes = oj*32 + c
# Rows with (r mod H) >= valid height of a layer are "don't care" rows; they are
# never read by valid rows of the next layer and are excluded from the pool.
# --------------------------------------------------------------------------
def make_fused_kernel(tb, H, W):
    R = tb * H
    oh1, ow1 = H - 4, W - 4
    oh2, ow2 = H - 8, W - 8
    oh3, ow3 = H - 12, W - 12

    def kernel(x_ref, w1_ref, b1_ref, w2_ref, b2_ref, w3_ref, b3_ref,
               wl1_ref, bl1_ref, wl2_ref, bl2_ref, wl3t_ref, bl3_ref,
               o_ref, a0_ref, h1_ref, h2_ref):

        def conv(src_ref, w_ref, b_ref):
            # sum over the 5 kernel rows: shifted row-slice @ block-banded weight
            acc = jnp.dot(src_ref[0:R, :], w_ref[0],
                          preferred_element_type=jnp.float32)
            for di in range(1, KH):
                acc = acc + jnp.dot(src_ref[di:di + R, :], w_ref[di],
                                    preferred_element_type=jnp.float32)
            return leaky(acc + b_ref[...])

        # stage the input block into padded scratch (pad rows zeroed -> stays finite)
        a0_ref[0:R, :] = x_ref[...]
        a0_ref[R:R + 8, :] = jnp.zeros((8, W), jnp.float32)

        # conv1 (1 -> 16) + LeakyReLU
        h1_ref[0:R, :] = conv(a0_ref, w1_ref, b1_ref)
        h1_ref[R:R + 8, :] = jnp.zeros((8, ow1 * C1), jnp.float32)

        # conv2 (16 -> 32) + LeakyReLU
        h2_ref[0:R, :] = conv(h1_ref, w2_ref, b2_ref)
        h2_ref[R:R + 8, :] = jnp.zeros((8, ow2 * C2), jnp.float32)

        # conv3 (32 -> 32) + LeakyReLU (kept as a value; lanes = oj*32 + c, oj < ow3)
        h3 = conv(h2_ref, w3_ref, b3_ref)                      # (R, ow3*C3)

        # AdaptiveMaxPool2d(1): max over columns (lane groups of C3) ...
        m = h3[:, 0:C3]
        for oj in range(1, ow3):
            m = jnp.maximum(m, h3[:, oj * C3:(oj + 1) * C3])   # (R, C3)
        # ... then max over the oh3 valid rows of each sample
        feats = []
        for t in range(tb):
            blk = m[t * H:t * H + oh3, :]                      # (oh3, C3)
            feats.append(jnp.max(blk, axis=0, keepdims=True))  # (1, C3)
        feat = jnp.concatenate(feats, axis=0)                  # (tb, C3)

        # MLP head: Linear(32,128)+LReLU -> Linear(128,128)+LReLU -> Linear(128,1) -> Sigmoid
        z = leaky(jnp.dot(feat, wl1_ref[...],
                          preferred_element_type=jnp.float32) + bl1_ref[...])
        z = leaky(jnp.dot(z, wl2_ref[...],
                          preferred_element_type=jnp.float32) + bl2_ref[...])
        logit = jnp.sum(z * wl3t_ref[...], axis=1, keepdims=True) + bl3_ref[...]
        o_ref[...] = 1.0 / (1.0 + jnp.exp(-logit))             # (tb, 1)

    return kernel


# --------------------------------------------------------------------------
# Full forward, matching Discriminator3.forward semantics
# --------------------------------------------------------------------------
def discriminator3_forward(img, params, tb=8):
    batch, seq, H, W = img.shape
    assert H >= 13 and W >= 13, "need at least 13x13 input for three valid 5x5 convs"
    N = batch * seq

    # PyTorch: img.reshape((seq*batch, 1, H, W)) -> flat sample order n = b*seq + s
    x = img.reshape(N, H, W).astype(jnp.float32)

    num_blocks = pl.cdiv(N, tb)
    n_pad = num_blocks * tb
    if n_pad != N:
        x = jnp.pad(x, ((0, n_pad - N), (0, 0), (0, 0)))
    x2d = x.reshape(n_pad * H, W)                      # rows r = t*H + i

    ow1, ow2, ow3 = W - 4, W - 8, W - 12

    # weight preprocessing (tiny; block-banded conv matrices + lane-tiled biases)
    w1b = expand_conv_weight(params["w1"], W)          # (5, W,       ow1*16)
    w2b = expand_conv_weight(params["w2"], ow1)        # (5, ow1*16,  ow2*32)
    w3b = expand_conv_weight(params["w3"], ow2)        # (5, ow2*32,  ow3*32)
    b1b = jnp.tile(params["b1"], (1, ow1))             # (1, ow1*16)
    b2b = jnp.tile(params["b2"], (1, ow2))             # (1, ow2*32)
    b3b = jnp.tile(params["b3"], (1, ow3))             # (1, ow3*32)
    wl3t = params["wl3"].T                             # (1, 128)

    R = tb * H
    kernel = make_fused_kernel(tb, H, W)

    out = pl.pallas_call(
        kernel,
        out_shape=jax.ShapeDtypeStruct((n_pad, 1), jnp.float32),
        grid_spec=pltpu.PrefetchScalarGridSpec(
            num_scalar_prefetch=0,
            grid=(num_blocks,),
            in_specs=[
                pl.BlockSpec((R, W), lambda i: (i, 0)),            # image block
                pl.BlockSpec(w1b.shape, lambda i: (0, 0, 0)),      # weights: resident
                pl.BlockSpec(b1b.shape, lambda i: (0, 0)),
                pl.BlockSpec(w2b.shape, lambda i: (0, 0, 0)),
                pl.BlockSpec(b2b.shape, lambda i: (0, 0)),
                pl.BlockSpec(w3b.shape, lambda i: (0, 0, 0)),
                pl.BlockSpec(b3b.shape, lambda i: (0, 0)),
                pl.BlockSpec(params["wl1"].shape, lambda i: (0, 0)),
                pl.BlockSpec(params["bl1"].shape, lambda i: (0, 0)),
                pl.BlockSpec(params["wl2"].shape, lambda i: (0, 0)),
                pl.BlockSpec(params["bl2"].shape, lambda i: (0, 0)),
                pl.BlockSpec(wl3t.shape, lambda i: (0, 0)),
                pl.BlockSpec(params["bl3"].shape, lambda i: (0, 0)),
            ],
            out_specs=pl.BlockSpec((tb, 1), lambda i: (i, 0)),
            scratch_shapes=[
                pltpu.VMEM((R + 8, W), jnp.float32),               # padded input slab
                pltpu.VMEM((R + 8, ow1 * C1), jnp.float32),        # padded h1 slab
                pltpu.VMEM((R + 8, ow2 * C2), jnp.float32),        # padded h2 slab
            ],
        ),
        compiler_params=pltpu.CompilerParams(
            dimension_semantics=("parallel",),                     # shard blocks over TCs
        ),
    )(x2d, w1b, b1b, w2b, b2b, w3b, b3b,
      params["wl1"], params["bl1"], params["wl2"], params["bl2"],
      wl3t, params["bl3"])

    validity = out[:N]
    # PyTorch: validity.view((seq, batch, 1))
    return validity.reshape(seq, batch, 1)


# --------------------------------------------------------------------------
# Deterministic synthetic parameters (shapes from the nn.Module __init__).
# Conv weights in HWIO layout (k, k, Cin, Cout)  (torch is (Cout, Cin, k, k)).
# --------------------------------------------------------------------------
def init_params(key):
    ks = jax.random.split(key, 12)

    def u(k, shape, fan_in):
        bound = 1.0 / float(fan_in) ** 0.5
        return jax.random.uniform(k, shape, jnp.float32, -bound, bound)

    return {
        "w1": u(ks[0], (5, 5, 1, 16), 25 * 1),    "b1": u(ks[1], (1, 16), 25 * 1),
        "w2": u(ks[2], (5, 5, 16, 32), 25 * 16),  "b2": u(ks[3], (1, 32), 25 * 16),
        "w3": u(ks[4], (5, 5, 32, 32), 25 * 32),  "b3": u(ks[5], (1, 32), 25 * 32),
        "wl1": u(ks[6], (32, 128), 32),           "bl1": u(ks[7], (1, 128), 32),
        "wl2": u(ks[8], (128, 128), 128),         "bl2": u(ks[9], (1, 128), 128),
        "wl3": u(ks[10], (128, 1), 128),          "bl3": u(ks[11], (1, 1), 128),
    }


# --------------------------------------------------------------------------
# Pure-JAX reference (sanity check)
# --------------------------------------------------------------------------
def ref_forward(img, params):
    batch, seq, H, W = img.shape
    N = batch * seq
    x = img.reshape(N, H, W, 1).astype(jnp.float32)
    for wk, bk in (("w1", "b1"), ("w2", "b2"), ("w3", "b3")):
        x = lax.conv_general_dilated(x, params[wk], (1, 1), "VALID",
                                     dimension_numbers=("NHWC", "HWIO", "NHWC"))
        x = leaky(x + params[bk].reshape(1, 1, 1, -1))
    f = jnp.max(x, axis=(1, 2))                          # (N, 32)
    z = leaky(f @ params["wl1"] + params["bl1"])
    z = leaky(z @ params["wl2"] + params["bl2"])
    out = jax.nn.sigmoid(z @ params["wl3"] + params["bl3"])
    return out.reshape(seq, batch, 1)


if __name__ == "__main__":
    key = jax.random.PRNGKey(0)
    kp, kx = jax.random.split(key)
    params = init_params(kp)

    batch, seq, H, W = 2, 8, 16, 16                      # N = 16 samples, 2 grid blocks
    img = jax.random.normal(kx, (batch, seq, H, W), jnp.float32)

    out = jax.jit(discriminator3_forward)(img, params)
    out = jax.block_until_ready(out)

    ref = ref_forward(img, params)
    assert out.shape == (seq, batch, 1), out.shape
    assert jnp.allclose(out, ref, atol=2e-2, rtol=2e-2), (out, ref)
    print("KERNEL_OK")
</pallas_src>

<mosaic_0001>
module attributes {stable_mosaic.version = 11 : i64} {
  func.func @kernel(%arg0: i32, %arg1: memref<128x16xf32, #tpu.memory_space<vmem>>, %arg2: memref<5x16x192xf32, #tpu.memory_space<vmem>>, %arg3: memref<1x192xf32, #tpu.memory_space<vmem>>, %arg4: memref<5x192x256xf32, #tpu.memory_space<vmem>>, %arg5: memref<1x256xf32, #tpu.memory_space<vmem>>, %arg6: memref<5x256x128xf32, #tpu.memory_space<vmem>>, %arg7: memref<1x128xf32, #tpu.memory_space<vmem>>, %arg8: memref<32x128xf32, #tpu.memory_space<vmem>>, %arg9: memref<1x128xf32, #tpu.memory_space<vmem>>, %arg10: memref<128x128xf32, #tpu.memory_space<vmem>>, %arg11: memref<1x128xf32, #tpu.memory_space<vmem>>, %arg12: memref<1x128xf32, #tpu.memory_space<vmem>>, %arg13: memref<1x1xf32, #tpu.memory_space<vmem>>, %arg14: memref<8x1xf32, #tpu.memory_space<vmem>>, %arg15: memref<136x16xf32, #tpu.memory_space<vmem>>, %arg16: memref<136x192xf32, #tpu.memory_space<vmem>>, %arg17: memref<136x256xf32, #tpu.memory_space<vmem>>) attributes {dimension_semantics = [#tpu.dimension_semantics<parallel>], iteration_bounds = array<i64: 2>, scalar_prefetch = 0 : i64, scratch_operands = 3 : i64, tpu.core_type = #tpu.core_type<tc>, window_params = [{transform_indices = @transform_0, window_bounds = array<i64: 128, 16>}, {pipeline_mode = #tpu.pipeline_mode<synchronous>, transform_indices = @transform_1, window_bounds = array<i64: 5, 16, 192>}, {pipeline_mode = #tpu.pipeline_mode<synchronous>, transform_indices = @transform_2, window_bounds = array<i64: 1, 192>}, {pipeline_mode = #tpu.pipeline_mode<synchronous>, transform_indices = @transform_3, window_bounds = array<i64: 5, 192, 256>}, {pipeline_mode = #tpu.pipeline_mode<synchronous>, transform_indices = @transform_4, window_bounds = array<i64: 1, 256>}, {pipeline_mode = #tpu.pipeline_mode<synchronous>, transform_indices = @transform_5, window_bounds = array<i64: 5, 256, 128>}, {pipeline_mode = #tpu.pipeline_mode<synchronous>, transform_indices = @transform_6, window_bounds = array<i64: 1, 128>}, {pipeline_mode = #tpu.pipeline_mode<synchronous>, transform_indices = @transform_7, window_bounds = array<i64: 32, 128>}, {pipeline_mode = #tpu.pipeline_mode<synchronous>, transform_indices = @transform_8, window_bounds = array<i64: 1, 128>}, {pipeline_mode = #tpu.pipeline_mode<synchronous>, transform_indices = @transform_9, window_bounds = array<i64: 128, 128>}, {pipeline_mode = #tpu.pipeline_mode<synchronous>, transform_indices = @transform_10, window_bounds = array<i64: 1, 128>}, {pipeline_mode = #tpu.pipeline_mode<synchronous>, transform_indices = @transform_11, window_bounds = array<i64: 1, 128>}, {pipeline_mode = #tpu.pipeline_mode<synchronous>, transform_indices = @transform_12, window_bounds = array<i64: 1, 1>}, {transform_indices = @transform_13, window_bounds = array<i64: 8, 1>}]} {
    %c0 = arith.constant 0 : index
    %c0_0 = arith.constant 0 : index
    %0 = vector.load %arg1[%c0, %c0_0] : memref<128x16xf32, #tpu.memory_space<vmem>>, vector<128x16xf32>
    %c0_1 = arith.constant 0 : index
    %c0_2 = arith.constant 0 : index
    %1 = vector.load %arg15[%c0_1, %c0_2] : memref<136x16xf32, #tpu.memory_space<vmem>>, vector<128x16xf32>
    tpu.vector_store %arg15[%c0_1, %c0_2], %0 {strides = array<i32>} : memref<136x16xf32, #tpu.memory_space<vmem>>, vector<128x16xf32>,
    %cst = arith.constant 0.000000e+00 : f32
    %2 = vector.broadcast %cst : f32 to vector<8x16xf32>
    %c128 = arith.constant 128 : index
    %c0_3 = arith.constant 0 : index
    %3 = vector.load %arg15[%c128, %c0_3] : memref<136x16xf32, #tpu.memory_space<vmem>>, vector<8x16xf32>
    tpu.vector_store %arg15[%c128, %c0_3], %2 {strides = array<i32>} : memref<136x16xf32, #tpu.memory_space<vmem>>, vector<8x16xf32>,
    %c0_4 = arith.constant 0 : index
    %c0_5 = arith.constant 0 : index
    %4 = vector.load %arg15[%c0_4, %c0_5] : memref<136x16xf32, #tpu.memory_space<vmem>>, vector<128x16xf32>
    %c0_6 = arith.constant 0 : index
    %c0_7 = arith.constant 0 : index
    %c0_8 = arith.constant 0 : index
    %5 = vector.load %arg2[%c0_6, %c0_7, %c0_8] : memref<5x16x192xf32, #tpu.memory_space<vmem>>, vector<1x16x192xf32>
    %6 = vector.shape_cast %5 : vector<1x16x192xf32> to vector<16x192xf32>
    %cst_9 = arith.constant dense<0.000000e+00> : vector<128x192xf32>
    %7 = tpu.matmul %4, %6, %cst_9 {dimension_numbers = #tpu.dot_dimension_numbers<[1], [0], [0], [1], [0, 0, 1, 1], [], []>} : vector<128x16xf32>, vector<16x192xf32>, vector<128x192xf32> -> vector<128x192xf32>
    %c1 = arith.constant 1 : index
    %c0_10 = arith.constant 0 : index
    %8 = vector.load %arg15[%c1, %c0_10] : memref<136x16xf32, #tpu.memory_space<vmem>>, vector<128x16xf32>
    %c1_11 = arith.constant 1 : index
    %c0_12 = arith.constant 0 : index
    %c0_13 = arith.constant 0 : index
    %9 = vector.load %arg2[%c1_11, %c0_12, %c0_13] : memref<5x16x192xf32, #tpu.memory_space<vmem>>, vector<1x16x192xf32>
    %10 = vector.shape_cast %9 : vector<1x16x192xf32> to vector<16x192xf32>
    %cst_14 = arith.constant dense<0.000000e+00> : vector<128x192xf32>
    %11 = tpu.matmul %8, %10, %cst_14 {dimension_numbers = #tpu.dot_dimension_numbers<[1], [0], [0], [1], [0, 0, 1, 1], [], []>} : vector<128x16xf32>, vector<16x192xf32>, vector<128x192xf32> -> vector<128x192xf32>
    %12 = arith.addf %7, %11 : vector<128x192xf32>
    %c2 = arith.constant 2 : index
    %c0_15 = arith.constant 0 : index
    %13 = vector.load %arg15[%c2, %c0_15] : memref<136x16xf32, #tpu.memory_space<vmem>>, vector<128x16xf32>
    %c2_16 = arith.constant 2 : index
    %c0_17 = arith.constant 0 : index
    %c0_18 = arith.constant 0 : index
    %14 = vector.load %arg2[%c2_16, %c0_17, %c0_18] : memref<5x16x192xf32, #tpu.memory_space<vmem>>, vector<1x16x192xf32>
    %15 = vector.shape_cast %14 : vector<1x16x192xf32> to vector<16x192xf32>
    %cst_19 = arith.constant dense<0.000000e+00> : vector<128x192xf32>
    %16 = tpu.matmul %13, %15, %cst_19 {dimension_numbers = #tpu.dot_dimension_numbers<[1], [0], [0], [1], [0, 0, 1, 1], [], []>} : vector<128x16xf32>, vector<16x192xf32>, vector<128x192xf32> -> vector<128x192xf32>
    %17 = arith.addf %12, %16 : vector<128x192xf32>
    %c3 = arith.constant 3 : index
    %c0_20 = arith.constant 0 : index
    %18 = vector.load %arg15[%c3, %c0_20] : memref<136x16xf32, #tpu.memory_space<vmem>>, vector<128x16xf32>
    %c3_21 = arith.constant 3 : index
    %c0_22 = arith.constant 0 : index
    %c0_23 = arith.constant 0 : index
    %19 = vector.load %arg2[%c3_21, %c0_22, %c0_23] : memref<5x16x192xf32, #tpu.memory_space<vmem>>, vector<1x16x192xf32>
    %20 = vector.shape_cast %19 : vector<1x16x192xf32> to vector<16x192xf32>
    %cst_24 = arith.constant dense<0.000000e+00> : vector<128x192xf32>
    %21 = tpu.matmul %18, %20, %cst_24 {dimension_numbers = #tpu.dot_dimension_numbers<[1], [0], [0], [1], [0, 0, 1, 1], [], []>} : vector<128x16xf32>, vector<16x192xf32>, vector<128x192xf32> -> vector<128x192xf32>
    %22 = arith.addf %17, %21 : vector<128x192xf32>
    %c4 = arith.constant 4 : index
    %c0_25 = arith.constant 0 : index
    %23 = vector.load %arg15[%c4, %c0_25] : memref<136x16xf32, #tpu.memory_space<vmem>>, vector<128x16xf32>
    %c4_26 = arith.constant 4 : index
    %c0_27 = arith.constant 0 : index
    %c0_28 = arith.constant 0 : index
    %24 = vector.load %arg2[%c4_26, %c0_27, %c0_28] : memref<5x16x192xf32, #tpu.memory_space<vmem>>, vector<1x16x192xf32>
    %25 = vector.shape_cast %24 : vector<1x16x192xf32> to vector<16x192xf32>
    %cst_29 = arith.constant dense<0.000000e+00> : vector<128x192xf32>
    %26 = tpu.matmul %23, %25, %cst_29 {dimension_numbers = #tpu.dot_dimension_numbers<[1], [0], [0], [1], [0, 0, 1, 1], [], []>} : vector<128x16xf32>, vector<16x192xf32>, vector<128x192xf32> -> vector<128x192xf32>
    %27 = arith.addf %22, %26 : vector<128x192xf32>
    %c0_30 = arith.constant 0 : index
    %c0_31 = arith.constant 0 : index
    %28 = vector.load %arg3[%c0_30, %c0_31] : memref<1x192xf32, #tpu.memory_space<vmem>>, vector<1x192xf32>
    %29 = vector.broadcast %28 : vector<1x192xf32> to vector<128x192xf32>
    %30 = arith.addf %27, %29 : vector<128x192xf32>
    %cst_32 = arith.constant 0.000000e+00 : f32
    %31 = vector.broadcast %cst_32 : f32 to vector<128x192xf32>
    %32 = arith.cmpf ogt, %30, %31 : vector<128x192xf32>
    %cst_33 = arith.constant 2.000000e-01 : f32
    %33 = vector.broadcast %cst_33 : f32 to vector<128x192xf32>
    %34 = arith.mulf %33, %30 : vector<128x192xf32>
    %35 = arith.select %32, %30, %34 : vector<128x192xi1>, vector<128x192xf32>
    %c0_34 = arith.constant 0 : index
    %c0_35 = arith.constant 0 : index
    %36 = vector.load %arg16[%c0_34, %c0_35] : memref<136x192xf32, #tpu.memory_space<vmem>>, vector<128x192xf32>
    tpu.vector_store %arg16[%c0_34, %c0_35], %35 {strides = array<i32>} : memref<136x192xf32, #tpu.memory_space<vmem>>, vector<128x192xf32>,
    %cst_36 = arith.constant 0.000000e+00 : f32
    %37 = vector.broadcast %cst_36 : f32 to vector<8x192xf32>
    %c128_37 = arith.constant 128 : index
    %c0_38 = arith.constant 0 : index
    %38 = vector.load %arg16[%c128_37, %c0_38] : memref<136x192xf32, #tpu.memory_space<vmem>>, vector<8x192xf32>
    tpu.vector_store %arg16[%c128_37, %c0_38], %37 {strides = array<i32>} : memref<136x192xf32, #tpu.memory_space<vmem>>, vector<8x192xf32>,
    %c0_39 = arith.constant 0 : index
    %c0_40 = arith.constant 0 : index
    %39 = vector.load %arg16[%c0_39, %c0_40] : memref<136x192xf32, #tpu.memory_space<vmem>>, vector<128x192xf32>
    %c0_41 = arith.constant 0 : index
    %c0_42 = arith.constant 0 : index
    %c0_43 = arith.constant 0 : index
    %40 = vector.load %arg4[%c0_41, %c0_42, %c0_43] : memref<5x192x256xf32, #tpu.memory_space<vmem>>, vector<1x192x256xf32>
    %41 = vector.shape_cast %40 : vector<1x192x256xf32> to vector<192x256xf32>
    %cst_44 = arith.constant dense<0.000000e+00> : vector<128x256xf32>
    %42 = tpu.matmul %39, %41, %cst_44 {dimension_numbers = #tpu.dot_dimension_numbers<[1], [0], [0], [1], [0, 0, 1, 1], [], []>} : vector<128x192xf32>, vector<192x256xf32>, vector<128x256xf32> -> vector<128x256xf32>
    %c1_45 = arith.constant 1 : index
    %c0_46 = arith.constant 0 : index
    %43 = vector.load %arg16[%c1_45, %c0_46] : memref<136x192xf32, #tpu.memory_space<vmem>>, vector<128x192xf32>
    %c1_47 = arith.constant 1 : index
    %c0_48 = arith.constant 0 : index
    %c0_49 = arith.constant 0 : index
    %44 = vector.load %arg4[%c1_47, %c0_48, %c0_49] : memref<5x192x256xf32, #tpu.memory_space<vmem>>, vector<1x192x256xf32>
    %45 = vector.shape_cast %44 : vector<1x192x256xf32> to vector<192x256xf32>
    %cst_50 = arith.constant dense<0.000000e+00> : vector<128x256xf32>
    %46 = tpu.matmul %43, %45, %cst_50 {dimension_numbers = #tpu.dot_dimension_numbers<[1], [0], [0], [1], [0, 0, 1, 1], [], []>} : vector<128x192xf32>, vector<192x256xf32>, vector<128x256xf32> -> vector<128x256xf32>
    %47 = arith.addf %42, %46 : vector<128x256xf32>
    %c2_51 = arith.constant 2 : index
    %c0_52 = arith.constant 0 : index
    %48 = vector.load %arg16[%c2_51, %c0_52] : memref<136x192xf32, #tpu.memory_space<vmem>>, vector<128x192xf32>
    %c2_53 = arith.constant 2 : index
    %c0_54 = arith.constant 0 : index
    %c0_55 = arith.constant 0 : index
    %49 = vector.load %arg4[%c2_53, %c0_54, %c0_55] : memref<5x192x256xf32, #tpu.memory_space<vmem>>, vector<1x192x256xf32>
    %50 = vector.shape_cast %49 : vector<1x192x256xf32> to vector<192x256xf32>
    %cst_56 = arith.constant dense<0.000000e+00> : vector<128x256xf32>
    %51 = tpu.matmul %48, %50, %cst_56 {dimension_numbers = #tpu.dot_dimension_numbers<[1], [0], [0], [1], [0, 0, 1, 1], [], []>} : vector<128x192xf32>, vector<192x256xf32>, vector<128x256xf32> -> vector<128x256xf32>
    %52 = arith.addf %47, %51 : vector<128x256xf32>
    %c3_57 = arith.constant 3 : index
    %c0_58 = arith.constant 0 : index
    %53 = vector.load %arg16[%c3_57, %c0_58] : memref<136x192xf32, #tpu.memory_space<vmem>>, vector<128x192xf32>
    %c3_59 = arith.constant 3 : index
    %c0_60 = arith.constant 0 : index
    %c0_61 = arith.constant 0 : index
    %54 = vector.load %arg4[%c3_59, %c0_60, %c0_61] : memref<5x192x256xf32, #tpu.memory_space<vmem>>, vector<1x192x256xf32>
    %55 = vector.shape_cast %54 : vector<1x192x256xf32> to vector<192x256xf32>
    %cst_62 = arith.constant dense<0.000000e+00> : vector<128x256xf32>
    %56 = tpu.matmul %53, %55, %cst_62 {dimension_numbers = #tpu.dot_dimension_numbers<[1], [0], [0], [1], [0, 0, 1, 1], [], []>} : vector<128x192xf32>, vector<192x256xf32>, vector<128x256xf32> -> vector<128x256xf32>
    %57 = arith.addf %52, %56 : vector<128x256xf32>
    %c4_63 = arith.constant 4 : index
    %c0_64 = arith.constant 0 : index
    %58 = vector.load %arg16[%c4_63, %c0_64] : memref<136x192xf32, #tpu.memory_space<vmem>>, vector<128x192xf32>
    %c4_65 = arith.constant 4 : index
    %c0_66 = arith.constant 0 : index
    %c0_67 = arith.constant 0 : index
    %59 = vector.load %arg4[%c4_65, %c0_66, %c0_67] : memref<5x192x256xf32, #tpu.memory_space<vmem>>, vector<1x192x256xf32>
    %60 = vector.shape_cast %59 : vector<1x192x256xf32> to vector<192x256xf32>
    %cst_68 = arith.constant dense<0.000000e+00> : vector<128x256xf32>
    %61 = tpu.matmul %58, %60, %cst_68 {dimension_numbers = #tpu.dot_dimension_numbers<[1], [0], [0], [1], [0, 0, 1, 1], [], []>} : vector<128x192xf32>, vector<192x256xf32>, vector<128x256xf32> -> vector<128x256xf32>
    %62 = arith.addf %57, %61 : vector<128x256xf32>
    %c0_69 = arith.constant 0 : index
    %c0_70 = arith.constant 0 : index
    %63 = vector.load %arg5[%c0_69, %c0_70] : memref<1x256xf32, #tpu.memory_space<vmem>>, vector<1x256xf32>
    %64 = vector.broadcast %63 : vector<1x256xf32> to vector<128x256xf32>
    %65 = arith.addf %62, %64 : vector<128x256xf32>
    %cst_71 = arith.constant 0.000000e+00 : f32
    %66 = vector.broadcast %cst_71 : f32 to vector<128x256xf32>
    %67 = arith.cmpf ogt, %65, %66 : vector<128x256xf32>
    %cst_72 = arith.constant 2.000000e-01 : f32
    %68 = vector.broadcast %cst_72 : f32 to vector<128x256xf32>
    %69 = arith.mulf %68, %65 : vector<128x256xf32>
    %70 = arith.select %67, %65, %69 : vector<128x256xi1>, vector<128x256xf32>
    %c0_73 = arith.constant 0 : index
    %c0_74 = arith.constant 0 : index
    %71 = vector.load %arg17[%c0_73, %c0_74] : memref<136x256xf32, #tpu.memory_space<vmem>>, vector<128x256xf32>
    tpu.vector_store %arg17[%c0_73, %c0_74], %70 {strides = array<i32>} : memref<136x256xf32, #tpu.memory_space<vmem>>, vector<128x256xf32>,
    %cst_75 = arith.constant 0.000000e+00 : f32
    %72 = vector.broadcast %cst_75 : f32 to vector<8x256xf32>
    %c128_76 = arith.constant 128 : index
    %c0_77 = arith.constant 0 : index
    %73 = vector.load %arg17[%c128_76, %c0_77] : memref<136x256xf32, #tpu.memory_space<vmem>>, vector<8x256xf32>
    tpu.vector_store %arg17[%c128_76, %c0_77], %72 {strides = array<i32>} : memref<136x256xf32, #tpu.memory_space<vmem>>, vector<8x256xf32>,
    %c0_78 = arith.constant 0 : index
    %c0_79 = arith.constant 0 : index
    %74 = vector.load %arg17[%c0_78, %c0_79] : memref<136x256xf32, #tpu.memory_space<vmem>>, vector<128x256xf32>
    %c0_80 = arith.constant 0 : index
    %c0_81 = arith.constant 0 : index
    %c0_82 = arith.constant 0 : index
    %75 = vector.load %arg6[%c0_80, %c0_81, %c0_82] : memref<5x256x128xf32, #tpu.memory_space<vmem>>, vector<1x256x128xf32>
    %76 = vector.shape_cast %75 : vector<1x256x128xf32> to vector<256x128xf32>
    %cst_83 = arith.constant dense<0.000000e+00> : vector<128x128xf32>
    %77 = tpu.matmul %74, %76, %cst_83 {dimension_numbers = #tpu.dot_dimension_numbers<[1], [0], [0], [1], [0, 0, 1, 1], [], []>} : vector<128x256xf32>, vector<256x128xf32>, vector<128x128xf32> -> vector<128x128xf32>
    %c1_84 = arith.constant 1 : index
    %c0_85 = arith.constant 0 : index
    %78 = vector.load %arg17[%c1_84, %c0_85] : memref<136x256xf32, #tpu.memory_space<vmem>>, vector<128x256xf32>
    %c1_86 = arith.constant 1 : index
    %c0_87 = arith.constant 0 : index
    %c0_88 = arith.constant 0 : index
    %79 = vector.load %arg6[%c1_86, %c0_87, %c0_88] : memref<5x256x128xf32, #tpu.memory_space<vmem>>, vector<1x256x128xf32>
    %80 = vector.shape_cast %79 : vector<1x256x128xf32> to vector<256x128xf32>
    %cst_89 = arith.constant dense<0.000000e+00> : vector<128x128xf32>
    %81 = tpu.matmul %78, %80, %cst_89 {dimension_numbers = #tpu.dot_dimension_numbers<[1], [0], [0], [1], [0, 0, 1, 1], [], []>} : vector<128x256xf32>, vector<256x128xf32>, vector<128x128xf32> -> vector<128x128xf32>
    %82 = arith.addf %77, %81 : vector<128x128xf32>
    %c2_90 = arith.constant 2 : index
    %c0_91 = arith.constant 0 : index
    %83 = vector.load %arg17[%c2_90, %c0_91] : memref<136x256xf32, #tpu.memory_space<vmem>>, vector<128x256xf32>
    %c2_92 = arith.constant 2 : index
    %c0_93 = arith.constant 0 : index
    %c0_94 = arith.constant 0 : index
    %84 = vector.load %arg6[%c2_92, %c0_93, %c0_94] : memref<5x256x128xf32, #tpu.memory_space<vmem>>, vector<1x256x128xf32>
    %85 = vector.shape_cast %84 : vector<1x256x128xf32> to vector<256x128xf32>
    %cst_95 = arith.constant dense<0.000000e+00> : vector<128x128xf32>
    %86 = tpu.matmul %83, %85, %cst_95 {dimension_numbers = #tpu.dot_dimension_numbers<[1], [0], [0], [1], [0, 0, 1, 1], [], []>} : vector<128x256xf32>, vector<256x128xf32>, vector<128x128xf32> -> vector<128x128xf32>
    %87 = arith.addf %82, %86 : vector<128x128xf32>
    %c3_96 = arith.constant 3 : index
    %c0_97 = arith.constant 0 : index
    %88 = vector.load %arg17[%c3_96, %c0_97] : memref<136x256xf32, #tpu.memory_space<vmem>>, vector<128x256xf32>
    %c3_98 = arith.constant 3 : index
    %c0_99 = arith.constant 0 : index
    %c0_100 = arith.constant 0 : index
    %89 = vector.load %arg6[%c3_98, %c0_99, %c0_100] : memref<5x256x128xf32, #tpu.memory_space<vmem>>, vector<1x256x128xf32>
    %90 = vector.shape_cast %89 : vector<1x256x128xf32> to vector<256x128xf32>
    %cst_101 = arith.constant dense<0.000000e+00> : vector<128x128xf32>
    %91 = tpu.matmul %88, %90, %cst_101 {dimension_numbers = #tpu.dot_dimension_numbers<[1], [0], [0], [1], [0, 0, 1, 1], [], []>} : vector<128x256xf32>, vector<256x128xf32>, vector<128x128xf32> -> vector<128x128xf32>
    %92 = arith.addf %87, %91 : vector<128x128xf32>
    %c4_102 = arith.constant 4 : index
    %c0_103 = arith.constant 0 : index
    %93 = vector.load %arg17[%c4_102, %c0_103] : memref<136x256xf32, #tpu.memory_space<vmem>>, vector<128x256xf32>
    %c4_104 = arith.constant 4 : index
    %c0_105 = arith.constant 0 : index
    %c0_106 = arith.constant 0 : index
    %94 = vector.load %arg6[%c4_104, %c0_105, %c0_106] : memref<5x256x128xf32, #tpu.memory_space<vmem>>, vector<1x256x128xf32>
    %95 = vector.shape_cast %94 : vector<1x256x128xf32> to vector<256x128xf32>
    %cst_107 = arith.constant dense<0.000000e+00> : vector<128x128xf32>
    %96 = tpu.matmul %93, %95, %cst_107 {dimension_numbers = #tpu.dot_dimension_numbers<[1], [0], [0], [1], [0, 0, 1, 1], [], []>} : vector<128x256xf32>, vector<256x128xf32>, vector<128x128xf32> -> vector<128x128xf32>
    %97 = arith.addf %92, %96 : vector<128x128xf32>
    %c0_108 = arith.constant 0 : index
    %c0_109 = arith.constant 0 : index
    %98 = vector.load %arg7[%c0_108, %c0_109] : memref<1x128xf32, #tpu.memory_space<vmem>>, vector<1x128xf32>
    %99 = vector.broadcast %98 : vector<1x128xf32> to vector<128x128xf32>
    %100 = arith.addf %97, %99 : vector<128x128xf32>
    %cst_110 = arith.constant 0.000000e+00 : f32
    %101 = vector.broadcast %cst_110 : f32 to vector<128x128xf32>
    %102 = arith.cmpf ogt, %100, %101 : vector<128x128xf32>
    %cst_111 = arith.constant 2.000000e-01 : f32
    %103 = vector.broadcast %cst_111 : f32 to vector<128x128xf32>
    %104 = arith.mulf %103, %100 : vector<128x128xf32>
    %105 = arith.select %102, %100, %104 : vector<128x128xi1>, vector<128x128xf32>
    %106 = vector.extract_strided_slice %105 {offsets = [0, 0], sizes = [128, 32], strides = [1, 1]} : vector<128x128xf32> to vector<128x32xf32>
    %107 = vector.extract_strided_slice %105 {offsets = [0, 32], sizes = [128, 32], strides = [1, 1]} : vector<128x128xf32> to vector<128x32xf32>
    %108 = arith.maximumf %106, %107 : vector<128x32xf32>
    %109 = vector.extract_strided_slice %105 {offsets = [0, 64], sizes = [128, 32], strides = [1, 1]} : vector<128x128xf32> to vector<128x32xf32>
    %110 = arith.maximumf %108, %109 : vector<128x32xf32>
    %111 = vector.extract_strided_slice %105 {offsets = [0, 96], sizes = [128, 32], strides = [1, 1]} : vector<128x128xf32> to vector<128x32xf32>
    %112 = arith.maximumf %110, %111 : vector<128x32xf32>
    %113 = vector.extract_strided_slice %112 {offsets = [0, 0], sizes = [4, 32], strides = [1, 1]} : vector<128x32xf32> to vector<4x32xf32>
    %cst_112 = arith.constant dense<0xFF800000> : vector<32xf32>
    %114 = vector.multi_reduction <maximumf>, %113, %cst_112 [0] : vector<4x32xf32> to vector<32xf32>
    %115 = vector.shape_cast %114 : vector<32xf32> to vector<1x32xf32>
    %116 = vector.extract_strided_slice %112 {offsets = [16, 0], sizes = [4, 32], strides = [1, 1]} : vector<128x32xf32> to vector<4x32xf32>
    %cst_113 = arith.constant dense<0xFF800000> : vector<32xf32>
    %117 = vector.multi_reduction <maximumf>, %116, %cst_113 [0] : vector<4x32xf32> to vector<32xf32>
    %118 = vector.shape_cast %117 : vector<32xf32> to vector<1x32xf32>
    %119 = vector.extract_strided_slice %112 {offsets = [32, 0], sizes = [4, 32], strides = [1, 1]} : vector<128x32xf32> to vector<4x32xf32>
    %cst_114 = arith.constant dense<0xFF800000> : vector<32xf32>
    %120 = vector.multi_reduction <maximumf>, %119, %cst_114 [0] : vector<4x32xf32> to vector<32xf32>
    %121 = vector.shape_cast %120 : vector<32xf32> to vector<1x32xf32>
    %122 = vector.extract_strided_slice %112 {offsets = [48, 0], sizes = [4, 32], strides = [1, 1]} : vector<128x32xf32> to vector<4x32xf32>
    %cst_115 = arith.constant dense<0xFF800000> : vector<32xf32>
    %123 = vector.multi_reduction <maximumf>, %122, %cst_115 [0] : vector<4x32xf32> to vector<32xf32>
    %124 = vector.shape_cast %123 : vector<32xf32> to vector<1x32xf32>
    %125 = vector.extract_strided_slice %112 {offsets = [64, 0], sizes = [4, 32], strides = [1, 1]} : vector<128x32xf32> to vector<4x32xf32>
    %cst_116 = arith.constant dense<0xFF800000> : vector<32xf32>
    %126 = vector.multi_reduction <maximumf>, %125, %cst_116 [0] : vector<4x32xf32> to vector<32xf32>
    %127 = vector.shape_cast %126 : vector<32xf32> to vector<1x32xf32>
    %128 = vector.extract_strided_slice %112 {offsets = [80, 0], sizes = [4, 32], strides = [1, 1]} : vector<128x32xf32> to vector<4x32xf32>
    %cst_117 = arith.constant dense<0xFF800000> : vector<32xf32>
    %129 = vector.multi_reduction <maximumf>, %128, %cst_117 [0] : vector<4x32xf32> to vector<32xf32>
    %130 = vector.shape_cast %129 : vector<32xf32> to vector<1x32xf32>
    %131 = vector.extract_strided_slice %112 {offsets = [96, 0], sizes = [4, 32], strides = [1, 1]} : vector<128x32xf32> to vector<4x32xf32>
    %cst_118 = arith.constant dense<0xFF800000> : vector<32xf32>
    %132 = vector.multi_reduction <maximumf>, %131, %cst_118 [0] : vector<4x32xf32> to vector<32xf32>
    %133 = vector.shape_cast %132 : vector<32xf32> to vector<1x32xf32>
    %134 = vector.extract_strided_slice %112 {offsets = [112, 0], sizes = [4, 32], strides = [1, 1]} : vector<128x32xf32> to vector<4x32xf32>
    %cst_119 = arith.constant dense<0xFF800000> : vector<32xf32>
    %135 = vector.multi_reduction <maximumf>, %134, %cst_119 [0] : vector<4x32xf32> to vector<32xf32>
    %136 = vector.shape_cast %135 : vector<32xf32> to vector<1x32xf32>
    %137 = tpu.concatenate %115, %118, %121, %124, %127, %130, %133, %136 in 0 : vector<1x32xf32>, vector<1x32xf32>, vector<1x32xf32>, vector<1x32xf32>, vector<1x32xf32>, vector<1x32xf32>, vector<1x32xf32>, vector<1x32xf32> -> vector<8x32xf32>
    %c0_120 = arith.constant 0 : index
    %c0_121 = arith.constant 0 : index
    %138 = vector.load %arg8[%c0_120, %c0_121] : memref<32x128xf32, #tpu.memory_space<vmem>>, vector<32x128xf32>
    %cst_122 = arith.constant dense<0.000000e+00> : vector<8x128xf32>
    %139 = tpu.matmul %137, %138, %cst_122 {dimension_numbers = #tpu.dot_dimension_numbers<[1], [0], [0], [1], [0, 0, 1, 1], [], []>} : vector<8x32xf32>, vector<32x128xf32>, vector<8x128xf32> -> vector<8x128xf32>
    %c0_123 = arith.constant 0 : index
    %c0_124 = arith.constant 0 : index
    %140 = vector.load %arg9[%c0_123, %c0_124] : memref<1x128xf32, #tpu.memory_space<vmem>>, vector<1x128xf32>
    %141 = vector.broadcast %140 : vector<1x128xf32> to vector<8x128xf32>
    %142 = arith.addf %139, %141 : vector<8x128xf32>
    %cst_125 = arith.constant 0.000000e+00 : f32
    %143 = vector.broadcast %cst_125 : f32 to vector<8x128xf32>
    %144 = arith.cmpf ogt, %142, %143 : vector<8x128xf32>
    %cst_126 = arith.constant 2.000000e-01 : f32
    %145 = vector.broadcast %cst_126 : f32 to vector<8x128xf32>
    %146 = arith.mulf %145, %142 : vector<8x128xf32>
    %147 = arith.select %144, %142, %146 : vector<8x128xi1>, vector<8x128xf32>
    %c0_127 = arith.constant 0 : index
    %c0_128 = arith.constant 0 : index
    %148 = vector.load %arg10[%c0_127, %c0_128] : memref<128x128xf32, #tpu.memory_space<vmem>>, vector<128x128xf32>
    %cst_129 = arith.constant dense<0.000000e+00> : vector<8x128xf32>
    %149 = tpu.matmul %147, %148, %cst_129 {dimension_numbers = #tpu.dot_dimension_numbers<[1], [0], [0], [1], [0, 0, 1, 1], [], []>} : vector<8x128xf32>, vector<128x128xf32>, vector<8x128xf32> -> vector<8x128xf32>
    %c0_130 = arith.constant 0 : index
    %c0_131 = arith.constant 0 : index
    %150 = vector.load %arg11[%c0_130, %c0_131] : memref<1x128xf32, #tpu.memory_space<vmem>>, vector<1x128xf32>
    %151 = vector.broadcast %150 : vector<1x128xf32> to vector<8x128xf32>
    %152 = arith.addf %149, %151 : vector<8x128xf32>
    %cst_132 = arith.constant 0.000000e+00 : f32
    %153 = vector.broadcast %cst_132 : f32 to vector<8x128xf32>
    %154 = arith.cmpf ogt, %152, %153 : vector<8x128xf32>
    %cst_133 = arith.constant 2.000000e-01 : f32
    %155 = vector.broadcast %cst_133 : f32 to vector<8x128xf32>
    %156 = arith.mulf %155, %152 : vector<8x128xf32>
    %157 = arith.select %154, %152, %156 : vector<8x128xi1>, vector<8x128xf32>
    %c0_134 = arith.constant 0 : index
    %c0_135 = arith.constant 0 : index
    %158 = vector.load %arg12[%c0_134, %c0_135] : memref<1x128xf32, #tpu.memory_space<vmem>>, vector<1x128xf32>
    %159 = vector.broadcast %158 : vector<1x128xf32> to vector<8x128xf32>
    %160 = arith.mulf %157, %159 : vector<8x128xf32>
    %cst_136 = arith.constant dense<0.000000e+00> : vector<8xf32>
    %161 = vector.multi_reduction <add>, %160, %cst_136 [1] : vector<8x128xf32> to vector<8xf32>
    %162 = vector.shape_cast %161 : vector<8xf32> to vector<8x1xf32>
    %c0_137 = arith.constant 0 : index
    %c0_138 = arith.constant 0 : index
    %163 = vector.load %arg13[%c0_137, %c0_138] : memref<1x1xf32, #tpu.memory_space<vmem>>, vector<1x1xf32>
    %164 = vector.broadcast %163 : vector<1x1xf32> to vector<8x1xf32>
    %165 = arith.addf %162, %164 : vector<8x1xf32>
    %cst_139 = arith.constant 0.000000e+00 : f32
    %166 = vector.broadcast %cst_139 : f32 to vector<8x1xf32>
    %167 = arith.subf %166, %165 : vector<8x1xf32>
    %168 = math.exp %167 : vector<8x1xf32>
    %cst_140 = arith.constant 1.000000e+00 : f32
    %169 = vector.broadcast %cst_140 : f32 to vector<8x1xf32>
    %170 = arith.addf %169, %168 : vector<8x1xf32>
    %cst_141 = arith.constant 1.000000e+00 : f32
    %171 = vector.broadcast %cst_141 : f32 to vector<8x1xf32>
    %172 = arith.divf %171, %170 : vector<8x1xf32>
    %c0_142 = arith.constant 0 : index
    %c0_143 = arith.constant 0 : index
    %173 = vector.load %arg14[%c0_142, %c0_143] : memref<8x1xf32, #tpu.memory_space<vmem>>, vector<8x1xf32>
    tpu.vector_store %arg14[%c0_142, %c0_143], %172 {strides = array<i32>} : memref<8x1xf32, #tpu.memory_space<vmem>>, vector<8x1xf32>,
    return
  }
  func.func @transform_0(%arg0: i32) -> (i32, i32) {
    %c0_i32 = arith.constant 0 : i32
    %c0_i32_0 = arith.constant 0 : i32
    return %arg0, %c0_i32 : i32, i32
  }
  func.func @transform_1(%arg0: i32) -> (i32, i32, i32) {
    %c0_i32 = arith.constant 0 : i32
    %c0_i32_0 = arith.constant 0 : i32
    %c0_i32_1 = arith.constant 0 : i32
    %c0_i32_2 = arith.constant 0 : i32
    return %c0_i32, %c0_i32_0, %c0_i32_1 : i32, i32, i32
  }
  func.func @transform_2(%arg0: i32) -> (i32, i32) {
    %c0_i32 = arith.constant 0 : i32
    %c0_i32_0 = arith.constant 0 : i32
    %c0_i32_1 = arith.constant 0 : i32
    return %c0_i32, %c0_i32_0 : i32, i32
  }
  func.func @transform_3(%arg0: i32) -> (i32, i32, i32) {
    %c0_i32 = arith.constant 0 : i32
    %c0_i32_0 = arith.constant 0 : i32
    %c0_i32_1 = arith.constant 0 : i32
    %c0_i32_2 = arith.constant 0 : i32
    return %c0_i32, %c0_i32_0, %c0_i32_1 : i32, i32, i32
  }
  func.func @transform_4(%arg0: i32) -> (i32, i32) {
    %c0_i32 = arith.constant 0 : i32
    %c0_i32_0 = arith.constant 0 : i32
    %c0_i32_1 = arith.constant 0 : i32
    return %c0_i32, %c0_i32_0 : i32, i32
  }
  func.func @transform_5(%arg0: i32) -> (i32, i32, i32) {
    %c0_i32 = arith.constant 0 : i32
    %c0_i32_0 = arith.constant 0 : i32
    %c0_i32_1 = arith.constant 0 : i32
    %c0_i32_2 = arith.constant 0 : i32
    return %c0_i32, %c0_i32_0, %c0_i32_1 : i32, i32, i32
  }
  func.func @transform_6(%arg0: i32) -> (i32, i32) {
    %c0_i32 = arith.constant 0 : i32
    %c0_i32_0 = arith.constant 0 : i32
    %c0_i32_1 = arith.constant 0 : i32
    return %c0_i32, %c0_i32_0 : i32, i32
  }
  func.func @transform_7(%arg0: i32) -> (i32, i32) {
    %c0_i32 = arith.constant 0 : i32
    %c0_i32_0 = arith.constant 0 : i32
    %c0_i32_1 = arith.constant 0 : i32
    return %c0_i32, %c0_i32_0 : i32, i32
  }
  func.func @transform_8(%arg0: i32) -> (i32, i32) {
    %c0_i32 = arith.constant 0 : i32
    %c0_i32_0 = arith.constant 0 : i32
    %c0_i32_1 = arith.constant 0 : i32
    return %c0_i32, %c0_i32_0 : i32, i32
  }
  func.func @transform_9(%arg0: i32) -> (i32, i32) {
    %c0_i32 = arith.constant 0 : i32
    %c0_i32_0 = arith.constant 0 : i32
    %c0_i32_1 = arith.constant 0 : i32
    return %c0_i32, %c0_i32_0 : i32, i32
  }
  func.func @transform_10(%arg0: i32) -> (i32, i32) {
    %c0_i32 = arith.constant 0 : i32
    %c0_i32_0 = arith.constant 0 : i32
    %c0_i32_1 = arith.constant 0 : i32
    return %c0_i32, %c0_i32_0 : i32, i32
  }
  func.func @transform_11(%arg0: i32) -> (i32, i32) {
    %c0_i32 = arith.constant 0 : i32
    %c0_i32_0 = arith.constant 0 : i32
    %c0_i32_1 = arith.constant 0 : i32
    return %c0_i32, %c0_i32_0 : i32, i32
  }
  func.func @transform_12(%arg0: i32) -> (i32, i32) {
    %c0_i32 = arith.constant 0 : i32
    %c0_i32_0 = arith.constant 0 : i32
    %c0_i32_1 = arith.constant 0 : i32
    return %c0_i32, %c0_i32_0 : i32, i32
  }
  func.func @transform_13(%arg0: i32) -> (i32, i32) {
    %c0_i32 = arith.constant 0 : i32
    %c0_i32_0 = arith.constant 0 : i32
    return %arg0, %c0_i32 : i32, i32
  }
}

</mosaic_0001>

<llo_original>
// kernel: discriminator3_forward.1
$region0: #{discriminator3_forward.1}
  #allocation0 [shape = 'u32[]', space=smem, size = 0x4, offset = 0x4, fixed_abs, tag = 'smem constant byte address 0x4 - core index']
  #allocation1 [shape = 'u32[144,128]{1,0:T(1,128)}', space=vmem, size = 0x12000, scoped, tag = 'internal scratch']
  #allocation2 [shape = 'f32[136,16]{1,0:T(8,128)}', space=vmem, size = 0x11000, scoped, tag = 'scratch operand']
  #allocation3 [shape = 'f32[136,192]{1,0:T(8,128)}', space=vmem, size = 0x22000, scoped, tag = 'scratch operand']
  #allocation4 [shape = 'f32[136,256]{1,0:T(8,128)}', space=vmem, size = 0x22000, scoped, tag = 'scratch operand']
  #allocation5 [shape = 'f32[1,1]{1,0:T(1,128)S(1)}', space=vmem, size = 0x200, scoped, tag = 'scoped memory for discriminator3_forward.1']
  %s0 = inlined_call_operand.vmem [shape: f32[256,16], index: 0, kind: input, shape index: {}]
  %s1 = inlined_call_operand.vmem [shape: f32[5,16,192], index: 1, kind: input, shape index: {}]
  %s2 = inlined_call_operand.vmem [shape: f32[1,192], index: 2, kind: input, shape index: {}]
  %s3 = inlined_call_operand.vmem [shape: f32[5,192,256], index: 3, kind: input, shape index: {}]
  %s4 = inlined_call_operand.vmem [shape: f32[1,256], index: 4, kind: input, shape index: {}]
  %s5 = inlined_call_operand.vmem [shape: f32[5,256,128], index: 5, kind: input, shape index: {}]
  %s6 = inlined_call_operand.vmem [shape: f32[1,128], index: 6, kind: input, shape index: {}]
  %s7 = inlined_call_operand.vmem [shape: f32[32,128], index: 7, kind: input, shape index: {}]
  %s8 = inlined_call_operand.vmem [shape: f32[1,128], index: 8, kind: input, shape index: {}]
  %s9 = inlined_call_operand.vmem [shape: f32[128,128], index: 9, kind: input, shape index: {}]
  %s10 = inlined_call_operand.vmem [shape: f32[1,128], index: 10, kind: input, shape index: {}]
  %s11 = inlined_call_operand.vmem [shape: f32[1,128], index: 11, kind: input, shape index: {}]
  %s12 = inlined_call_operand.<no memory space> [shape: f32[1,1], index: 12, kind: input, shape index: {}]
  %s13 = inlined_call_operand.vmem [shape: f32[16,1], index: 13, kind: output, shape index: {}]
  %s14 = sld [smem:[#allocation0]]
  $region85: #{discriminator3_forward.1} parent=0
    _
  %s16 = ssub.s32 1, %s14
  %s17 = scalar_select 0, %s16, %s14
  %v18 = vstv %s12
  %19 = vst [vmem:[#allocation5] sm:$0x1] %v18
  loop: start=0, step=1, limit=4
  $region2: #{discriminator3_forward.1} parent=0 // loop_pre_header
    _
  $region3: #{discriminator3_forward.1} parent=0 // loop_header
    %s21 = sphi 0, %s25
    %p22 = scmp.ge.s32.totalorder %s21, 4
    %s31 = sphi 0, %s33
    %s34 = sphi 0, %s31
    %s35 = sphi 0, %s34
    %s51 = sphi 0, %s35
    %s55 = sphi 0, %s55
    %s57 = sphi 0, %s55
    %s58 = sphi 0, %s57
    %s72 = sphi 0, %s58
    %s76 = sphi 0, %s76
    %s78 = sphi 0, %s76
    %s79 = sphi 0, %s78
    %s93 = sphi 0, %s79
    %s97 = sphi 0, %s97
    %s99 = sphi 0, %s97
    %s100 = sphi 0, %s99
    %s114 = sphi 0, %s100
    %s118 = sphi 0, %s118
    %s120 = sphi 0, %s118
    %s121 = sphi 0, %s120
    %s135 = sphi 0, %s121
    %s139 = sphi 0, %s139
    %s141 = sphi 0, %s139
    %s142 = sphi 0, %s141
    %s156 = sphi 0, %s142
    %s160 = sphi 0, %s160
    %s162 = sphi 0, %s160
    %s163 = sphi 0, %s162
    %s177 = sphi 0, %s163
    %s181 = sphi 0, %s181
    %s183 = sphi 0, %s181
    %s184 = sphi 0, %s183
    %s198 = sphi 0, %s184
    %s202 = sphi 0, %s202
    %s204 = sphi 0, %s202
    %s205 = sphi 0, %s204
    %s219 = sphi 0, %s205
    %s223 = sphi 0, %s223
    %s225 = sphi 0, %s223
    %s226 = sphi 0, %s225
    %s240 = sphi 0, %s226
    %s244 = sphi 0, %s244
    %s246 = sphi 0, %s244
    %s247 = sphi 0, %s246
    %s261 = sphi 0, %s247
    %s265 = sphi 0, %s265
    %s267 = sphi 0, %s265
    %s268 = sphi 0, %s267
    %s282 = sphi 0, %s268
    %s286 = sphi 0, %s286
    %s288 = sphi 0, %s286
    %s289 = sphi 0, %s288
    %s303 = sphi 0, %s289
    %s309 = sphi 0, %s311
    %s312 = sphi 0, %s309
    %s313 = sphi 0, %s312
    %s329 = sphi 0, %s313
  $region4: #{discriminator3_forward.1} parent=0 // loop_header_branch
    %24 = sbr.rel (%p22) target = $region8
  $region5: #{discriminator3_forward.1} parent=0 // loop_body
    %s26 = ssub.s32 %s21, 1
    %s27 = ssub.s32 %s21, 2
    %s28 = sadd.s32 %s21, 1
    %s29 = ssub.s32 %s21, %s28
    %p30 = scmp.eq.s32.totalorder %s29, 0
    %s32 = sadd.s32 %s31, 1
    %s33 = scalar_select %p30, %s31, %s32
    %p36 = pneg %p30
    %p37 = scmp.eq.s32.totalorder %s21, 1
    %p38 = por %p36, %p37
    %p39 = scmp.ne.s32.totalorder %s31, %s34
    %p40 = scmp.eq.s32.totalorder %s21, 0
    %p41 = por %p39, %p40
    %p42 = scmp.ne.s32.totalorder %s31, %s34
    %p43 = scmp.eq.s32.totalorder %s26, 1
    %p44 = por %p42, %p43
    %p45 = scmp.ne.s32.totalorder %s34, %s35
    %p46 = scmp.eq.s32.totalorder %s26, 0
    %p47 = por %p45, %p46
    %p48 = scmp.ne.s32.totalorder %s34, %s35
    %p49 = scmp.eq.s32.totalorder %s27, 1
    %p50 = por %p48, %p49
    %p52 = scmp.ne.s32.totalorder %s35, %s51
    %p53 = scmp.eq.s32.totalorder %s27, 0
    %p54 = por %p52, %p53
    %s56 = sadd.s32 %s55, 1
    %p59 = scmp.eq.s32.totalorder %s21, 1
    %p60 = scmp.ne.s32.totalorder %s55, %s57
    %p61 = scmp.eq.s32.totalorder %s21, 0
    %p62 = por %p60, %p61
    %p63 = scmp.ne.s32.totalorder %s55, %s57
    %p64 = scmp.eq.s32.totalorder %s26, 1
    %p65 = por %p63, %p64
    %p66 = scmp.ne.s32.totalorder %s57, %s58
    %p67 = scmp.eq.s32.totalorder %s26, 0
    %p68 = por %p66, %p67
    %p69 = scmp.ne.s32.totalorder %s57, %s58
    %p70 = scmp.eq.s32.totalorder %s27, 1
    %p71 = por %p69, %p70
    %p73 = scmp.ne.s32.totalorder %s58, %s72
    %p74 = scmp.eq.s32.totalorder %s27, 0
    %p75 = por %p73, %p74
    %s77 = sadd.s32 %s76, 1
    %p80 = scmp.eq.s32.totalorder %s21, 1
    %p81 = scmp.ne.s32.totalorder %s76, %s78
    %p82 = scmp.eq.s32.totalorder %s21, 0
    %p83 = por %p81, %p82
    %p84 = scmp.ne.s32.totalorder %s76, %s78
    %p85 = scmp.eq.s32.totalorder %s26, 1
    %p86 = por %p84, %p85
    %p87 = scmp.ne.s32.totalorder %s78, %s79
    %p88 = scmp.eq.s32.totalorder %s26, 0
    %p89 = por %p87, %p88
    %p90 = scmp.ne.s32.totalorder %s78, %s79
    %p91 = scmp.eq.s32.totalorder %s27, 1
    %p92 = por %p90, %p91
    %p94 = scmp.ne.s32.totalorder %s79, %s93
    %p95 = scmp.eq.s32.totalorder %s27, 0
    %p96 = por %p94, %p95
    %s98 = sadd.s32 %s97, 1
    %p101 = scmp.eq.s32.totalorder %s21, 1
    %p102 = scmp.ne.s32.totalorder %s97, %s99
    %p103 = scmp.eq.s32.totalorder %s21, 0
    %p104 = por %p102, %p103
    %p105 = scmp.ne.s32.totalorder %s97, %s99
    %p106 = scmp.eq.s32.totalorder %s26, 1
    %p107 = por %p105, %p106
    %p108 = scmp.ne.s32.totalorder %s99, %s100
    %p109 = scmp.eq.s32.totalorder %s26, 0
    %p110 = por %p108, %p109
    %p111 = scmp.ne.s32.totalorder %s99, %s100
    %p112 = scmp.eq.s32.totalorder %s27, 1
    %p113 = por %p111, %p112
    %p115 = scmp.ne.s32.totalorder %s100, %s114
    %p116 = scmp.eq.s32.totalorder %s27, 0
    %p117 = por %p115, %p116
    %s119 = sadd.s32 %s118, 1
    %p122 = scmp.eq.s32.totalorder %s21, 1
    %p123 = scmp.ne.s32.totalorder %s118, %s120
    %p124 = scmp.eq.s32.totalorder %s21, 0
    %p125 = por %p123, %p124
    %p126 = scmp.ne.s32.totalorder %s118, %s120
    %p127 = scmp.eq.s32.totalorder %s26, 1
    %p128 = por %p126, %p127
    %p129 = scmp.ne.s32.totalorder %s120, %s121
    %p130 = scmp.eq.s32.totalorder %s26, 0
    %p131 = por %p129, %p130
    %p132 = scmp.ne.s32.totalorder %s120, %s121
    %p133 = scmp.eq.s32.totalorder %s27, 1
    %p134 = por %p132, %p133
    %p136 = scmp.ne.s32.totalorder %s121, %s135
    %p137 = scmp.eq.s32.totalorder %s27, 0
    %p138 = por %p136, %p137
    %s140 = sadd.s32 %s139, 1
    %p143 = scmp.eq.s32.totalorder %s21, 1
    %p144 = scmp.ne.s32.totalorder %s139, %s141
    %p145 = scmp.eq.s32.totalorder %s21, 0
    %p146 = por %p144, %p145
    %p147 = scmp.ne.s32.totalorder %s139, %s141
    %p148 = scmp.eq.s32.totalorder %s26, 1
    %p149 = por %p147, %p148
    %p150 = scmp.ne.s32.totalorder %s141, %s142
    %p151 = scmp.eq.s32.totalorder %s26, 0
    %p152 = por %p150, %p151
    %p153 = scmp.ne.s32.totalorder %s141, %s142
    %p154 = scmp.eq.s32.totalorder %s27, 1
    %p155 = por %p153, %p154
    %p157 = scmp.ne.s32.totalorder %s142, %s156
    %p158 = scmp.eq.s32.totalorder %s27, 0
    %p159 = por %p157, %p158
    %s161 = sadd.s32 %s160, 1
    %p164 = scmp.eq.s32.totalorder %s21, 1
    %p165 = scmp.ne.s32.totalorder %s160, %s162
    %p166 = scmp.eq.s32.totalorder %s21, 0
    %p167 = por %p165, %p166
    %p168 = scmp.ne.s32.totalorder %s160, %s162
    %p169 = scmp.eq.s32.totalorder %s26, 1
    %p170 = por %p168, %p169
    %p171 = scmp.ne.s32.totalorder %s162, %s163
    %p172 = scmp.eq.s32.totalorder %s26, 0
    %p173 = por %p171, %p172
    %p174 = scmp.ne.s32.totalorder %s162, %s163
    %p175 = scmp.eq.s32.totalorder %s27, 1
    %p176 = por %p174, %p175
    %p178 = scmp.ne.s32.totalorder %s163, %s177
    %p179 = scmp.eq.s32.totalorder %s27, 0
    %p180 = por %p178, %p179
    %s182 = sadd.s32 %s181, 1
    %p185 = scmp.eq.s32.totalorder %s21, 1
    %p186 = scmp.ne.s32.totalorder %s181, %s183
    %p187 = scmp.eq.s32.totalorder %s21, 0
    %p188 = por %p186, %p187
    %p189 = scmp.ne.s32.totalorder %s181, %s183
    %p190 = scmp.eq.s32.totalorder %s26, 1
    %p191 = por %p189, %p190
    %p192 = scmp.ne.s32.totalorder %s183, %s184
    %p193 = scmp.eq.s32.totalorder %s26, 0
    %p194 = por %p192, %p193
    %p195 = scmp.ne.s32.totalorder %s183, %s184
    %p196 = scmp.eq.s32.totalorder %s27, 1
    %p197 = por %p195, %p196
    %p199 = scmp.ne.s32.totalorder %s184, %s198
    %p200 = scmp.eq.s32.totalorder %s27, 0
    %p201 = por %p199, %p200
    %s203 = sadd.s32 %s202, 1
    %p206 = scmp.eq.s32.totalorder %s21, 1
    %p207 = scmp.ne.s32.totalorder %s202, %s204
    %p208 = scmp.eq.s32.totalorder %s21, 0
    %p209 = por %p207, %p208
    %p210 = scmp.ne.s32.totalorder %s202, %s204
    %p211 = scmp.eq.s32.totalorder %s26, 1
    %p212 = por %p210, %p211
    %p213 = scmp.ne.s32.totalorder %s204, %s205
    %p214 = scmp.eq.s32.totalorder %s26, 0
    %p215 = por %p213, %p214
    %p216 = scmp.ne.s32.totalorder %s204, %s205
    %p217 = scmp.eq.s32.totalorder %s27, 1
    %p218 = por %p216, %p217
    %p220 = scmp.ne.s32.totalorder %s205, %s219
    %p221 = scmp.eq.s32.totalorder %s27, 0
    %p222 = por %p220, %p221
    %s224 = sadd.s32 %s223, 1
    %p227 = scmp.eq.s32.totalorder %s21, 1
    %p228 = scmp.ne.s32.totalorder %s223, %s225
    %p229 = scmp.eq.s32.totalorder %s21, 0
    %p230 = por %p228, %p229
    %p231 = scmp.ne.s32.totalorder %s223, %s225
    %p232 = scmp.eq.s32.totalorder %s26, 1
    %p233 = por %p231, %p232
    %p234 = scmp.ne.s32.totalorder %s225, %s226
    %p235 = scmp.eq.s32.totalorder %s26, 0
    %p236 = por %p234, %p235
    %p237 = scmp.ne.s32.totalorder %s225, %s226
    %p238 = scmp.eq.s32.totalorder %s27, 1
    %p239 = por %p237, %p238
    %p241 = scmp.ne.s32.totalorder %s226, %s240
    %p242 = scmp.eq.s32.totalorder %s27, 0
    %p243 = por %p241, %p242
    %s245 = sadd.s32 %s244, 1
    %p248 = scmp.eq.s32.totalorder %s21, 1
    %p249 = scmp.ne.s32.totalorder %s244, %s246
    %p250 = scmp.eq.s32.totalorder %s21, 0
    %p251 = por %p249, %p250
    %p252 = scmp.ne.s32.totalorder %s244, %s246
    %p253 = scmp.eq.s32.totalorder %s26, 1
    %p254 = por %p252, %p253
    %p255 = scmp.ne.s32.totalorder %s246, %s247
    %p256 = scmp.eq.s32.totalorder %s26, 0
    %p257 = por %p255, %p256
    %p258 = scmp.ne.s32.totalorder %s246, %s247
    %p259 = scmp.eq.s32.totalorder %s27, 1
    %p260 = por %p258, %p259
    %p262 = scmp.ne.s32.totalorder %s247, %s261
    %p263 = scmp.eq.s32.totalorder %s27, 0
    %p264 = por %p262, %p263
    %s266 = sadd.s32 %s265, 1
    %p269 = scmp.eq.s32.totalorder %s21, 1
    %p270 = scmp.ne.s32.totalorder %s265, %s267
    %p271 = scmp.eq.s32.totalorder %s21, 0
    %p272 = por %p270, %p271
    %p273 = scmp.ne.s32.totalorder %s265, %s267
    %p274 = scmp.eq.s32.totalorder %s26, 1
    %p275 = por %p273, %p274
    %p276 = scmp.ne.s32.totalorder %s267, %s268
    %p277 = scmp.eq.s32.totalorder %s26, 0
    %p278 = por %p276, %p277
    %p279 = scmp.ne.s32.totalorder %s267, %s268
    %p280 = scmp.eq.s32.totalorder %s27, 1
    %p281 = por %p279, %p280
    %p283 = scmp.ne.s32.totalorder %s268, %s282
    %p284 = scmp.eq.s32.totalorder %s27, 0
    %p285 = por %p283, %p284
    %s287 = sadd.s32 %s286, 1
    %p290 = scmp.eq.s32.totalorder %s21, 1
    %p291 = scmp.ne.s32.totalorder %s286, %s288
    %p292 = scmp.eq.s32.totalorder %s21, 0
    %p293 = por %p291, %p292
    %p294 = scmp.ne.s32.totalorder %s286, %s288
    %p295 = scmp.eq.s32.totalorder %s26, 1
    %p296 = por %p294, %p295
    %p297 = scmp.ne.s32.totalorder %s288, %s289
    %p298 = scmp.eq.s32.totalorder %s26, 0
    %p299 = por %p297, %p298
    %p300 = scmp.ne.s32.totalorder %s288, %s289
    %p301 = scmp.eq.s32.totalorder %s27, 1
    %p302 = por %p300, %p301
    %p304 = scmp.ne.s32.totalorder %s289, %s303
    %p305 = scmp.eq.s32.totalorder %s27, 0
    %p306 = por %p304, %p305
    %s307 = ssub.s32 %s21, %s28
    %p308 = scmp.eq.s32.totalorder %s307, 0
    %s310 = sadd.s32 %s309, 1
    %s311 = scalar_select %p308, %s309, %s310
    %p314 = pneg %p308
    %p315 = scmp.eq.s32.totalorder %s21, 1
    %p316 = por %p314, %p315
    %p317 = scmp.ne.s32.totalorder %s309, %s312
    %p318 = scmp.eq.s32.totalorder %s21, 0
    %p319 = por %p317, %p318
    %p320 = scmp.ne.s32.totalorder %s309, %s312
    %p321 = scmp.eq.s32.totalorder %s26, 1
    %p322 = por %p320, %p321
    %p323 = scmp.ne.s32.totalorder %s312, %s313
    %p324 = scmp.eq.s32.totalorder %s26, 0
    %p325 = por %p323, %p324
    %p326 = scmp.ne.s32.totalorder %s312, %s313
    %p327 = scmp.eq.s32.totalorder %s27, 1
    %p328 = por %p326, %p327
    %p330 = scmp.ne.s32.totalorder %s313, %s329
    %p331 = scmp.eq.s32.totalorder %s27, 0
    %p332 = por %p330, %p331
    %p333 = scmp.le.s32.totalorder 1, %s21
    %p334 = scmp.lt.s32.totalorder %s21, 3
    %p335 = pnand %p333, %p334
    %p336 = pneg %p335
    // Predicated region
    $region9: #{discriminator3_forward.1} parent=5 // pred_check
      _
    $region10: #{discriminator3_forward.1} parent=5 // pred_check_branch
      %338 = sbr.rel (%p335) target = $region12
    $region11: #{discriminator3_forward.1} parent=5 // pred_region
      %s339 = ssub.s32 %s21, 1
      // Predicated region
      $region13: #{discriminator3_forward.1} parent=11 // pred_check
        %p340 = pneg %p68
      $region14: #{discriminator3_forward.1} parent=11 // pred_check_branch
        %342 = sbr.rel (%p340) target = $region16
      $region15: #{discriminator3_forward.1} parent=11 // pred_region
        _
      $region16: #{discriminator3_forward.1} parent=11 // pred_fallthru
        _
      // Predicated region
      $region17: #{discriminator3_forward.1} parent=11 // pred_check
        %p343 = pneg %p89
      $region18: #{discriminator3_forward.1} parent=11 // pred_check_branch
        %345 = sbr.rel (%p343) target = $region20
      $region19: #{discriminator3_forward.1} parent=11 // pred_region
        _
      $region20: #{discriminator3_forward.1} parent=11 // pred_fallthru
        _
      // Predicated region
      $region21: #{discriminator3_forward.1} parent=11 // pred_check
        %p346 = pneg %p110
      $region22: #{discriminator3_forward.1} parent=11 // pred_check_branch
        %348 = sbr.rel (%p346) target = $region24
      $region23: #{discriminator3_forward.1} parent=11 // pred_region
        _
      $region24: #{discriminator3_forward.1} parent=11 // pred_fallthru
        _
      // Predicated region
      $region25: #{discriminator3_forward.1} parent=11 // pred_check
        %p349 = pneg %p131
      $region26: #{discriminator3_forward.1} parent=11 // pred_check_branch
        %351 = sbr.rel (%p349) target = $region28
      $region27: #{discriminator3_forward.1} parent=11 // pred_region
        _
      $region28: #{discriminator3_forward.1} parent=11 // pred_fallthru
        _
      // Predicated region
      $region29: #{discriminator3_forward.1} parent=11 // pred_check
        %p352 = pneg %p152
      $region30: #{discriminator3_forward.1} parent=11 // pred_check_branch
        %354 = sbr.rel (%p352) target = $region32
      $region31: #{discriminator3_forward.1} parent=11 // pred_region
        _
      $region32: #{discriminator3_forward.1} parent=11 // pred_fallthru
        _
      // Predicated region
      $region33: #{discriminator3_forward.1} parent=11 // pred_check
        %p355 = pneg %p173
      $region34: #{discriminator3_forward.1} parent=11 // pred_check_branch
        %357 = sbr.rel (%p355) target = $region36
      $region35: #{discriminator3_forward.1} parent=11 // pred_region
        _
      $region36: #{discriminator3_forward.1} parent=11 // pred_fallthru
        _
      // Predicated region
      $region37: #{discriminator3_forward.1} parent=11 // pred_check
        %p358 = pneg %p194
      $region38: #{discriminator3_forward.1} parent=11 // pred_check_branch
        %360 = sbr.rel (%p358) target = $region40
      $region39: #{discriminator3_forward.1} parent=11 // pred_region
        _
      $region40: #{discriminator3_forward.1} parent=11 // pred_fallthru
        _
      // Predicated region
      $region41: #{discriminator3_forward.1} parent=11 // pred_check
        %p361 = pneg %p215
      $region42: #{discriminator3_forward.1} parent=11 // pred_check_branch
        %363 = sbr.rel (%p361) target = $region44
      $region43: #{discriminator3_forward.1} parent=11 // pred_region
        _
      $region44: #{discriminator3_forward.1} parent=11 // pred_fallthru
        _
      // Predicated region
      $region45: #{discriminator3_forward.1} parent=11 // pred_check
        %p364 = pneg %p236
      $region46: #{discriminator3_forward.1} parent=11 // pred_check_branch
        %366 = sbr.rel (%p364) target = $region48
      $region47: #{discriminator3_forward.1} parent=11 // pred_region
        _
      $region48: #{discriminator3_forward.1} parent=11 // pred_fallthru
        _
      // Predicated region
      $region49: #{discriminator3_forward.1} parent=11 // pred_check
        %p367 = pneg %p257
      $region50: #{discriminator3_forward.1} parent=11 // pred_check_branch
        %369 = sbr.rel (%p367) target = $region52
      $region51: #{discriminator3_forward.1} parent=11 // pred_region
        _
      $region52: #{discriminator3_forward.1} parent=11 // pred_fallthru
        _
      // Predicated region
      $region53: #{discriminator3_forward.1} parent=11 // pred_check
        %p370 = pneg %p278
      $region54: #{discriminator3_forward.1} parent=11 // pred_check_branch
        %372 = sbr.rel (%p370) target = $region56
      $region55: #{discriminator3_forward.1} parent=11 // pred_region
        _
      $region56: #{discriminator3_forward.1} parent=11 // pred_fallthru
        _
      // Predicated region
      $region57: #{discriminator3_forward.1} parent=11 // pred_check
        %p373 = pneg %p299
      $region58: #{discriminator3_forward.1} parent=11 // pred_check_branch
        %375 = sbr.rel (%p373) target = $region60
      $region59: #{discriminator3_forward.1} parent=11 // pred_region
        _
      $region60: #{discriminator3_forward.1} parent=11 // pred_fallthru
        _
    $region12: #{discriminator3_forward.1} parent=5 // pred_fallthru
      _
    %p376 = scmp.lt.s32.totalorder %s21, 2
    // Predicated region
    $region61: #{discriminator3_forward.1} parent=5 // pred_check
      %p377 = pneg %p376
    $region62: #{discriminator3_forward.1} parent=5 // pred_check_branch
      %379 = sbr.rel (%p377) target = $region64
    $region63: #{discriminator3_forward.1} parent=5 // pred_region
      // Predicated region
      $region65: #{discriminator3_forward.1} parent=63 // pred_check
        %p380 = pneg %p41
      $region66: #{discriminator3_forward.1} parent=63 // pred_check_branch
        %382 = sbr.rel (%p380) target = $region68
      $region67: #{discriminator3_forward.1} parent=63 // pred_region
        %s383 = smul.u32 16, %s21
        %p384 = scmp.lt.s32.totalorder %s383, 31
        %s385 = scalar_select %p384, %s383, 31
        %s386 = smul.addr %s385, 8
        %s387 = scalar_lea.vmem %s0, %s386
        %s388 = smul.u32 16, %s21
      $region68: #{discriminator3_forward.1} parent=63 // pred_fallthru
        _
    $region64: #{discriminator3_forward.1} parent=5 // pred_fallthru
      _
    %p389 = scmp.le.s32.totalorder 1, %s21
    %p390 = scmp.lt.s32.totalorder %s21, 3
    %p391 = pnand %p389, %p390
    %p392 = pneg %p391
    // Predicated region
    $region69: #{discriminator3_forward.1} parent=5 // pred_check
      _
    $region70: #{discriminator3_forward.1} parent=5 // pred_check_branch
      %394 = sbr.rel (%p391) target = $region72
    $region71: #{discriminator3_forward.1} parent=5 // pred_region
      %s395 = ssub.s32 %s21, 1
      %s396 = smul.u32 16, %s26
      %p397 = scmp.lt.s32.totalorder %s396, 31
      %s398 = scalar_select %p397, %s396, 31
      %s399 = smul.addr %s398, 8
      %s400 = scalar_lea.vmem %s0, %s399
      %p401 = pneg %p47
      %p402 = pneg %p44
      %p403 = pneg %p68
      %p404 = pneg %p65
      %p405 = pneg %p89
      %p406 = pneg %p86
      %p407 = pneg %p110
      %p408 = pneg %p107
      %p409 = pneg %p131
      %p410 = pneg %p128
      %p411 = pneg %p152
      %p412 = pneg %p149
      %p413 = pneg %p173
      %p414 = pneg %p170
      %p415 = pneg %p194
      %p416 = pneg %p191
      %p417 = pneg %p215
      %p418 = pneg %p212
      %p419 = pneg %p236
      %p420 = pneg %p233
      %p421 = pneg %p257
      %p422 = pneg %p254
      %p423 = pneg %p278
      %p424 = pneg %p275
      %p425 = pneg %p299
      %p426 = pneg %p296
      %p427 = pneg %p325
      %p428 = pneg %p322
      %p429 = scmp.lt.s32.totalorder %s26, 1
      %s430 = scalar_select %p429, %s26, 1
      %s431 = smul.addr %s430, 8
      %s432 = scalar_lea.vmem %s13, %s431
      %s433 = smul.u32 16, %s26
      %p434 = scmp.lt.s32.totalorder %s433, 31
      %s435 = scalar_select %p434, %s433, 31
      %s436 = smul.addr %s435, 8
      %s437 = scalar_lea.vmem %s0, %s436
      %s438 = smul.u32 16, %s26
      %p439 = scmp.lt.s32.totalorder %s26, 1
      %s440 = scalar_select %p439, %s26, 1
      %s441 = smul.addr %s440, 8
      %s442 = scalar_lea.vmem %s13, %s441
      %v443 = vld [vmem:[%s437] sm:$0xff]
      %v444 = vld [vmem:[%s437 + $0x8] sm:$0xff]
      %v445 = vld [vmem:[%s437 + $0x10] sm:$0xff]
      %v446 = vld [vmem:[%s437 + $0x18] sm:$0xff]
      %v447 = vld [vmem:[%s437 + $0x20] sm:$0xff]
      %v448 = vld [vmem:[%s437 + $0x28] sm:$0xff]
      %v449 = vld [vmem:[%s437 + $0x30] sm:$0xff]
      %v450 = vld [vmem:[%s437 + $0x38] sm:$0xff]
      %v451 = vld [vmem:[%s437 + $0x40] sm:$0xff]
      %v452 = vld [vmem:[%s437 + $0x48] sm:$0xff]
      %v453 = vld [vmem:[%s437 + $0x50] sm:$0xff]
      %v454 = vld [vmem:[%s437 + $0x58] sm:$0xff]
      %v455 = vld [vmem:[%s437 + $0x60] sm:$0xff]
      %v456 = vld [vmem:[%s437 + $0x68] sm:$0xff]
      %v457 = vld [vmem:[%s437 + $0x70] sm:$0xff]
      %v458 = vld [vmem:[%s437 + $0x78] sm:$0xff]
      %vm459 = vcmask 130048
      %460 = vst.msk [vmem:[#allocation2] sm:$0xff] %vm459, %v443
      %461 = vst.msk [vmem:[#allocation2 + $0x8] sm:$0xff] %vm459, %v444
      %462 = vst.msk [vmem:[#allocation2 + $0x10] sm:$0xff] %vm459, %v445
      %463 = vst.msk [vmem:[#allocation2 + $0x18] sm:$0xff] %vm459, %v446
      %464 = vst.msk [vmem:[#allocation2 + $0x20] sm:$0xff] %vm459, %v447
      %465 = vst.msk [vmem:[#allocation2 + $0x28] sm:$0xff] %vm459, %v448
      %466 = vst.msk [vmem:[#allocation2 + $0x30] sm:$0xff] %vm459, %v449
      %467 = vst.msk [vmem:[#allocation2 + $0x38] sm:$0xff] %vm459, %v450
      %468 = vst.msk [vmem:[#allocation2 + $0x40] sm:$0xff] %vm459, %v451
      %469 = vst.msk [vmem:[#allocation2 + $0x48] sm:$0xff] %vm459, %v452
      %470 = vst.msk [vmem:[#allocation2 + $0x50] sm:$0xff] %vm459, %v453
      %471 = vst.msk [vmem:[#allocation2 + $0x58] sm:$0xff] %vm459, %v454
      %472 = vst.msk [vmem:[#allocation2 + $0x60] sm:$0xff] %vm459, %v455
      %473 = vst.msk [vmem:[#allocation2 + $0x68] sm:$0xff] %vm459, %v456
      %474 = vst.msk [vmem:[#allocation2 + $0x70] sm:$0xff] %vm459, %v457
      %475 = vst.msk [vmem:[#allocation2 + $0x78] sm:$0xff] %vm459, %v458
      %476 = vst.msk [vmem:[#allocation2 + $0x80] sm:$0xff] %vm459, 0.0
      %v477 = vld [vmem:[#allocation2] sm:$0xff]
      %v478 = vld [vmem:[#allocation2 + $0x8] sm:$0xff]
      %v479 = vld [vmem:[#allocation2 + $0x10] sm:$0xff]
      %v480 = vld [vmem:[#allocation2 + $0x18] sm:$0xff]
      %v481 = vld [vmem:[#allocation2 + $0x20] sm:$0xff]
      %v482 = vld [vmem:[#allocation2 + $0x28] sm:$0xff]
      %v483 = vld [vmem:[#allocation2 + $0x30] sm:$0xff]
      %v484 = vld [vmem:[#allocation2 + $0x38] sm:$0xff]
      %v485 = vld [vmem:[#allocation2 + $0x40] sm:$0xff]
      %v486 = vld [vmem:[#allocation2 + $0x48] sm:$0xff]
      %v487 = vld [vmem:[#allocation2 + $0x50] sm:$0xff]
      %v488 = vld [vmem:[#allocation2 + $0x58] sm:$0xff]
      %v489 = vld [vmem:[#allocation2 + $0x60] sm:$0xff]
      %v490 = vld [vmem:[#allocation2 + $0x68] sm:$0xff]
      %v491 = vld [vmem:[#allocation2 + $0x70] sm:$0xff]
      %v492 = vld [vmem:[#allocation2 + $0x78] sm:$0xff]
      %v493 = vld [vmem:[%s1] sm:$0xff]
      %v494 = vld [vmem:[%s1 + $0x8] sm:$0xff]
      %v495 = vld [vmem:[%s1 + $0x10] sm:$0xff]
      %v496 = vld [vmem:[%s1 + $0x18] sm:$0xff]
      %v497 = vld [vmem:[#allocation2 + $0x1] sm:$0xff]
      %v498 = vld [vmem:[#allocation2 + $0x9] sm:$0xff]
      %v499 = vld [vmem:[#allocation2 + $0x11] sm:$0xff]
      %v500 = vld [vmem:[#allocation2 + $0x19] sm:$0xff]
      %v501 = vld [vmem:[#allocation2 + $0x21] sm:$0xff]
      %v502 = vld [vmem:[#allocation2 + $0x29] sm:$0xff]
      %v503 = vld [vmem:[#allocation2 + $0x31] sm:$0xff]
      %v504 = vld [vmem:[#allocation2 + $0x39] sm:$0xff]
      %v505 = vld [vmem:[#allocation2 + $0x41] sm:$0xff]
      %v506 = vld [vmem:[#allocation2 + $0x49] sm:$0xff]
      %v507 = vld [vmem:[#allocation2 + $0x51] sm:$0xff]
      %v508 = vld [vmem:[#allocation2 + $0x59] sm:$0xff]
      %v509 = vld [vmem:[#allocation2 + $0x61] sm:$0xff]
      %v510 = vld [vmem:[#allocation2 + $0x69] sm:$0xff]
      %v511 = vld [vmem:[#allocation2 + $0x71] sm:$0xff]
      %v512 = vld [vmem:[#allocation2 + $0x79] sm:$0xff]
      %s513 = scalar_lea.vmem %s1, 32
      %v514 = vld [vmem:[%s513] sm:$0xff]
      %v515 = vld [vmem:[%s513 + $0x8] sm:$0xff]
      %v516 = vld [vmem:[%s513 + $0x10] sm:$0xff]
      %v517 = vld [vmem:[%s513 + $0x18] sm:$0xff]
      %v519 = vsel %vm459, %v497, 0
      %v522 = vsel %vm459, %v498, 0
      %v525 = vsel %vm459, %v499, 0
      %v528 = vsel %vm459, %v500, 0
      %v531 = vsel %vm459, %v501, 0
      %v534 = vsel %vm459, %v502, 0
      %v537 = vsel %vm459, %v503, 0
      %v540 = vsel %vm459, %v504, 0
      %v543 = vsel %vm459, %v505, 0
      %v546 = vsel %vm459, %v506, 0
      %v549 = vsel %vm459, %v507, 0
      %v552 = vsel %vm459, %v508, 0
      %v555 = vsel %vm459, %v509, 0
      %v558 = vsel %vm459, %v510, 0
      %v561 = vsel %vm459, %v511, 0
      %v564 = vsel %vm459, %v512, 0
      %566 = vmatprep.subr.mxu0 %v515
      %567 = vmatpush1.msra.mxu0 %v514
      %568 = vmatprep.subr.mxu0 %v517
      %569 = vmatpush1.msra.mxu0 %v516
      %570 = vmatprep.subr.mxu0 0.0
      %571 = vmatpush1.msra.mxu0 0.0
      %572 = vmatprep.subr.mxu0 0.0
      %573 = vmatpush1.msra.mxu0 0.0
      %574 = vmatprep.subr.mxu0 0.0
      %575 = vmatpush1.msra.mxu0 0.0
      %576 = vmatprep.subr.mxu0 0.0
      %577 = vmatpush1.msra.mxu0 0.0
      %578 = vmatprep.subr.mxu0 0.0
      %579 = vmatpush1.msra.mxu0 0.0
      %580 = vmatprep.subr.mxu0 0.0
      %581 = vmatpush1.msra.mxu0 0.0
      %582 = vmatprep.subr.mxu0 0.0
      %583 = vmatpush1.msra.mxu0 0.0
      %584 = vmatprep.subr.mxu0 0.0
      %585 = vmatpush1.msra.mxu0 0.0
      %586 = vmatprep.subr.mxu0 0.0
      %587 = vmatpush1.msra.mxu0 0.0
      %588 = vmatprep.subr.mxu0 0.0
      %589 = vmatpush1.msra.mxu0 0.0
      %590 = vmatprep.subr.mxu0 0.0
      %591 = vmatpush1.msra.mxu0 0.0
      %592 = vmatprep.subr.mxu0 0.0
      %593 = vmatpush1.msra.mxu0 0.0
      %594 = vmatprep.subr.mxu0 0.0
      %595 = vmatpush1.msra.mxu0 0.0
      %596 = vmatprep.subr.mxu0 0.0
      %597 = vmatpush1.msra.mxu0 0.0
      %598 = vmatprep.subr.mxu0 0.0
      %599 = vmatpush1.msra.mxu0 0.0
      %600 = vmatprep.subr.mxu0 0.0
      %601 = vmatpush1.msra.mxu0 0.0
      %602 = vmatprep.subr.mxu0 0.0
      %603 = vmatpush1.msra.mxu0 0.0
      %604 = vmatprep.subr.mxu0 0.0
      %605 = vmatpush1.msra.mxu0 0.0
      %606 = vmatprep.subr.mxu0 0.0
      %607 = vmatpush1.msra.mxu0 0.0
      %608 = vmatprep.subr.mxu0 0.0
      %609 = vmatpush1.msra.mxu0 0.0
      %610 = vmatprep.subr.mxu0 0.0
      %611 = vmatpush1.msra.mxu0 0.0
      %612 = vmatprep.subr.mxu0 0.0
      %613 = vmatpush1.msra.mxu0 0.0
      %614 = vmatprep.subr.mxu0 0.0
      %615 = vmatpush1.msra.mxu0 0.0
      %616 = vmatprep.subr.mxu0 0.0
      %617 = vmatpush1.msra.mxu0 0.0
      %618 = vmatprep.subr.mxu0 0.0
      %619 = vmatpush1.msra.mxu0 0.0
      %620 = vmatprep.subr.mxu0 0.0
      %621 = vmatpush1.msra.mxu0 0.0
      %622 = vmatprep.subr.mxu0 0.0
      %623 = vmatpush1.msra.mxu0 0.0
      %624 = vmatprep.subr.mxu0 0.0
      %625 = vmatpush1.msra.mxu0 0.0
      %626 = vmatprep.subr.mxu0 0.0
      %627 = vmatpush1.msra.mxu0 0.0
      %628 = vmatprep.subr.mxu0 0.0
      %629 = vmatpush1.msra.mxu0 0.0
      %630 = vmatprep.mubr.f32.mxu0 0.0
      %631 = vmatmul.mubr.f32.gmra.mrb[0].mxu0 %v519
      %v632 = vpop.f32.mrb[0].mxu0
      %v633 = vadd.f32 0.0, %v632
      %v634 = vpop.f32.mrb[0].mxu0
      %v635 = vadd.f32 0.0, %v634
      %636 = vmatprep.mubr.f32.mxu0 0.0
      %637 = vmatmul.mubr.f32.gmra.mrb[0].mxu0 %v522
      %v638 = vpop.f32.mrb[0].mxu0
      %v639 = vadd.f32 0.0, %v638
      %v640 = vpop.f32.mrb[0].mxu0
      %v641 = vadd.f32 0.0, %v640
      %642 = vmatprep.mubr.f32.mxu0 0.0
      %643 = vmatmul.mubr.f32.gmra.mrb[0].mxu0 %v525
      %v644 = vpop.f32.mrb[0].mxu0
      %v645 = vadd.f32 0.0, %v644
      %v646 = vpop.f32.mrb[0].mxu0
      %v647 = vadd.f32 0.0, %v646
      %648 = vmatprep.mubr.f32.mxu0 0.0
      %649 = vmatmul.mubr.f32.gmra.mrb[0].mxu0 %v528
      %v650 = vpop.f32.mrb[0].mxu0
      %v651 = vadd.f32 0.0, %v650
      %v652 = vpop.f32.mrb[0].mxu0
      %v653 = vadd.f32 0.0, %v652
      %654 = vmatprep.mubr.f32.mxu0 0.0
      %655 = vmatmul.mubr.f32.gmra.mrb[0].mxu0 %v531
      %v656 = vpop.f32.mrb[0].mxu0
      %v657 = vadd.f32 0.0, %v656
      %v658 = vpop.f32.mrb[0].mxu0
      %v659 = vadd.f32 0.0, %v658
      %660 = vmatprep.mubr.f32.mxu0 0.0
      %661 = vmatmul.mubr.f32.gmra.mrb[0].mxu0 %v534
      %v662 = vpop.f32.mrb[0].mxu0
      %v663 = vadd.f32 0.0, %v662
      %v664 = vpop.f32.mrb[0].mxu0
      %v665 = vadd.f32 0.0, %v664
      %666 = vmatprep.mubr.f32.mxu0 0.0
      %667 = vmatmul.mubr.f32.gmra.mrb[0].mxu0 %v537
      %v668 = vpop.f32.mrb[0].mxu0
      %v669 = vadd.f32 0.0, %v668
      %v670 = vpop.f32.mrb[0].mxu0
      %v671 = vadd.f32 0.0, %v670
      %672 = vmatprep.mubr.f32.mxu0 0.0
      %673 = vmatmul.mubr.f32.gmra.mrb[0].mxu0 %v540
      %v674 = vpop.f32.mrb[0].mxu0
      %v675 = vadd.f32 0.0, %v674
      %v676 = vpop.f32.mrb[0].mxu0
      %v677 = vadd.f32 0.0, %v676
      %678 = vmatprep.mubr.f32.mxu0 0.0
      %679 = vmatmul.mubr.f32.gmra.mrb[0].mxu0 %v543
      %v680 = vpop.f32.mrb[0].mxu0
      %v681 = vadd.f32 0.0, %v680
      %v682 = vpop.f32.mrb[0].mxu0
      %v683 = vadd.f32 0.0, %v682
      %684 = vmatprep.mubr.f32.mxu0 0.0
      %685 = vmatmul.mubr.f32.gmra.mrb[0].mxu0 %v546
      %v686 = vpop.f32.mrb[0].mxu0
      %v687 = vadd.f32 0.0, %v686
      %v688 = vpop.f32.mrb[0].mxu0
      %v689 = vadd.f32 0.0, %v688
      %690 = vmatprep.mubr.f32.mxu0 0.0
      %691 = vmatmul.mubr.f32.gmra.mrb[0].mxu0 %v549
      %v692 = vpop.f32.mrb[0].mxu0
      %v693 = vadd.f32 0.0, %v692
      %v694 = vpop.f32.mrb[0].mxu0
      %v695 = vadd.f32 0.0, %v694
      %696 = vmatprep.mubr.f32.mxu0 0.0
      %697 = vmatmul.mubr.f32.gmra.mrb[0].mxu0 %v552
      %v698 = vpop.f32.mrb[0].mxu0
      %v699 = vadd.f32 0.0, %v698
      %v700 = vpop.f32.mrb[0].mxu0
      %v701 = vadd.f32 0.0, %v700
      %702 = vmatprep.mubr.f32.mxu0 0.0
      %703 = vmatmul.mubr.f32.gmra.mrb[0].mxu0 %v555
      %v704 = vpop.f32.mrb[0].mxu0
      %v705 = vadd.f32 0.0, %v704
      %v706 = vpop.f32.mrb[0].mxu0
      %v707 = vadd.f32 0.0, %v706
      %708 = vmatprep.mubr.f32.mxu0 0.0
      %709 = vmatmul.mubr.f32.gmra.mrb[0].mxu0 %v558
      %v710 = vpop.f32.mrb[0].mxu0
      %v711 = vadd.f32 0.0, %v710
      %v712 = vpop.f32.mrb[0].mxu0
      %v713 = vadd.f32 0.0, %v712
      %714 = vmatprep.mubr.f32.mxu0 0.0
      %715 = vmatmul.mubr.f32.gmra.mrb[0].mxu0 %v561
      %v716 = vpop.f32.mrb[0].mxu0
      %v717 = vadd.f32 0.0, %v716
      %v718 = vpop.f32.mrb[0].mxu0
      %v719 = vadd.f32 0.0, %v718
      %720 = vmatprep.mubr.f32.mxu0 0.0
      %721 = vmatmul.mubr.f32.gmra.mrb[0].mxu0 %v564
      %v722 = vpop.f32.mrb[0].mxu0
      %v723 = vadd.f32 0.0, %v722
      %v724 = vpop.f32.mrb[0].mxu0
      %v725 = vadd.f32 0.0, %v724
      %726 = vdwg.mxu0
      %v728 = vsel %vm459, %v477, 0
      %v731 = vsel %vm459, %v478, 0
      %v734 = vsel %vm459, %v479, 0
      %v737 = vsel %vm459, %v480, 0
      %v740 = vsel %vm459, %v481, 0
      %v743 = vsel %vm459, %v482, 0
      %v746 = vsel %vm459, %v483, 0
      %v749 = vsel %vm459, %v484, 0
      %v752 = vsel %vm459, %v485, 0
      %v755 = vsel %vm459, %v486, 0
      %v758 = vsel %vm459, %v487, 0
      %v761 = vsel %vm459, %v488, 0
      %v764 = vsel %vm459, %v489, 0
      %v767 = vsel %vm459, %v490, 0
      %v770 = vsel %vm459, %v491, 0
      %v773 = vsel %vm459, %v492, 0
      %775 = vmatprep.subr.mxu0 %v494
      %776 = vmatpush1.msra.mxu0 %v493
      %777 = vmatprep.subr.mxu0 %v496
      %778 = vmatpush1.msra.mxu0 %v495
      %779 = vmatprep.subr.mxu0 0.0
      %780 = vmatpush1.msra.mxu0 0.0
      %781 = vmatprep.subr.mxu0 0.0
      %782 = vmatpush1.msra.mxu0 0.0
      %783 = vmatprep.subr.mxu0 0.0
      %784 = vmatpush1.msra.mxu0 0.0
      %785 = vmatprep.subr.mxu0 0.0
      %786 = vmatpush1.msra.mxu0 0.0
      %787 = vmatprep.subr.mxu0 0.0
      %788 = vmatpush1.msra.mxu0 0.0
      %789 = vmatprep.subr.mxu0 0.0
      %790 = vmatpush1.msra.mxu0 0.0
      %791 = vmatprep.subr.mxu0 0.0
      %792 = vmatpush1.msra.mxu0 0.0
      %793 = vmatprep.subr.mxu0 0.0
      %794 = vmatpush1.msra.mxu0 0.0
      %795 = vmatprep.subr.mxu0 0.0
      %796 = vmatpush1.msra.mxu0 0.0
      %797 = vmatprep.subr.mxu0 0.0
      %798 = vmatpush1.msra.mxu0 0.0
      %799 = vmatprep.subr.mxu0 0.0
      %800 = vmatpush1.msra.mxu0 0.0
      %801 = vmatprep.subr.mxu0 0.0
      %802 = vmatpush1.msra.mxu0 0.0
      %803 = vmatprep.subr.mxu0 0.0
      %804 = vmatpush1.msra.mxu0 0.0
      %805 = vmatprep.subr.mxu0 0.0
      %806 = vmatpush1.msra.mxu0 0.0
      %807 = vmatprep.subr.mxu0 0.0
      %808 = vmatpush1.msra.mxu0 0.0
      %809 = vmatprep.subr.mxu0 0.0
      %810 = vmatpush1.msra.mxu0 0.0
      %811 = vmatprep.subr.mxu0 0.0
      %812 = vmatpush1.msra.mxu0 0.0
      %813 = vmatprep.subr.mxu0 0.0
      %814 = vmatpush1.msra.mxu0 0.0
      %815 = vmatprep.subr.mxu0 0.0
      %816 = vmatpush1.msra.mxu0 0.0
      %817 = vmatprep.subr.mxu0 0.0
      %818 = vmatpush1.msra.mxu0 0.0
      %819 = vmatprep.subr.mxu0 0.0
      %820 = vmatpush1.msra.mxu0 0.0
      %821 = vmatprep.subr.mxu0 0.0
      %822 = vmatpush1.msra.mxu0 0.0
      %823 = vmatprep.subr.mxu0 0.0
      %824 = vmatpush1.msra.mxu0 0.0
      %825 = vmatprep.subr.mxu0 0.0
      %826 = vmatpush1.msra.mxu0 0.0
      %827 = vmatprep.subr.mxu0 0.0
      %828 = vmatpush1.msra.mxu0 0.0
      %829 = vmatprep.subr.mxu0 0.0
      %830 = vmatpush1.msra.mxu0 0.0
      %831 = vmatprep.subr.mxu0 0.0
      %832 = vmatpush1.msra.mxu0 0.0
      %833 = vmatprep.subr.mxu0 0.0
      %834 = vmatpush1.msra.mxu0 0.0
      %835 = vmatprep.subr.mxu0 0.0
      %836 = vmatpush1.msra.mxu0 0.0
      %837 = vmatprep.subr.mxu0 0.0
      %838 = vmatpush1.msra.mxu0 0.0
      %839 = vmatprep.mubr.f32.mxu0 0.0
      %840 = vmatmul.mubr.f32.gmra.mrb[0].mxu0 %v728
      %v841 = vpop.f32.mrb[0].mxu0
      %v842 = vadd.f32 %v633, %v841
      %v843 = vpop.f32.mrb[0].mxu0
      %v844 = vadd.f32 %v635, %v843
      %845 = vmatprep.mubr.f32.mxu0 0.0
      %846 = vmatmul.mubr.f32.gmra.mrb[0].mxu0 %v731
      %v847 = vpop.f32.mrb[0].mxu0
      %v848 = vadd.f32 %v639, %v847
      %v849 = vpop.f32.mrb[0].mxu0
      %v850 = vadd.f32 %v641, %v849
      %851 = vmatprep.mubr.f32.mxu0 0.0
      %852 = vmatmul.mubr.f32.gmra.mrb[0].mxu0 %v734
      %v853 = vpop.f32.mrb[0].mxu0
      %v854 = vadd.f32 %v645, %v853
      %v855 = vpop.f32.mrb[0].mxu0
      %v856 = vadd.f32 %v647, %v855
      %857 = vmatprep.mubr.f32.mxu0 0.0
      %858 = vmatmul.mubr.f32.gmra.mrb[0].mxu0 %v737
      %v859 = vpop.f32.mrb[0].mxu0
      %v860 = vadd.f32 %v651, %v859
      %v861 = vpop.f32.mrb[0].mxu0
      %v862 = vadd.f32 %v653, %v861
      %863 = vmatprep.mubr.f32.mxu0 0.0
      %864 = vmatmul.mubr.f32.gmra.mrb[0].mxu0 %v740
      %v865 = vpop.f32.mrb[0].mxu0
      %v866 = vadd.f32 %v657, %v865
      %v867 = vpop.f32.mrb[0].mxu0
      %v868 = vadd.f32 %v659, %v867
      %869 = vmatprep.mubr.f32.mxu0 0.0
      %870 = vmatmul.mubr.f32.gmra.mrb[0].mxu0 %v743
      %v871 = vpop.f32.mrb[0].mxu0
      %v872 = vadd.f32 %v663, %v871
      %v873 = vpop.f32.mrb[0].mxu0
      %v874 = vadd.f32 %v665, %v873
      %875 = vmatprep.mubr.f32.mxu0 0.0
      %876 = vmatmul.mubr.f32.gmra.mrb[0].mxu0 %v746
      %v877 = vpop.f32.mrb[0].mxu0
      %v878 = vadd.f32 %v669, %v877
      %v879 = vpop.f32.mrb[0].mxu0
      %v880 = vadd.f32 %v671, %v879
      %881 = vmatprep.mubr.f32.mxu0 0.0
      %882 = vmatmul.mubr.f32.gmra.mrb[0].mxu0 %v749
      %v883 = vpop.f32.mrb[0].mxu0
      %v884 = vadd.f32 %v675, %v883
      %v885 = vpop.f32.mrb[0].mxu0
      %v886 = vadd.f32 %v677, %v885
      %887 = vmatprep.mubr.f32.mxu0 0.0
      %888 = vmatmul.mubr.f32.gmra.mrb[0].mxu0 %v752
      %v889 = vpop.f32.mrb[0].mxu0
      %v890 = vadd.f32 %v681, %v889
      %v891 = vpop.f32.mrb[0].mxu0
      %v892 = vadd.f32 %v683, %v891
      %893 = vmatprep.mubr.f32.mxu0 0.0
      %894 = vmatmul.mubr.f32.gmra.mrb[0].mxu0 %v755
      %v895 = vpop.f32.mrb[0].mxu0
      %v896 = vadd.f32 %v687, %v895
      %v897 = vpop.f32.mrb[0].mxu0
      %v898 = vadd.f32 %v689, %v897
      %899 = vmatprep.mubr.f32.mxu0 0.0
      %900 = vmatmul.mubr.f32.gmra.mrb[0].mxu0 %v758
      %v901 = vpop.f32.mrb[0].mxu0
      %v902 = vadd.f32 %v693, %v901
      %v903 = vpop.f32.mrb[0].mxu0
      %v904 = vadd.f32 %v695, %v903
      %905 = vmatprep.mubr.f32.mxu0 0.0
      %906 = vmatmul.mubr.f32.gmra.mrb[0].mxu0 %v761
      %v907 = vpop.f32.mrb[0].mxu0
      %v908 = vadd.f32 %v699, %v907
      %v909 = vpop.f32.mrb[0].mxu0
      %v910 = vadd.f32 %v701, %v909
      %911 = vmatprep.mubr.f32.mxu0 0.0
      %912 = vmatmul.mubr.f32.gmra.mrb[0].mxu0 %v764
      %v913 = vpop.f32.mrb[0].mxu0
      %v914 = vadd.f32 %v705, %v913
      %v915 = vpop.f32.mrb[0].mxu0
      %v916 = vadd.f32 %v707, %v915
      %917 = vmatprep.mubr.f32.mxu0 0.0
      %918 = vmatmul.mubr.f32.gmra.mrb[0].mxu0 %v767
      %v919 = vpop.f32.mrb[0].mxu0
      %v920 = vadd.f32 %v711, %v919
      %v921 = vpop.f32.mrb[0].mxu0
      %v922 = vadd.f32 %v713, %v921
      %923 = vmatprep.mubr.f32.mxu0 0.0
      %924 = vmatmul.mubr.f32.gmra.mrb[0].mxu0 %v770
      %v925 = vpop.f32.mrb[0].mxu0
      %v926 = vadd.f32 %v717, %v925
      %v927 = vpop.f32.mrb[0].mxu0
      %v928 = vadd.f32 %v719, %v927
      %929 = vmatprep.mubr.f32.mxu0 0.0
      %930 = vmatmul.mubr.f32.gmra.mrb[0].mxu0 %v773
      %v931 = vpop.f32.mrb[0].mxu0
      %v932 = vadd.f32 %v723, %v931
      %v933 = vpop.f32.mrb[0].mxu0
      %v934 = vadd.f32 %v725, %v933
      %935 = vdwg.mxu0
      %v936 = vld [vmem:[#allocation2 + $0x2] sm:$0xff]
      %v937 = vld [vmem:[#allocation2 + $0xa] sm:$0xff]
      %v938 = vld [vmem:[#allocation2 + $0x12] sm:$0xff]
      %v939 = vld [vmem:[#allocation2 + $0x1a] sm:$0xff]
      %v940 = vld [vmem:[#allocation2 + $0x22] sm:$0xff]
      %v941 = vld [vmem:[#allocation2 + $0x2a] sm:$0xff]
      %v942 = vld [vmem:[#allocation2 + $0x32] sm:$0xff]
      %v943 = vld [vmem:[#allocation2 + $0x3a] sm:$0xff]
      %v944 = vld [vmem:[#allocation2 + $0x42] sm:$0xff]
      %v945 = vld [vmem:[#allocation2 + $0x4a] sm:$0xff]
      %v946 = vld [vmem:[#allocation2 + $0x52] sm:$0xff]
      %v947 = vld [vmem:[#allocation2 + $0x5a] sm:$0xff]
      %v948 = vld [vmem:[#allocation2 + $0x62] sm:$0xff]
      %v949 = vld [vmem:[#allocation2 + $0x6a] sm:$0xff]
      %v950 = vld [vmem:[#allocation2 + $0x72] sm:$0xff]
      %v951 = vld [vmem:[#allocation2 + $0x7a] sm:$0xff]
      %s952 = scalar_lea.vmem %s1, 64
      %v953 = vld [vmem:[%s952] sm:$0xff]
      %v954 = vld [vmem:[%s952 + $0x8] sm:$0xff]
      %v955 = vld [vmem:[%s952 + $0x10] sm:$0xff]
      %v956 = vld [vmem:[%s952 + $0x18] sm:$0xff]
      %v958 = vsel %vm459, %v936, 0
      %v961 = vsel %vm459, %v937, 0
      %v964 = vsel %vm459, %v938, 0
      %v967 = vsel %vm459, %v939, 0
      %v970 = vsel %vm459, %v940, 0
      %v973 = vsel %vm459, %v941, 0
      %v976 = vsel %vm459, %v942, 0
      %v979 = vsel %vm459, %v943, 0
      %v982 = vsel %vm459, %v944, 0
      %v985 = vsel %vm459, %v945, 0
      %v988 = vsel %vm459, %v946, 0
      %v991 = vsel %vm459, %v947, 0
      %v994 = vsel %vm459, %v948, 0
      %v997 = vsel %vm459, %v949, 0
      %v1000 = vsel %vm459, %v950, 0
      %v1003 = vsel %vm459, %v951, 0
      %1005 = vmatprep.subr.mxu0 %v954
      %1006 = vmatpush1.msra.mxu0 %v953
      %1007 = vmatprep.subr.mxu0 %v956
      %1008 = vmatpush1.msra.mxu0 %v955
      %1009 = vmatprep.subr.mxu0 0.0
      %1010 = vmatpush1.msra.mxu0 0.0
      %1011 = vmatprep.subr.mxu0 0.0
      %1012 = vmatpush1.msra.mxu0 0.0
      %1013 = vmatprep.subr.mxu0 0.0
      %1014 = vmatpush1.msra.mxu0 0.0
      %1015 = vmatprep.subr.mxu0 0.0
      %1016 = vmatpush1.msra.mxu0 0.0
      %1017 = vmatprep.subr.mxu0 0.0
      %1018 = vmatpush1.msra.mxu0 0.0
      %1019 = vmatprep.subr.mxu0 0.0
      %1020 = vmatpush1.msra.mxu0 0.0
      %1021 = vmatprep.subr.mxu0 0.0
      %1022 = vmatpush1.msra.mxu0 0.0
      %1023 = vmatprep.subr.mxu0 0.0
      %1024 = vmatpush1.msra.mxu0 0.0
      %1025 = vmatprep.subr.mxu0 0.0
      %1026 = vmatpush1.msra.mxu0 0.0
      %1027 = vmatprep.subr.mxu0 0.0
      %1028 = vmatpush1.msra.mxu0 0.0
      %1029 = vmatprep.subr.mxu0 0.0
      %1030 = vmatpush1.msra.mxu0 0.0
      %1031 = vmatprep.subr.mxu0 0.0
      %1032 = vmatpush1.msra.mxu0 0.0
      %1033 = vmatprep.subr.mxu0 0.0
      %1034 = vmatpush1.msra.mxu0 0.0
      %1035 = vmatprep.subr.mxu0 0.0
      %1036 = vmatpush1.msra.mxu0 0.0
      %1037 = vmatprep.subr.mxu0 0.0
      %1038 = vmatpush1.msra.mxu0 0.0
      %1039 = vmatprep.subr.mxu0 0.0
      %1040 = vmatpush1.msra.mxu0 0.0
      %1041 = vmatprep.subr.mxu0 0.0
      %1042 = vmatpush1.msra.mxu0 0.0
      %1043 = vmatprep.subr.mxu0 0.0
      %1044 = vmatpush1.msra.mxu0 0.0
      %1045 = vmatprep.subr.mxu0 0.0
      %1046 = vmatpush1.msra.mxu0 0.0
      %1047 = vmatprep.subr.mxu0 0.0
      %1048 = vmatpush1.msra.mxu0 0.0
      %1049 = vmatprep.subr.mxu0 0.0
      %1050 = vmatpush1.msra.mxu0 0.0
      %1051 = vmatprep.subr.mxu0 0.0
      %1052 = vmatpush1.msra.mxu0 0.0
      %1053 = vmatprep.subr.mxu0 0.0
      %1054 = vmatpush1.msra.mxu0 0.0
      %1055 = vmatprep.subr.mxu0 0.0
      %1056 = vmatpush1.msra.mxu0 0.0
      %1057 = vmatprep.subr.mxu0 0.0
      %1058 = vmatpush1.msra.mxu0 0.0
      %1059 = vmatprep.subr.mxu0 0.0
      %1060 = vmatpush1.msra.mxu0 0.0
      %1061 = vmatprep.subr.mxu0 0.0
      %1062 = vmatpush1.msra.mxu0 0.0
      %1063 = vmatprep.subr.mxu0 0.0
      %1064 = vmatpush1.msra.mxu0 0.0
      %1065 = vmatprep.subr.mxu0 0.0
      %1066 = vmatpush1.msra.mxu0 0.0
      %1067 = vmatprep.subr.mxu0 0.0
      %1068 = vmatpush1.msra.mxu0 0.0
      %1069 = vmatprep.mubr.f32.mxu0 0.0
      %1070 = vmatmul.mubr.f32.gmra.mrb[0].mxu0 %v958
      %v1071 = vpop.f32.mrb[0].mxu0
      %v1072 = vadd.f32 0.0, %v1071
      %v1073 = vpop.f32.mrb[0].mxu0
      %v1074 = vadd.f32 0.0, %v1073
      %1075 = vmatprep.mubr.f32.mxu0 0.0
      %1076 = vmatmul.mubr.f32.gmra.mrb[0].mxu0 %v961
      %v1077 = vpop.f32.mrb[0].mxu0
      %v1078 = vadd.f32 0.0, %v1077
      %v1079 = vpop.f32.mrb[0].mxu0
      %v1080 = vadd.f32 0.0, %v1079
      %1081 = vmatprep.mubr.f32.mxu0 0.0
      %1082 = vmatmul.mubr.f32.gmra.mrb[0].mxu0 %v964
      %v1083 = vpop.f32.mrb[0].mxu0
      %v1084 = vadd.f32 0.0, %v1083
      %v1085 = vpop.f32.mrb[0].mxu0
      %v1086 = vadd.f32 0.0, %v1085
      %1087 = vmatprep.mubr.f32.mxu0 0.0
      %1088 = vmatmul.mubr.f32.gmra.mrb[0].mxu0 %v967
      %v1089 = vpop.f32.mrb[0].mxu0
      %v1090 = vadd.f32 0.0, %v1089
      %v1091 = vpop.f32.mrb[0].mxu0
      %v1092 = vadd.f32 0.0, %v1091
      %1093 = vmatprep.mubr.f32.mxu0 0.0
      %1094 = vmatmul.mubr.f32.gmra.mrb[0].mxu0 %v970
      %v1095 = vpop.f32.mrb[0].mxu0
      %v1096 = vadd.f32 0.0, %v1095
      %v1097 = vpop.f32.mrb[0].mxu0
      %v1098 = vadd.f32 0.0, %v1097
      %1099 = vmatprep.mubr.f32.mxu0 0.0
      %1100 = vmatmul.mubr.f32.gmra.mrb[0].mxu0 %v973
      %v1101 = vpop.f32.mrb[0].mxu0
      %v1102 = vadd.f32 0.0, %v1101
      %v1103 = vpop.f32.mrb[0].mxu0
      %v1104 = vadd.f32 0.0, %v1103
      %1105 = vmatprep.mubr.f32.mxu0 0.0
      %1106 = vmatmul.mubr.f32.gmra.mrb[0].mxu0 %v976
      %v1107 = vpop.f32.mrb[0].mxu0
      %v1108 = vadd.f32 0.0, %v1107
      %v1109 = vpop.f32.mrb[0].mxu0
      %v1110 = vadd.f32 0.0, %v1109
      %1111 = vmatprep.mubr.f32.mxu0 0.0
      %1112 = vmatmul.mubr.f32.gmra.mrb[0].mxu0 %v979
      %v1113 = vpop.f32.mrb[0].mxu0
      %v1114 = vadd.f32 0.0, %v1113
      %v1115 = vpop.f32.mrb[0].mxu0
      %v1116 = vadd.f32 0.0, %v1115
      %1117 = vmatprep.mubr.f32.mxu0 0.0
      %1118 = vmatmul.mubr.f32.gmra.mrb[0].mxu0 %v982
      %v1119 = vpop.f32.mrb[0].mxu0
      %v1120 = vadd.f32 0.0, %v1119
      %v1121 = vpop.f32.mrb[0].mxu0
      %v1122 = vadd.f32 0.0, %v1121
      %1123 = vmatprep.mubr.f32.mxu0 0.0
      %1124 = vmatmul.mubr.f32.gmra.mrb[0].mxu0 %v985
      %v1125 = vpop.f32.mrb[0].mxu0
      %v1126 = vadd.f32 0.0, %v1125
      %v1127 = vpop.f32.mrb[0].mxu0
      %v1128 = vadd.f32 0.0, %v1127
      %1129 = vmatprep.mubr.f32.mxu0 0.0
      %1130 = vmatmul.mubr.f32.gmra.mrb[0].mxu0 %v988
      %v1131 = vpop.f32.mrb[0].mxu0
      %v1132 = vadd.f32 0.0, %v1131
      %v1133 = vpop.f32.mrb[0].mxu0
      %v1134 = vadd.f32 0.0, %v1133
      %1135 = vmatprep.mubr.f32.mxu0 0.0
      %1136 = vmatmul.mubr.f32.gmra.mrb[0].mxu0 %v991
      %v1137 = vpop.f32.mrb[0].mxu0
      %v1138 = vadd.f32 0.0, %v1137
      %v1139 = vpop.f32.mrb[0].mxu0
      %v1140 = vadd.f32 0.0, %v1139
      %1141 = vmatprep.mubr.f32.mxu0 0.0
      %1142 = vmatmul.mubr.f32.gmra.mrb[0].mxu0 %v994
      %v1143 = vpop.f32.mrb[0].mxu0
      %v1144 = vadd.f32 0.0, %v1143
      %v1145 = vpop.f32.mrb[0].mxu0
      %v1146 = vadd.f32 0.0, %v1145
      %1147 = vmatprep.mubr.f32.mxu0 0.0
      %1148 = vmatmul.mubr.f32.gmra.mrb[0].mxu0 %v997
      %v1149 = vpop.f32.mrb[0].mxu0
      %v1150 = vadd.f32 0.0, %v1149
      %v1151 = vpop.f32.mrb[0].mxu0
      %v1152 = vadd.f32 0.0, %v1151
      %1153 = vmatprep.mubr.f32.mxu0 0.0
      %1154 = vmatmul.mubr.f32.gmra.mrb[0].mxu0 %v1000
      %v1155 = vpop.f32.mrb[0].mxu0
      %v1156 = vadd.f32 0.0, %v1155
      %v1157 = vpop.f32.mrb[0].mxu0
      %v1158 = vadd.f32 0.0, %v1157
      %1159 = vmatprep.mubr.f32.mxu0 0.0
      %1160 = vmatmul.mubr.f32.gmra.mrb[0].mxu0 %v1003
      %v1161 = vpop.f32.mrb[0].mxu0
      %v1162 = vadd.f32 0.0, %v1161
      %v1163 = vpop.f32.mrb[0].mxu0
      %v1164 = vadd.f32 0.0, %v1163
      %1165 = vdwg.mxu0
      %v1166 = vadd.f32 %v842, %v1072
      %v1167 = vadd.f32 %v844, %v1074
      %v1168 = vadd.f32 %v848, %v1078
      %v1169 = vadd.f32 %v850, %v1080
      %v1170 = vadd.f32 %v854, %v1084
      %v1171 = vadd.f32 %v856, %v1086
      %v1172 = vadd.f32 %v860, %v1090
      %v1173 = vadd.f32 %v862, %v1092
      %v1174 = vadd.f32 %v866, %v1096
      %v1175 = vadd.f32 %v868, %v1098
      %v1176 = vadd.f32 %v872, %v1102
      %v1177 = vadd.f32 %v874, %v1104
      %v1178 = vadd.f32 %v878, %v1108
      %v1179 = vadd.f32 %v880, %v1110
      %v1180 = vadd.f32 %v884, %v1114
      %v1181 = vadd.f32 %v886, %v1116
      %v1182 = vadd.f32 %v890, %v1120
      %v1183 = vadd.f32 %v892, %v1122
      %v1184 = vadd.f32 %v896, %v1126
      %v1185 = vadd.f32 %v898, %v1128
      %v1186 = vadd.f32 %v902, %v1132
      %v1187 = vadd.f32 %v904, %v1134
      %v1188 = vadd.f32 %v908, %v1138
      %v1189 = vadd.f32 %v910, %v1140
      %v1190 = vadd.f32 %v914, %v1144
      %v1191 = vadd.f32 %v916, %v1146
      %v1192 = vadd.f32 %v920, %v1150
      %v1193 = vadd.f32 %v922, %v1152
      %v1194 = vadd.f32 %v926, %v1156
      %v1195 = vadd.f32 %v928, %v1158
      %v1196 = vadd.f32 %v932, %v1162
      %v1197 = vadd.f32 %v934, %v1164
      %v1198 = vld [vmem:[#allocation2 + $0x3] sm:$0xff]
      %v1199 = vld [vmem:[#allocation2 + $0xb] sm:$0xff]
      %v1200 = vld [vmem:[#allocation2 + $0x13] sm:$0xff]
      %v1201 = vld [vmem:[#allocation2 + $0x1b] sm:$0xff]
      %v1202 = vld [vmem:[#allocation2 + $0x23] sm:$0xff]
      %v1203 = vld [vmem:[#allocation2 + $0x2b] sm:$0xff]
      %v1204 = vld [vmem:[#allocation2 + $0x33] sm:$0xff]
      %v1205 = vld [vmem:[#allocation2 + $0x3b] sm:$0xff]
      %v1206 = vld [vmem:[#allocation2 + $0x43] sm:$0xff]
      %v1207 = vld [vmem:[#allocation2 + $0x4b] sm:$0xff]
      %v1208 = vld [vmem:[#allocation2 + $0x53] sm:$0xff]
      %v1209 = vld [vmem:[#allocation2 + $0x5b] sm:$0xff]
      %v1210 = vld [vmem:[#allocation2 + $0x63] sm:$0xff]
      %v1211 = vld [vmem:[#allocation2 + $0x6b] sm:$0xff]
      %v1212 = vld [vmem:[#allocation2 + $0x73] sm:$0xff]
      %v1213 = vld [vmem:[#allocation2 + $0x7b] sm:$0xff]
      %s1214 = scalar_lea.vmem %s1, 96
      %v1215 = vld [vmem:[%s1214] sm:$0xff]
      %v1216 = vld [vmem:[%s1214 + $0x8] sm:$0xff]
      %v1217 = vld [vmem:[%s1214 + $0x10] sm:$0xff]
      %v1218 = vld [vmem:[%s1214 + $0x18] sm:$0xff]
      %v1220 = vsel %vm459, %v1198, 0
      %v1223 = vsel %vm459, %v1199, 0
      %v1226 = vsel %vm459, %v1200, 0
      %v1229 = vsel %vm459, %v1201, 0
      %v1232 = vsel %vm459, %v1202, 0
      %v1235 = vsel %vm459, %v1203, 0
      %v1238 = vsel %vm459, %v1204, 0
      %v1241 = vsel %vm459, %v1205, 0
      %v1244 = vsel %vm459, %v1206, 0
      %v1247 = vsel %vm459, %v1207, 0
      %v1250 = vsel %vm459, %v1208, 0
      %v1253 = vsel %vm459, %v1209, 0
      %v1256 = vsel %vm459, %v1210, 0
      %v1259 = vsel %vm459, %v1211, 0
      %v1262 = vsel %vm459, %v1212, 0
      %v1265 = vsel %vm459, %v1213, 0
      %1267 = vmatprep.subr.mxu0 %v1216
      %1268 = vmatpush1.msra.mxu0 %v1215
      %1269 = vmatprep.subr.mxu0 %v1218
      %1270 = vmatpush1.msra.mxu0 %v1217
      %1271 = vmatprep.subr.mxu0 0.0
      %1272 = vmatpush1.msra.mxu0 0.0
      %1273 = vmatprep.subr.mxu0 0.0
      %1274 = vmatpush1.msra.mxu0 0.0
      %1275 = vmatprep.subr.mxu0 0.0
      %1276 = vmatpush1.msra.mxu0 0.0
      %1277 = vmatprep.subr.mxu0 0.0
      %1278 = vmatpush1.msra.mxu0 0.0
      %1279 = vmatprep.subr.mxu0 0.0
      %1280 = vmatpush1.msra.mxu0 0.0
      %1281 = vmatprep.subr.mxu0 0.0
      %1282 = vmatpush1.msra.mxu0 0.0
      %1283 = vmatprep.subr.mxu0 0.0
      %1284 = vmatpush1.msra.mxu0 0.0
      %1285 = vmatprep.subr.mxu0 0.0
      %1286 = vmatpush1.msra.mxu0 0.0
      %1287 = vmatprep.subr.mxu0 0.0
      %1288 = vmatpush1.msra.mxu0 0.0
      %1289 = vmatprep.subr.mxu0 0.0
      %1290 = vmatpush1.msra.mxu0 0.0
      %1291 = vmatprep.subr.mxu0 0.0
      %1292 = vmatpush1.msra.mxu0 0.0
      %1293 = vmatprep.subr.mxu0 0.0
      %1294 = vmatpush1.msra.mxu0 0.0
      %1295 = vmatprep.subr.mxu0 0.0
      %1296 = vmatpush1.msra.mxu0 0.0
      %1297 = vmatprep.subr.mxu0 0.0
      %1298 = vmatpush1.msra.mxu0 0.0
      %1299 = vmatprep.subr.mxu0 0.0
      %1300 = vmatpush1.msra.mxu0 0.0
      %1301 = vmatprep.subr.mxu0 0.0
      %1302 = vmatpush1.msra.mxu0 0.0
      %1303 = vmatprep.subr.mxu0 0.0
      %1304 = vmatpush1.msra.mxu0 0.0
      %1305 = vmatprep.subr.mxu0 0.0
      %1306 = vmatpush1.msra.mxu0 0.0
      %1307 = vmatprep.subr.mxu0 0.0
      %1308 = vmatpush1.msra.mxu0 0.0
      %1309 = vmatprep.subr.mxu0 0.0
      %1310 = vmatpush1.msra.mxu0 0.0
      %1311 = vmatprep.subr.mxu0 0.0
      %1312 = vmatpush1.msra.mxu0 0.0
      %1313 = vmatprep.subr.mxu0 0.0
      %1314 = vmatpush1.msra.mxu0 0.0
      %1315 = vmatprep.subr.mxu0 0.0
      %1316 = vmatpush1.msra.mxu0 0.0
      %1317 = vmatprep.subr.mxu0 0.0
      %1318 = vmatpush1.msra.mxu0 0.0
      %1319 = vmatprep.subr.mxu0 0.0
      %1320 = vmatpush1.msra.mxu0 0.0
      %1321 = vmatprep.subr.mxu0 0.0
      %1322 = vmatpush1.msra.mxu0 0.0
      %1323 = vmatprep.subr.mxu0 0.0
      %1324 = vmatpush1.msra.mxu0 0.0
      %1325 = vmatprep.subr.mxu0 0.0
      %1326 = vmatpush1.msra.mxu0 0.0
      %1327 = vmatprep.subr.mxu0 0.0
      %1328 = vmatpush1.msra.mxu0 0.0
      %1329 = vmatprep.subr.mxu0 0.0
      %1330 = vmatpush1.msra.mxu0 0.0
      %1331 = vmatprep.mubr.f32.mxu0 0.0
      %1332 = vmatmul.mubr.f32.gmra.mrb[0].mxu0 %v1220
      %v1333 = vpop.f32.mrb[0].mxu0
      %v1334 = vadd.f32 0.0, %v1333
      %v1335 = vpop.f32.mrb[0].mxu0
      %v1336 = vadd.f32 0.0, %v1335
      %1337 = vmatprep.mubr.f32.mxu0 0.0
      %1338 = vmatmul.mubr.f32.gmra.mrb[0].mxu0 %v1223
      %v1339 = vpop.f32.mrb[0].mxu0
      %v1340 = vadd.f32 0.0, %v1339
      %v1341 = vpop.f32.mrb[0].mxu0
      %v1342 = vadd.f32 0.0, %v1341
      %1343 = vmatprep.mubr.f32.mxu0 0.0
      %1344 = vmatmul.mubr.f32.gmra.mrb[0].mxu0 %v1226
      %v1345 = vpop.f32.mrb[0].mxu0
      %v1346 = vadd.f32 0.0, %v1345
      %v1347 = vpop.f32.mrb[0].mxu0
      %v1348 = vadd.f32 0.0, %v1347
      %1349 = vmatprep.mubr.f32.mxu0 0.0
      %1350 = vmatmul.mubr.f32.gmra.mrb[0].mxu0 %v1229
      %v1351 = vpop.f32.mrb[0].mxu0
      %v1352 = vadd.f32 0.0, %v1351
      %v1353 = vpop.f32.mrb[0].mxu0
      %v1354 = vadd.f32 0.0, %v1353
      %1355 = vmatprep.mubr.f32.mxu0 0.0
      %1356 = vmatmul.mubr.f32.gmra.mrb[0].mxu0 %v1232
      %v1357 = vpop.f32.mrb[0].mxu0
      %v1358 = vadd.f32 0.0, %v1357
      %v1359 = vpop.f32.mrb[0].mxu0
      %v1360 = vadd.f32 0.0, %v1359
      %1361 = vmatprep.mubr.f32.mxu0 0.0
      %1362 = vmatmul.mubr.f32.gmra.mrb[0].mxu0 %v1235
      %v1363 = vpop.f32.mrb[0].mxu0
      %v1364 = vadd.f32 0.0, %v1363
      %v1365 = vpop.f32.mrb[0].mxu0
      %v1366 = vadd.f32 0.0, %v1365
      %1367 = vmatprep.mubr.f32.mxu0 0.0
      %1368 = vmatmul.mubr.f32.gmra.mrb[0].mxu0 %v1238
      %v1369 = vpop.f32.mrb[0].mxu0
      %v1370 = vadd.f32 0.0, %v1369
      %v1371 = vpop.f32.mrb[0].mxu0
      %v1372 = vadd.f32 0.0, %v1371
      %1373 = vmatprep.mubr.f32.mxu0 0.0
      %1374 = vmatmul.mubr.f32.gmra.mrb[0].mxu0 %v1241
      %v1375 = vpop.f32.mrb[0].mxu0
      %v1376 = vadd.f32 0.0, %v1375
      %v1377 = vpop.f32.mrb[0].mxu0
      %v1378 = vadd.f32 0.0, %v1377
      %1379 = vmatprep.mubr.f32.mxu0 0.0
      %1380 = vmatmul.mubr.f32.gmra.mrb[0].mxu0 %v1244
      %v1381 = vpop.f32.mrb[0].mxu0
      %v1382 = vadd.f32 0.0, %v1381
      %v1383 = vpop.f32.mrb[0].mxu0
      %v1384 = vadd.f32 0.0, %v1383
      %1385 = vmatprep.mubr.f32.mxu0 0.0
      %1386 = vmatmul.mubr.f32.gmra.mrb[0].mxu0 %v1247
      %v1387 = vpop.f32.mrb[0].mxu0
      %v1388 = vadd.f32 0.0, %v1387
      %v1389 = vpop.f32.mrb[0].mxu0
      %v1390 = vadd.f32 0.0, %v1389
      %1391 = vmatprep.mubr.f32.mxu0 0.0
      %1392 = vmatmul.mubr.f32.gmra.mrb[0].mxu0 %v1250
      %v1393 = vpop.f32.mrb[0].mxu0
      %v1394 = vadd.f32 0.0, %v1393
      %v1395 = vpop.f32.mrb[0].mxu0
      %v1396 = vadd.f32 0.0, %v1395
      %1397 = vmatprep.mubr.f32.mxu0 0.0
      %1398 = vmatmul.mubr.f32.gmra.mrb[0].mxu0 %v1253
      %v1399 = vpop.f32.mrb[0].mxu0
      %v1400 = vadd.f32 0.0, %v1399
      %v1401 = vpop.f32.mrb[0].mxu0
      %v1402 = vadd.f32 0.0, %v1401
      %1403 = vmatprep.mubr.f32.mxu0 0.0
      %1404 = vmatmul.mubr.f32.gmra.mrb[0].mxu0 %v1256
      %v1405 = vpop.f32.mrb[0].mxu0
      %v1406 = vadd.f32 0.0, %v1405
      %v1407 = vpop.f32.mrb[0].mxu0
      %v1408 = vadd.f32 0.0, %v1407
      %1409 = vmatprep.mubr.f32.mxu0 0.0
      %1410 = vmatmul.mubr.f32.gmra.mrb[0].mxu0 %v1259
      %v1411 = vpop.f32.mrb[0].mxu0
      %v1412 = vadd.f32 0.0, %v1411
      %v1413 = vpop.f32.mrb[0].mxu0
      %v1414 = vadd.f32 0.0, %v1413
      %1415 = vmatprep.mubr.f32.mxu0 0.0
      %1416 = vmatmul.mubr.f32.gmra.mrb[0].mxu0 %v1262
      %v1417 = vpop.f32.mrb[0].mxu0
      %v1418 = vadd.f32 0.0, %v1417
      %v1419 = vpop.f32.mrb[0].mxu0
      %v1420 = vadd.f32 0.0, %v1419
      %1421 = vmatprep.mubr.f32.mxu0 0.0
      %1422 = vmatmul.mubr.f32.gmra.mrb[0].mxu0 %v1265
      %v1423 = vpop.f32.mrb[0].mxu0
      %v1424 = vadd.f32 0.0, %v1423
      %v1425 = vpop.f32.mrb[0].mxu0
      %v1426 = vadd.f32 0.0, %v1425
      %1427 = vdwg.mxu0
      %v1428 = vadd.f32 %v1166, %v1334
      %v1429 = vadd.f32 %v1167, %v1336
      %v1430 = vadd.f32 %v1168, %v1340
      %v1431 = vadd.f32 %v1169, %v1342
      %v1432 = vadd.f32 %v1170, %v1346
      %v1433 = vadd.f32 %v1171, %v1348
      %v1434 = vadd.f32 %v1172, %v1352
      %v1435 = vadd.f32 %v1173, %v1354
      %v1436 = vadd.f32 %v1174, %v1358
      %v1437 = vadd.f32 %v1175, %v1360
      %v1438 = vadd.f32 %v1176, %v1364
      %v1439 = vadd.f32 %v1177, %v1366
      %v1440 = vadd.f32 %v1178, %v1370
      %v1441 = vadd.f32 %v1179, %v1372
      %v1442 = vadd.f32 %v1180, %v1376
      %v1443 = vadd.f32 %v1181, %v1378
      %v1444 = vadd.f32 %v1182, %v1382
      %v1445 = vadd.f32 %v1183, %v1384
      %v1446 = vadd.f32 %v1184, %v1388
      %v1447 = vadd.f32 %v1185, %v1390
      %v1448 = vadd.f32 %v1186, %v1394
      %v1449 = vadd.f32 %v1187, %v1396
      %v1450 = vadd.f32 %v1188, %v1400
      %v1451 = vadd.f32 %v1189, %v1402
      %v1452 = vadd.f32 %v1190, %v1406
      %v1453 = vadd.f32 %v1191, %v1408
      %v1454 = vadd.f32 %v1192, %v1412
      %v1455 = vadd.f32 %v1193, %v1414
      %v1456 = vadd.f32 %v1194, %v1418
      %v1457 = vadd.f32 %v1195, %v1420
      %v1458 = vadd.f32 %v1196, %v1424
      %v1459 = vadd.f32 %v1197, %v1426
      %v1460 = vld [vmem:[#allocation2 + $0x4] sm:$0xff]
      %v1461 = vld [vmem:[#allocation2 + $0xc] sm:$0xff]
      %v1462 = vld [vmem:[#allocation2 + $0x14] sm:$0xff]
      %v1463 = vld [vmem:[#allocation2 + $0x1c] sm:$0xff]
      %v1464 = vld [vmem:[#allocation2 + $0x24] sm:$0xff]
      %v1465 = vld [vmem:[#allocation2 + $0x2c] sm:$0xff]
      %v1466 = vld [vmem:[#allocation2 + $0x34] sm:$0xff]
      %v1467 = vld [vmem:[#allocation2 + $0x3c] sm:$0xff]
      %v1468 = vld [vmem:[#allocation2 + $0x44] sm:$0xff]
      %v1469 = vld [vmem:[#allocation2 + $0x4c] sm:$0xff]
      %v1470 = vld [vmem:[#allocation2 + $0x54] sm:$0xff]
      %v1471 = vld [vmem:[#allocation2 + $0x5c] sm:$0xff]
      %v1472 = vld [vmem:[#allocation2 + $0x64] sm:$0xff]
      %v1473 = vld [vmem:[#allocation2 + $0x6c] sm:$0xff]
      %v1474 = vld [vmem:[#allocation2 + $0x74] sm:$0xff]
      %v1475 = vld [vmem:[#allocation2 + $0x7c] sm:$0xff]
      %s1476 = scalar_lea.vmem %s1, 128
      %v1477 = vld [vmem:[%s1476] sm:$0xff]
      %v1478 = vld [vmem:[%s1476 + $0x8] sm:$0xff]
      %v1479 = vld [vmem:[%s1476 + $0x10] sm:$0xff]
      %v1480 = vld [vmem:[%s1476 + $0x18] sm:$0xff]
      %v1482 = vsel %vm459, %v1460, 0
      %v1485 = vsel %vm459, %v1461, 0
      %v1488 = vsel %vm459, %v1462, 0
      %v1491 = vsel %vm459, %v1463, 0
      %v1494 = vsel %vm459, %v1464, 0
      %v1497 = vsel %vm459, %v1465, 0
      %v1500 = vsel %vm459, %v1466, 0
      %v1503 = vsel %vm459, %v1467, 0
      %v1506 = vsel %vm459, %v1468, 0
      %v1509 = vsel %vm459, %v1469, 0
      %v1512 = vsel %vm459, %v1470, 0
      %v1515 = vsel %vm459, %v1471, 0
      %v1518 = vsel %vm459, %v1472, 0
      %v1521 = vsel %vm459, %v1473, 0
      %v1524 = vsel %vm459, %v1474, 0
      %v1527 = vsel %vm459, %v1475, 0
      %1529 = vmatprep.subr.mxu0 %v1478
      %1530 = vmatpush1.msra.mxu0 %v1477
      %1531 = vmatprep.subr.mxu0 %v1480
      %1532 = vmatpush1.msra.mxu0 %v1479
      %1533 = vmatprep.subr.mxu0 0.0
      %1534 = vmatpush1.msra.mxu0 0.0
      %1535 = vmatprep.subr.mxu0 0.0
      %1536 = vmatpush1.msra.mxu0 0.0
      %1537 = vmatprep.subr.mxu0 0.0
      %1538 = vmatpush1.msra.mxu0 0.0
      %1539 = vmatprep.subr.mxu0 0.0
      %1540 = vmatpush1.msra.mxu0 0.0
      %1541 = vmatprep.subr.mxu0 0.0
      %1542 = vmatpush1.msra.mxu0 0.0
      %1543 = vmatprep.subr.mxu0 0.0
      %1544 = vmatpush1.msra.mxu0 0.0
      %1545 = vmatprep.subr.mxu0 0.0
      %1546 = vmatpush1.msra.mxu0 0.0
      %1547 = vmatprep.subr.mxu0 0.0
      %1548 = vmatpush1.msra.mxu0 0.0
      %1549 = vmatprep.subr.mxu0 0.0
      %1550 = vmatpush1.msra.mxu0 0.0
      %1551 = vmatprep.subr.mxu0 0.0
      %1552 = vmatpush1.msra.mxu0 0.0
      %1553 = vmatprep.subr.mxu0 0.0
      %1554 = vmatpush1.msra.mxu0 0.0
      %1555 = vmatprep.subr.mxu0 0.0
      %1556 = vmatpush1.msra.mxu0 0.0
      %1557 = vmatprep.subr.mxu0 0.0
      %1558 = vmatpush1.msra.mxu0 0.0
      %1559 = vmatprep.subr.mxu0 0.0
      %1560 = vmatpush1.msra.mxu0 0.0
      %1561 = vmatprep.subr.mxu0 0.0
      %1562 = vmatpush1.msra.mxu0 0.0
      %1563 = vmatprep.subr.mxu0 0.0
      %1564 = vmatpush1.msra.mxu0 0.0
      %1565 = vmatprep.subr.mxu0 0.0
      %1566 = vmatpush1.msra.mxu0 0.0
      %1567 = vmatprep.subr.mxu0 0.0
      %1568 = vmatpush1.msra.mxu0 0.0
      %1569 = vmatprep.subr.mxu0 0.0
      %1570 = vmatpush1.msra.mxu0 0.0
      %1571 = vmatprep.subr.mxu0 0.0
      %1572 = vmatpush1.msra.mxu0 0.0
      %1573 = vmatprep.subr.mxu0 0.0
      %1574 = vmatpush1.msra.mxu0 0.0
      %1575 = vmatprep.subr.mxu0 0.0
      %1576 = vmatpush1.msra.mxu0 0.0
      %1577 = vmatprep.subr.mxu0 0.0
      %1578 = vmatpush1.msra.mxu0 0.0
      %1579 = vmatprep.subr.mxu0 0.0
      %1580 = vmatpush1.msra.mxu0 0.0
      %1581 = vmatprep.subr.mxu0 0.0
      %1582 = vmatpush1.msra.mxu0 0.0
      %1583 = vmatprep.subr.mxu0 0.0
      %1584 = vmatpush1.msra.mxu0 0.0
      %1585 = vmatprep.subr.mxu0 0.0
      %1586 = vmatpush1.msra.mxu0 0.0
      %1587 = vmatprep.subr.mxu0 0.0
      %1588 = vmatpush1.msra.mxu0 0.0
      %1589 = vmatprep.subr.mxu0 0.0
      %1590 = vmatpush1.msra.mxu0 0.0
      %1591 = vmatprep.subr.mxu0 0.0
      %1592 = vmatpush1.msra.mxu0 0.0
      %1593 = vmatprep.mubr.f32.mxu0 0.0
      %1594 = vmatmul.mubr.f32.gmra.mrb[0].mxu0 %v1482
      %v1595 = vpop.f32.mrb[0].mxu0
      %v1596 = vadd.f32 0.0, %v1595
      %v1597 = vpop.f32.mrb[0].mxu0
      %v1598 = vadd.f32 0.0, %v1597
      %1599 = vmatprep.mubr.f32.mxu0 0.0
      %1600 = vmatmul.mubr.f32.gmra.mrb[0].mxu0 %v1485
      %v1601 = vpop.f32.mrb[0].mxu0
      %v1602 = vadd.f32 0.0, %v1601
      %v1603 = vpop.f32.mrb[0].mxu0
      %v1604 = vadd.f32 0.0, %v1603
      %1605 = vmatprep.mubr.f32.mxu0 0.0
      %1606 = vmatmul.mubr.f32.gmra.mrb[0].mxu0 %v1488
      %v1607 = vpop.f32.mrb[0].mxu0
      %v1608 = vadd.f32 0.0, %v1607
      %v1609 = vpop.f32.mrb[0].mxu0
      %v1610 = vadd.f32 0.0, %v1609
      %1611 = vmatprep.mubr.f32.mxu0 0.0
      %1612 = vmatmul.mubr.f32.gmra.mrb[0].mxu0 %v1491
      %v1613 = vpop.f32.mrb[0].mxu0
      %v1614 = vadd.f32 0.0, %v1613
      %v1615 = vpop.f32.mrb[0].mxu0
      %v1616 = vadd.f32 0.0, %v1615
      %1617 = vmatprep.mubr.f32.mxu0 0.0
      %1618 = vmatmul.mubr.f32.gmra.mrb[0].mxu0 %v1494
      %v1619 = vpop.f32.mrb[0].mxu0
      %v1620 = vadd.f32 0.0, %v1619
      %v1621 = vpop.f32.mrb[0].mxu0
      %v1622 = vadd.f32 0.0, %v1621
      %1623 = vmatprep.mubr.f32.mxu0 0.0
      %1624 = vmatmul.mubr.f32.gmra.mrb[0].mxu0 %v1497
      %v1625 = vpop.f32.mrb[0].mxu0
      %v1626 = vadd.f32 0.0, %v1625
      %v1627 = vpop.f32.mrb[0].mxu0
      %v1628 = vadd.f32 0.0, %v1627
      %1629 = vmatprep.mubr.f32.mxu0 0.0
      %1630 = vmatmul.mubr.f32.gmra.mrb[0].mxu0 %v1500
      %v1631 = vpop.f32.mrb[0].mxu0
      %v1632 = vadd.f32 0.0, %v1631
      %v1633 = vpop.f32.mrb[0].mxu0
      %v1634 = vadd.f32 0.0, %v1633
      %1635 = vmatprep.mubr.f32.mxu0 0.0
      %1636 = vmatmul.mubr.f32.gmra.mrb[0].mxu0 %v1503
      %v1637 = vpop.f32.mrb[0].mxu0
      %v1638 = vadd.f32 0.0, %v1637
      %v1639 = vpop.f32.mrb[0].mxu0
      %v1640 = vadd.f32 0.0, %v1639
      %1641 = vmatprep.mubr.f32.mxu0 0.0
      %1642 = vmatmul.mubr.f32.gmra.mrb[0].mxu0 %v1506
      %v1643 = vpop.f32.mrb[0].mxu0
      %v1644 = vadd.f32 0.0, %v1643
      %v1645 = vpop.f32.mrb[0].mxu0
      %v1646 = vadd.f32 0.0, %v1645
      %1647 = vmatprep.mubr.f32.mxu0 0.0
      %1648 = vmatmul.mubr.f32.gmra.mrb[0].mxu0 %v1509
      %v1649 = vpop.f32.mrb[0].mxu0
      %v1650 = vadd.f32 0.0, %v1649
      %v1651 = vpop.f32.mrb[0].mxu0
      %v1652 = vadd.f32 0.0, %v1651
      %1653 = vmatprep.mubr.f32.mxu0 0.0
      %1654 = vmatmul.mubr.f32.gmra.mrb[0].mxu0 %v1512
      %v1655 = vpop.f32.mrb[0].mxu0
      %v1656 = vadd.f32 0.0, %v1655
      %v1657 = vpop.f32.mrb[0].mxu0
      %v1658 = vadd.f32 0.0, %v1657
      %1659 = vmatprep.mubr.f32.mxu0 0.0
      %1660 = vmatmul.mubr.f32.gmra.mrb[0].mxu0 %v1515
      %v1661 = vpop.f32.mrb[0].mxu0
      %v1662 = vadd.f32 0.0, %v1661
      %v1663 = vpop.f32.mrb[0].mxu0
      %v1664 = vadd.f32 0.0, %v1663
      %1665 = vmatprep.mubr.f32.mxu0 0.0
      %1666 = vmatmul.mubr.f32.gmra.mrb[0].mxu0 %v1518
      %v1667 = vpop.f32.mrb[0].mxu0
      %v1668 = vadd.f32 0.0, %v1667
      %v1669 = vpop.f32.mrb[0].mxu0
      %v1670 = vadd.f32 0.0, %v1669
      %1671 = vmatprep.mubr.f32.mxu0 0.0
      %1672 = vmatmul.mubr.f32.gmra.mrb[0].mxu0 %v1521
      %v1673 = vpop.f32.mrb[0].mxu0
      %v1674 = vadd.f32 0.0, %v1673
      %v1675 = vpop.f32.mrb[0].mxu0
      %v1676 = vadd.f32 0.0, %v1675
      %1677 = vmatprep.mubr.f32.mxu0 0.0
      %1678 = vmatmul.mubr.f32.gmra.mrb[0].mxu0 %v1524
      %v1679 = vpop.f32.mrb[0].mxu0
      %v1680 = vadd.f32 0.0, %v1679
      %v1681 = vpop.f32.mrb[0].mxu0
      %v1682 = vadd.f32 0.0, %v1681
      %1683 = vmatprep.mubr.f32.mxu0 0.0
      %1684 = vmatmul.mubr.f32.gmra.mrb[0].mxu0 %v1527
      %v1685 = vpop.f32.mrb[0].mxu0
      %v1686 = vadd.f32 0.0, %v1685
      %v1687 = vpop.f32.mrb[0].mxu0
      %v1688 = vadd.f32 0.0, %v1687
      %1689 = vdwg.mxu0
      %v1690 = vadd.f32 %v1428, %v1596
      %v1691 = vadd.f32 %v1429, %v1598
      %v1692 = vadd.f32 %v1430, %v1602
      %v1693 = vadd.f32 %v1431, %v1604
      %v1694 = vadd.f32 %v1432, %v1608
      %v1695 = vadd.f32 %v1433, %v1610
      %v1696 = vadd.f32 %v1434, %v1614
      %v1697 = vadd.f32 %v1435, %v1616
      %v1698 = vadd.f32 %v1436, %v1620
      %v1699 = vadd.f32 %v1437, %v1622
      %v1700 = vadd.f32 %v1438, %v1626
      %v1701 = vadd.f32 %v1439, %v1628
      %v1702 = vadd.f32 %v1440, %v1632
      %v1703 = vadd.f32 %v1441, %v1634
      %v1704 = vadd.f32 %v1442, %v1638
      %v1705 = vadd.f32 %v1443, %v1640
      %v1706 = vadd.f32 %v1444, %v1644
      %v1707 = vadd.f32 %v1445, %v1646
      %v1708 = vadd.f32 %v1446, %v1650
      %v1709 = vadd.f32 %v1447, %v1652
      %v1710 = vadd.f32 %v1448, %v1656
      %v1711 = vadd.f32 %v1449, %v1658
      %v1712 = vadd.f32 %v1450, %v1662
      %v1713 = vadd.f32 %v1451, %v1664
      %v1714 = vadd.f32 %v1452, %v1668
      %v1715 = vadd.f32 %v1453, %v1670
      %v1716 = vadd.f32 %v1454, %v1674
      %v1717 = vadd.f32 %v1455, %v1676
      %v1718 = vadd.f32 %v1456, %v1680
      %v1719 = vadd.f32 %v1457, %v1682
      %v1720 = vadd.f32 %v1458, %v1686
      %v1721 = vadd.f32 %v1459, %v1688
      %v1722 = vld [vmem:[%s2] sm:$0x3]
      %v1724 = vlaneseq
      %v1725 = vshrl.u32 %v1724, 7
      %v1726 = vsub.s32 0, %v1725
      %v1727 = vrot.slane %v1722, %v1726
      %v1728 = vlaneseq
      %v1729 = vshrl.u32 %v1728, 7
      %v1730 = vsub.s32 1, %v1729
      %v1731 = vrot.slane %v1722, %v1730
      %v1734 = vadd.f32 %v1690, %v1727
      %v1735 = vadd.f32 %v1691, %v1731
      %v1736 = vadd.f32 %v1692, %v1727
      %v1737 = vadd.f32 %v1693, %v1731
      %v1738 = vadd.f32 %v1694, %v1727
      %v1739 = vadd.f32 %v1695, %v1731
      %v1740 = vadd.f32 %v1696, %v1727
      %v1741 = vadd.f32 %v1697, %v1731
      %v1742 = vadd.f32 %v1698, %v1727
      %v1743 = vadd.f32 %v1699, %v1731
      %v1744 = vadd.f32 %v1700, %v1727
      %v1745 = vadd.f32 %v1701, %v1731
      %v1746 = vadd.f32 %v1702, %v1727
      %v1747 = vadd.f32 %v1703, %v1731
      %v1748 = vadd.f32 %v1704, %v1727
      %v1749 = vadd.f32 %v1705, %v1731
      %v1750 = vadd.f32 %v1706, %v1727
      %v1751 = vadd.f32 %v1707, %v1731
      %v1752 = vadd.f32 %v1708, %v1727
      %v1753 = vadd.f32 %v1709, %v1731
      %v1754 = vadd.f32 %v1710, %v1727
      %v1755 = vadd.f32 %v1711, %v1731
      %v1756 = vadd.f32 %v1712, %v1727
      %v1757 = vadd.f32 %v1713, %v1731
      %v1758 = vadd.f32 %v1714, %v1727
      %v1759 = vadd.f32 %v1715, %v1731
      %v1760 = vadd.f32 %v1716, %v1727
      %v1761 = vadd.f32 %v1717, %v1731
      %v1762 = vadd.f32 %v1718, %v1727
      %v1763 = vadd.f32 %v1719, %v1731
      %v1764 = vadd.f32 %v1720, %v1727
      %v1765 = vadd.f32 %v1721, %v1731
      %vm1766 = vcmp.gt.f32.partialorder %v1734, 0.0
      %vm1767 = vcmp.gt.f32.partialorder %v1735, 0.0
      %vm1768 = vcmp.gt.f32.partialorder %v1736, 0.0
      %vm1769 = vcmp.gt.f32.partialorder %v1737, 0.0
      %vm1770 = vcmp.gt.f32.partialorder %v1738, 0.0
      %vm1771 = vcmp.gt.f32.partialorder %v1739, 0.0
      %vm1772 = vcmp.gt.f32.partialorder %v1740, 0.0
      %vm1773 = vcmp.gt.f32.partialorder %v1741, 0.0
      %vm1774 = vcmp.gt.f32.partialorder %v1742, 0.0
      %vm1775 = vcmp.gt.f32.partialorder %v1743, 0.0
      %vm1776 = vcmp.gt.f32.partialorder %v1744, 0.0
      %vm1777 = vcmp.gt.f32.partialorder %v1745, 0.0
      %vm1778 = vcmp.gt.f32.partialorder %v1746, 0.0
      %vm1779 = vcmp.gt.f32.partialorder %v1747, 0.0
      %vm1780 = vcmp.gt.f32.partialorder %v1748, 0.0
      %vm1781 = vcmp.gt.f32.partialorder %v1749, 0.0
      %vm1782 = vcmp.gt.f32.partialorder %v1750, 0.0
      %vm1783 = vcmp.gt.f32.partialorder %v1751, 0.0
      %vm1784 = vcmp.gt.f32.partialorder %v1752, 0.0
      %vm1785 = vcmp.gt.f32.partialorder %v1753, 0.0
      %vm1786 = vcmp.gt.f32.partialorder %v1754, 0.0
      %vm1787 = vcmp.gt.f32.partialorder %v1755, 0.0
      %vm1788 = vcmp.gt.f32.partialorder %v1756, 0.0
      %vm1789 = vcmp.gt.f32.partialorder %v1757, 0.0
      %vm1790 = vcmp.gt.f32.partialorder %v1758, 0.0
      %vm1791 = vcmp.gt.f32.partialorder %v1759, 0.0
      %vm1792 = vcmp.gt.f32.partialorder %v1760, 0.0
      %vm1793 = vcmp.gt.f32.partialorder %v1761, 0.0
      %vm1794 = vcmp.gt.f32.partialorder %v1762, 0.0
      %vm1795 = vcmp.gt.f32.partialorder %v1763, 0.0
      %vm1796 = vcmp.gt.f32.partialorder %v1764, 0.0
      %vm1797 = vcmp.gt.f32.partialorder %v1765, 0.0
      %v1798 = vmul.f32 %v1734, 0.2
      %v1799 = vmul.f32 %v1735, 0.2
      %v1800 = vmul.f32 %v1736, 0.2
      %v1801 = vmul.f32 %v1737, 0.2
      %v1802 = vmul.f32 %v1738, 0.2
      %v1803 = vmul.f32 %v1739, 0.2
      %v1804 = vmul.f32 %v1740, 0.2
      %v1805 = vmul.f32 %v1741, 0.2
      %v1806 = vmul.f32 %v1742, 0.2
      %v1807 = vmul.f32 %v1743, 0.2
      %v1808 = vmul.f32 %v1744, 0.2
      %v1809 = vmul.f32 %v1745, 0.2
      %v1810 = vmul.f32 %v1746, 0.2
      %v1811 = vmul.f32 %v1747, 0.2
      %v1812 = vmul.f32 %v1748, 0.2
      %v1813 = vmul.f32 %v1749, 0.2
      %v1814 = vmul.f32 %v1750, 0.2
      %v1815 = vmul.f32 %v1751, 0.2
      %v1816 = vmul.f32 %v1752, 0.2
      %v1817 = vmul.f32 %v1753, 0.2
      %v1818 = vmul.f32 %v1754, 0.2
      %v1819 = vmul.f32 %v1755, 0.2
      %v1820 = vmul.f32 %v1756, 0.2
      %v1821 = vmul.f32 %v1757, 0.2
      %v1822 = vmul.f32 %v1758, 0.2
      %v1823 = vmul.f32 %v1759, 0.2
      %v1824 = vmul.f32 %v1760, 0.2
      %v1825 = vmul.f32 %v1761, 0.2
      %v1826 = vmul.f32 %v1762, 0.2
      %v1827 = vmul.f32 %v1763, 0.2
      %v1828 = vmul.f32 %v1764, 0.2
      %v1829 = vmul.f32 %v1765, 0.2
      %v1830 = vsel %vm1766, %v1734, %v1798
      %v1831 = vsel %vm1767, %v1735, %v1799
      %v1832 = vsel %vm1768, %v1736, %v1800
      %v1833 = vsel %vm1769, %v1737, %v1801
      %v1834 = vsel %vm1770, %v1738, %v1802
      %v1835 = vsel %vm1771, %v1739, %v1803
      %v1836 = vsel %vm1772, %v1740, %v1804
      %v1837 = vsel %vm1773, %v1741, %v1805
      %v1838 = vsel %vm1774, %v1742, %v1806
      %v1839 = vsel %vm1775, %v1743, %v1807
      %v1840 = vsel %vm1776, %v1744, %v1808
      %v1841 = vsel %vm1777, %v1745, %v1809
      %v1842 = vsel %vm1778, %v1746, %v1810
      %v1843 = vsel %vm1779, %v1747, %v1811
      %v1844 = vsel %vm1780, %v1748, %v1812
      %v1845 = vsel %vm1781, %v1749, %v1813
      %v1846 = vsel %vm1782, %v1750, %v1814
      %v1847 = vsel %vm1783, %v1751, %v1815
      %v1848 = vsel %vm1784, %v1752, %v1816
      %v1849 = vsel %vm1785, %v1753, %v1817
      %v1850 = vsel %vm1786, %v1754, %v1818
      %v1851 = vsel %vm1787, %v1755, %v1819
      %v1852 = vsel %vm1788, %v1756, %v1820
      %v1853 = vsel %vm1789, %v1757, %v1821
      %v1854 = vsel %vm1790, %v1758, %v1822
      %v1855 = vsel %vm1791, %v1759, %v1823
      %v1856 = vsel %vm1792, %v1760, %v1824
      %v1857 = vsel %vm1793, %v1761, %v1825
      %v1858 = vsel %vm1794, %v1762, %v1826
      %v1859 = vsel %vm1795, %v1763, %v1827
      %v1860 = vsel %vm1796, %v1764, %v1828
      %v1861 = vsel %vm1797, %v1765, %v1829
      %1862 = vst [vmem:[#allocation3] sm:$0xff] %v1830
      %vm1863 = vcmask 523264
      %1864 = vst.msk [vmem:[#allocation3 + $0x8] sm:$0xff] %vm1863, %v1831
      %1865 = vst [vmem:[#allocation3 + $0x10] sm:$0xff] %v1832
      %1866 = vst.msk [vmem:[#allocation3 + $0x18] sm:$0xff] %vm1863, %v1833
      %1867 = vst [vmem:[#allocation3 + $0x20] sm:$0xff] %v1834
      %1868 = vst.msk [vmem:[#allocation3 + $0x28] sm:$0xff] %vm1863, %v1835
      %1869 = vst [vmem:[#allocation3 + $0x30] sm:$0xff] %v1836
      %1870 = vst.msk [vmem:[#allocation3 + $0x38] sm:$0xff] %vm1863, %v1837
      %1871 = vst [vmem:[#allocation3 + $0x40] sm:$0xff] %v1838
      %1872 = vst.msk [vmem:[#allocation3 + $0x48] sm:$0xff] %vm1863, %v1839
      %1873 = vst [vmem:[#allocation3 + $0x50] sm:$0xff] %v1840
      %1874 = vst.msk [vmem:[#allocation3 + $0x58] sm:$0xff] %vm1863, %v1841
      %1875 = vst [vmem:[#allocation3 + $0x60] sm:$0xff] %v1842
      %1876 = vst.msk [vmem:[#allocation3 + $0x68] sm:$0xff] %vm1863, %v1843
      %1877 = vst [vmem:[#allocation3 + $0x70] sm:$0xff] %v1844
      %1878 = vst.msk [vmem:[#allocation3 + $0x78] sm:$0xff] %vm1863, %v1845
      %1879 = vst [vmem:[#allocation3 + $0x80] sm:$0xff] %v1846
      %1880 = vst.msk [vmem:[#allocation3 + $0x88] sm:$0xff] %vm1863, %v1847
      %1881 = vst [vmem:[#allocation3 + $0x90] sm:$0xff] %v1848
      %1882 = vst.msk [vmem:[#allocation3 + $0x98] sm:$0xff] %vm1863, %v1849
      %1883 = vst [vmem:[#allocation3 + $0xa0] sm:$0xff] %v1850
      %1884 = vst.msk [vmem:[#allocation3 + $0xa8] sm:$0xff] %vm1863, %v1851
      %1885 = vst [vmem:[#allocation3 + $0xb0] sm:$0xff] %v1852
      %1886 = vst.msk [vmem:[#allocation3 + $0xb8] sm:$0xff] %vm1863, %v1853
      %1887 = vst [vmem:[#allocation3 + $0xc0] sm:$0xff] %v1854
      %1888 = vst.msk [vmem:[#allocation3 + $0xc8] sm:$0xff] %vm1863, %v1855
      %1889 = vst [vmem:[#allocation3 + $0xd0] sm:$0xff] %v1856
      %1890 = vst.msk [vmem:[#allocation3 + $0xd8] sm:$0xff] %vm1863, %v1857
      %1891 = vst [vmem:[#allocation3 + $0xe0] sm:$0xff] %v1858
      %1892 = vst.msk [vmem:[#allocation3 + $0xe8] sm:$0xff] %vm1863, %v1859
      %1893 = vst [vmem:[#allocation3 + $0xf0] sm:$0xff] %v1860
      %1894 = vst.msk [vmem:[#allocation3 + $0xf8] sm:$0xff] %vm1863, %v1861
      %1895 = vst [vmem:[#allocation3 + $0x100] sm:$0xff] 0.0
      %1896 = vst.msk [vmem:[#allocation3 + $0x108] sm:$0xff] %vm1863, 0.0
      %v1897 = vld [vmem:[#allocation3] sm:$0xff]
      %v1898 = vld [vmem:[#allocation3 + $0x8] sm:$0xff]
      %v1899 = vld [vmem:[#allocation3 + $0x10] sm:$0xff]
      %v1900 = vld [vmem:[#allocation3 + $0x18] sm:$0xff]
      %v1901 = vld [vmem:[#allocation3 + $0x20] sm:$0xff]
      %v1902 = vld [vmem:[#allocation3 + $0x28] sm:$0xff]
      %v1903 = vld [vmem:[#allocation3 + $0x30] sm:$0xff]
      %v1904 = vld [vmem:[#allocation3 + $0x38] sm:$0xff]
      %v1905 = vld [vmem:[#allocation3 + $0x40] sm:$0xff]
      %v1906 = vld [vmem:[#allocation3 + $0x48] sm:$0xff]
      %v1907 = vld [vmem:[#allocation3 + $0x50] sm:$0xff]
      %v1908 = vld [vmem:[#allocation3 + $0x58] sm:$0xff]
      %v1909 = vld [vmem:[#allocation3 + $0x60] sm:$0xff]
      %v1910 = vld [vmem:[#allocation3 + $0x68] sm:$0xff]
      %v1911 = vld [vmem:[#allocation3 + $0x70] sm:$0xff]
      %v1912 = vld [vmem:[#allocation3 + $0x78] sm:$0xff]
      %v1913 = vld [vmem:[#allocation3 + $0x80] sm:$0xff]
      %v1914 = vld [vmem:[#allocation3 + $0x88] sm:$0xff]
      %v1915 = vld [vmem:[#allocation3 + $0x90] sm:$0xff]
      %v1916 = vld [vmem:[#allocation3 + $0x98] sm:$0xff]
      %v1917 = vld [vmem:[#allocation3 + $0xa0] sm:$0xff]
      %v1918 = vld [vmem:[#allocation3 + $0xa8] sm:$0xff]
      %v1919 = vld [vmem:[#allocation3 + $0xb0] sm:$0xff]
      %v1920 = vld [vmem:[#allocation3 + $0xb8] sm:$0xff]
      %v1921 = vld [vmem:[#allocation3 + $0xc0] sm:$0xff]
      %v1922 = vld [vmem:[#allocation3 + $0xc8] sm:$0xff]
      %v1923 = vld [vmem:[#allocation3 + $0xd0] sm:$0xff]
      %v1924 = vld [vmem:[#allocation3 + $0xd8] sm:$0xff]
      %v1925 = vld [vmem:[#allocation3 + $0xe0] sm:$0xff]
      %v1926 = vld [vmem:[#allocation3 + $0xe8] sm:$0xff]
      %v1927 = vld [vmem:[#allocation3 + $0xf0] sm:$0xff]
      %v1928 = vld [vmem:[#allocation3 + $0xf8] sm:$0xff]
      %v1929 = vld [vmem:[%s3] sm:$0xff]
      %v1930 = vld [vmem:[%s3 + $0x8] sm:$0xff]
      %v1931 = vld [vmem:[%s3 + $0x10] sm:$0xff]
      %v1932 = vld [vmem:[%s3 + $0x18] sm:$0xff]
      %v1933 = vld [vmem:[%s3 + $0x20] sm:$0xff]
      %v1934 = vld [vmem:[%s3 + $0x28] sm:$0xff]
      %v1935 = vld [vmem:[%s3 + $0x30] sm:$0xff]
      %v1936 = vld [vmem:[%s3 + $0x38] sm:$0xff]
      %v1937 = vld [vmem:[%s3 + $0x40] sm:$0xff]
      %v1938 = vld [vmem:[%s3 + $0x48] sm:$0xff]
      %v1939 = vld [vmem:[%s3 + $0x50] sm:$0xff]
      %v1940 = vld [vmem:[%s3 + $0x58] sm:$0xff]
      %v1941 = vld [vmem:[%s3 + $0x60] sm:$0xff]
      %v1942 = vld [vmem:[%s3 + $0x68] sm:$0xff]
      %v1943 = vld [vmem:[%s3 + $0x70] sm:$0xff]
      %v1944 = vld [vmem:[%s3 + $0x78] sm:$0xff]
      %v1945 = vld [vmem:[%s3 + $0x80] sm:$0xff]
      %v1946 = vld [vmem:[%s3 + $0x88] sm:$0xff]
      %v1947 = vld [vmem:[%s3 + $0x90] sm:$0xff]
      %v1948 = vld [vmem:[%s3 + $0x98] sm:$0xff]
      %v1949 = vld [vmem:[%s3 + $0xa0] sm:$0xff]
      %v1950 = vld [vmem:[%s3 + $0xa8] sm:$0xff]
      %v1951 = vld [vmem:[%s3 + $0xb0] sm:$0xff]
      %v1952 = vld [vmem:[%s3 + $0xb8] sm:$0xff]
      %v1953 = vld [vmem:[%s3 + $0xc0] sm:$0xff]
      %v1954 = vld [vmem:[%s3 + $0xc8] sm:$0xff]
      %v1955 = vld [vmem:[%s3 + $0xd0] sm:$0xff]
      %v1956 = vld [vmem:[%s3 + $0xd8] sm:$0xff]
      %v1957 = vld [vmem:[%s3 + $0xe0] sm:$0xff]
      %v1958 = vld [vmem:[%s3 + $0xe8] sm:$0xff]
      %v1959 = vld [vmem:[%s3 + $0xf0] sm:$0xff]
      %v1960 = vld [vmem:[%s3 + $0xf8] sm:$0xff]
      %v1961 = vld [vmem:[%s3 + $0x100] sm:$0xff]
      %v1962 = vld [vmem:[%s3 + $0x108] sm:$0xff]
      %v1963 = vld [vmem:[%s3 + $0x110] sm:$0xff]
      %v1964 = vld [vmem:[%s3 + $0x118] sm:$0xff]
      %v1965 = vld [vmem:[%s3 + $0x120] sm:$0xff]
      %v1966 = vld [vmem:[%s3 + $0x128] sm:$0xff]
      %v1967 = vld [vmem:[%s3 + $0x130] sm:$0xff]
      %v1968 = vld [vmem:[%s3 + $0x138] sm:$0xff]
      %v1969 = vld [vmem:[%s3 + $0x140] sm:$0xff]
      %v1970 = vld [vmem:[%s3 + $0x148] sm:$0xff]
      %v1971 = vld [vmem:[%s3 + $0x150] sm:$0xff]
      %v1972 = vld [vmem:[%s3 + $0x158] sm:$0xff]
      %v1973 = vld [vmem:[%s3 + $0x160] sm:$0xff]
      %v1974 = vld [vmem:[%s3 + $0x168] sm:$0xff]
      %v1975 = vld [vmem:[%s3 + $0x170] sm:$0xff]
      %v1976 = vld [vmem:[%s3 + $0x178] sm:$0xff]
      %v1977 = vld [vmem:[#allocation3] sm:$0xfe]
      %v1978 = vld [vmem:[#allocation3 + $0x8] sm:$0xfe]
      %v1979 = vld [vmem:[#allocation3 + $0x100] sm:$0x1]
      %v1980 = vld [vmem:[#allocation3 + $0x108] sm:$0x1]
      %s1981 = scalar_lea.vmem %s3, 384
      %v1982 = vld [vmem:[%s1981] sm:$0xff]
      %v1983 = vld [vmem:[%s1981 + $0x8] sm:$0xff]
      %v1984 = vld [vmem:[%s1981 + $0x10] sm:$0xff]
      %v1985 = vld [vmem:[%s1981 + $0x18] sm:$0xff]
      %v1986 = vld [vmem:[%s1981 + $0x20] sm:$0xff]
      %v1987 = vld [vmem:[%s1981 + $0x28] sm:$0xff]
      %v1988 = vld [vmem:[%s1981 + $0x30] sm:$0xff]
      %v1989 = vld [vmem:[%s1981 + $0x38] sm:$0xff]
      %v1990 = vld [vmem:[%s1981 + $0x40] sm:$0xff]
      %v1991 = vld [vmem:[%s1981 + $0x48] sm:$0xff]
      %v1992 = vld [vmem:[%s1981 + $0x50] sm:$0xff]
      %v1993 = vld [vmem:[%s1981 + $0x58] sm:$0xff]
      %v1994 = vld [vmem:[%s1981 + $0x60] sm:$0xff]
      %v1995 = vld [vmem:[%s1981 + $0x68] sm:$0xff]
      %v1996 = vld [vmem:[%s1981 + $0x70] sm:$0xff]
      %v1997 = vld [vmem:[%s1981 + $0x78] sm:$0xff]
      %v1998 = vld [vmem:[%s1981 + $0x80] sm:$0xff]
      %v1999 = vld [vmem:[%s1981 + $0x88] sm:$0xff]
      %v2000 = vld [vmem:[%s1981 + $0x90] sm:$0xff]
      %v2001 = vld [vmem:[%s1981 + $0x98] sm:$0xff]
      %v2002 = vld [vmem:[%s1981 + $0xa0] sm:$0xff]
      %v2003 = vld [vmem:[%s1981 + $0xa8] sm:$0xff]
      %v2004 = vld [vmem:[%s1981 + $0xb0] sm:$0xff]
      %v2005 = vld [vmem:[%s1981 + $0xb8] sm:$0xff]
      %v2006 = vld [vmem:[%s1981 + $0xc0] sm:$0xff]
      %v2007 = vld [vmem:[%s1981 + $0xc8] sm:$0xff]
      %v2008 = vld [vmem:[%s1981 + $0xd0] sm:$0xff]
      %v2009 = vld [vmem:[%s1981 + $0xd8] sm:$0xff]
      %v2010 = vld [vmem:[%s1981 + $0xe0] sm:$0xff]
      %v2011 = vld [vmem:[%s1981 + $0xe8] sm:$0xff]
      %v2012 = vld [vmem:[%s1981 + $0xf0] sm:$0xff]
      %v2013 = vld [vmem:[%s1981 + $0xf8] sm:$0xff]
      %v2014 = vld [vmem:[%s1981 + $0x100] sm:$0xff]
      %v2015 = vld [vmem:[%s1981 + $0x108] sm:$0xff]
      %v2016 = vld [vmem:[%s1981 + $0x110] sm:$0xff]
      %v2017 = vld [vmem:[%s1981 + $0x118] sm:$0xff]
      %v2018 = vld [vmem:[%s1981 + $0x120] sm:$0xff]
      %v2019 = vld [vmem:[%s1981 + $0x128] sm:$0xff]
      %v2020 = vld [vmem:[%s1981 + $0x130] sm:$0xff]
      %v2021 = vld [vmem:[%s1981 + $0x138] sm:$0xff]
      %v2022 = vld [vmem:[%s1981 + $0x140] sm:$0xff]
      %v2023 = vld [vmem:[%s1981 + $0x148] sm:$0xff]
      %v2024 = vld [vmem:[%s1981 + $0x150] sm:$0xff]
      %v2025 = vld [vmem:[%s1981 + $0x158] sm:$0xff]
      %v2026 = vld [vmem:[%s1981 + $0x160] sm:$0xff]
      %v2027 = vld [vmem:[%s1981 + $0x168] sm:$0xff]
      %v2028 = vld [vmem:[%s1981 + $0x170] sm:$0xff]
      %v2029 = vld [vmem:[%s1981 + $0x178] sm:$0xff]
      %vm2064 = vcmask 1046528
      %v2065 = vrot.slane %v1977, 1
      %v2066 = vrot.slane %v1899, 1
      %v2067 = vsel %vm2064, %v2065, %v2066
      %v2068 = vrot.slane %v1978, 1
      %v2069 = vrot.slane %v1900, 1
      %v2070 = vsel %vm2064, %v2068, %v2069
      %v2071 = vrot.slane %v1901, 1
      %v2072 = vsel %vm2064, %v2066, %v2071
      %v2073 = vrot.slane %v1902, 1
      %v2074 = vsel %vm2064, %v2069, %v2073
      %v2075 = vrot.slane %v1903, 1
      %v2076 = vsel %vm2064, %v2071, %v2075
      %v2077 = vrot.slane %v1904, 1
      %v2078 = vsel %vm2064, %v2073, %v2077
      %v2079 = vrot.slane %v1905, 1
      %v2080 = vsel %vm2064, %v2075, %v2079
      %v2081 = vrot.slane %v1906, 1
      %v2082 = vsel %vm2064, %v2077, %v2081
      %v2083 = vrot.slane %v1907, 1
      %v2084 = vsel %vm2064, %v2079, %v2083
      %v2085 = vrot.slane %v1908, 1
      %v2086 = vsel %vm2064, %v2081, %v2085
      %v2087 = vrot.slane %v1909, 1
      %v2088 = vsel %vm2064, %v2083, %v2087
      %v2089 = vrot.slane %v1910, 1
      %v2090 = vsel %vm2064, %v2085, %v2089
      %v2091 = vrot.slane %v1911, 1
      %v2092 = vsel %vm2064, %v2087, %v2091
      %v2093 = vrot.slane %v1912, 1
      %v2094 = vsel %vm2064, %v2089, %v2093
      %v2095 = vrot.slane %v1913, 1
      %v2096 = vsel %vm2064, %v2091, %v2095
      %v2097 = vrot.slane %v1914, 1
      %v2098 = vsel %vm2064, %v2093, %v2097
      %v2099 = vrot.slane %v1915, 1
      %v2100 = vsel %vm2064, %v2095, %v2099
      %v2101 = vrot.slane %v1916, 1
      %v2102 = vsel %vm2064, %v2097, %v2101
      %v2103 = vrot.slane %v1917, 1
      %v2104 = vsel %vm2064, %v2099, %v2103
      %v2105 = vrot.slane %v1918, 1
      %v2106 = vsel %vm2064, %v2101, %v2105
      %v2107 = vrot.slane %v1919, 1
      %v2108 = vsel %vm2064, %v2103, %v2107
      %v2109 = vrot.slane %v1920, 1
      %v2110 = vsel %vm2064, %v2105, %v2109
      %v2111 = vrot.slane %v1921, 1
      %v2112 = vsel %vm2064, %v2107, %v2111
      %v2113 = vrot.slane %v1922, 1
      %v2114 = vsel %vm2064, %v2109, %v2113
      %v2115 = vrot.slane %v1923, 1
      %v2116 = vsel %vm2064, %v2111, %v2115
      %v2117 = vrot.slane %v1924, 1
      %v2118 = vsel %vm2064, %v2113, %v2117
      %v2119 = vrot.slane %v1925, 1
      %v2120 = vsel %vm2064, %v2115, %v2119
      %v2121 = vrot.slane %v1926, 1
      %v2122 = vsel %vm2064, %v2117, %v2121
      %v2123 = vrot.slane %v1927, 1
      %v2124 = vsel %vm2064, %v2119, %v2123
      %v2125 = vrot.slane %v1928, 1
      %v2126 = vsel %vm2064, %v2121, %v2125
      %v2127 = vrot.slane %v1979, 1
      %v2128 = vsel %vm2064, %v2123, %v2127
      %v2129 = vrot.slane %v1980, 1
      %v2130 = vsel %vm2064, %v2125, %v2129
      %v2147 = vsel %vm1863, %v2070, 0
      %v2149 = vsel %vm1863, %v2074, 0
      %v2151 = vsel %vm1863, %v2078, 0
      %v2153 = vsel %vm1863, %v2082, 0
      %v2155 = vsel %vm1863, %v2086, 0
      %v2157 = vsel %vm1863, %v2090, 0
      %v2159 = vsel %vm1863, %v2094, 0
      %v2161 = vsel %vm1863, %v2098, 0
      %v2163 = vsel %vm1863, %v2102, 0
      %v2165 = vsel %vm1863, %v2106, 0
      %v2167 = vsel %vm1863, %v2110, 0
      %v2169 = vsel %vm1863, %v2114, 0
      %v2171 = vsel %vm1863, %v2118, 0
      %v2173 = vsel %vm1863, %v2122, 0
      %v2175 = vsel %vm1863, %v2126, 0
      %v2177 = vsel %vm1863, %v2130, 0
      %2179 = vmatprep.subr.mxu0 %v1983
      %2180 = vmatpush1.msra.mxu0 %v1982
      %2181 = vmatprep.subr.mxu0 %v1985
      %2182 = vmatpush1.msra.mxu0 %v1984
      %2183 = vmatprep.subr.mxu0 %v1987
      %2184 = vmatpush1.msra.mxu0 %v1986
      %2185 = vmatprep.subr.mxu0 %v1989
      %2186 = vmatpush1.msra.mxu0 %v1988
      %2187 = vmatprep.subr.mxu0 %v1991
      %2188 = vmatpush1.msra.mxu0 %v1990
      %2189 = vmatprep.subr.mxu0 %v1993
      %2190 = vmatpush1.msra.mxu0 %v1992
      %2191 = vmatprep.subr.mxu0 %v1995
      %2192 = vmatpush1.msra.mxu0 %v1994
      %2193 = vmatprep.subr.mxu0 %v1997
      %2194 = vmatpush1.msra.mxu0 %v1996
      %2195 = vmatprep.subr.mxu0 %v1999
      %2196 = vmatpush1.msra.mxu0 %v1998
      %2197 = vmatprep.subr.mxu0 %v2001
      %2198 = vmatpush1.msra.mxu0 %v2000
      %2199 = vmatprep.subr.mxu0 %v2003
      %2200 = vmatpush1.msra.mxu0 %v2002
      %2201 = vmatprep.subr.mxu0 %v2005
      %2202 = vmatpush1.msra.mxu0 %v2004
      %2203 = vmatprep.subr.mxu0 %v2007
      %2204 = vmatpush1.msra.mxu0 %v2006
      %2205 = vmatprep.subr.mxu0 %v2009
      %2206 = vmatpush1.msra.mxu0 %v2008
      %2207 = vmatprep.subr.mxu0 %v2011
      %2208 = vmatpush1.msra.mxu0 %v2010
      %2209 = vmatprep.subr.mxu0 %v2013
      %2210 = vmatpush1.msra.mxu0 %v2012
      %2211 = vmatprep.subr.mxu0 %v2015
      %2212 = vmatpush1.msra.mxu0 %v2014
      %2213 = vmatprep.subr.mxu0 %v2017
      %2214 = vmatpush1.msra.mxu0 %v2016
      %2215 = vmatprep.subr.mxu0 %v2019
      %2216 = vmatpush1.msra.mxu0 %v2018
      %2217 = vmatprep.subr.mxu0 %v2021
      %2218 = vmatpush1.msra.mxu0 %v2020
      %2219 = vmatprep.subr.mxu0 %v2023
      %2220 = vmatpush1.msra.mxu0 %v2022
      %2221 = vmatprep.subr.mxu0 %v2025
      %2222 = vmatpush1.msra.mxu0 %v2024
      %2223 = vmatprep.subr.mxu0 %v2027
      %2224 = vmatpush1.msra.mxu0 %v2026
      %2225 = vmatprep.subr.mxu0 %v2029
      %2226 = vmatpush1.msra.mxu0 %v2028
      %2227 = vmatprep.subr.mxu0 0.0
      %2228 = vmatpush1.msra.mxu0 0.0
      %2229 = vmatprep.subr.mxu0 0.0
      %2230 = vmatpush1.msra.mxu0 0.0
      %2231 = vmatprep.subr.mxu0 0.0
      %2232 = vmatpush1.msra.mxu0 0.0
      %2233 = vmatprep.subr.mxu0 0.0
      %2234 = vmatpush1.msra.mxu0 0.0
      %2235 = vmatprep.subr.mxu0 0.0
      %2236 = vmatpush1.msra.mxu0 0.0
      %2237 = vmatprep.subr.mxu0 0.0
      %2238 = vmatpush1.msra.mxu0 0.0
      %2239 = vmatprep.subr.mxu0 0.0
      %2240 = vmatpush1.msra.mxu0 0.0
      %2241 = vmatprep.subr.mxu0 0.0
      %2242 = vmatpush1.msra.mxu0 0.0
      %2243 = vmatprep.mubr.f32.mxu0 %v2147
      %2244 = vmatmul.mubr.f32.gmra.mrb[0].mxu0 %v2067
      %v2245 = vpop.f32.mrb[0].mxu0
      %v2246 = vadd.f32 0.0, %v2245
      %v2247 = vpop.f32.mrb[0].mxu0
      %v2248 = vadd.f32 0.0, %v2247
      %2249 = vmatprep.mubr.f32.mxu0 %v2149
      %2250 = vmatmul.mubr.f32.gmra.mrb[0].mxu0 %v2072
      %v2251 = vpop.f32.mrb[0].mxu0
      %v2252 = vadd.f32 0.0, %v2251
      %v2253 = vpop.f32.mrb[0].mxu0
      %v2254 = vadd.f32 0.0, %v2253
      %2255 = vmatprep.mubr.f32.mxu0 %v2151
      %2256 = vmatmul.mubr.f32.gmra.mrb[0].mxu0 %v2076
      %v2257 = vpop.f32.mrb[0].mxu0
      %v2258 = vadd.f32 0.0, %v2257
      %v2259 = vpop.f32.mrb[0].mxu0
      %v2260 = vadd.f32 0.0, %v2259
      %2261 = vmatprep.mubr.f32.mxu0 %v2153
      %2262 = vmatmul.mubr.f32.gmra.mrb[0].mxu0 %v2080
      %v2263 = vpop.f32.mrb[0].mxu0
      %v2264 = vadd.f32 0.0, %v2263
      %v2265 = vpop.f32.mrb[0].mxu0
      %v2266 = vadd.f32 0.0, %v2265
      %2267 = vmatprep.mubr.f32.mxu0 %v2155
      %2268 = vmatmul.mubr.f32.gmra.mrb[0].mxu0 %v2084
      %v2269 = vpop.f32.mrb[0].mxu0
      %v2270 = vadd.f32 0.0, %v2269
      %v2271 = vpop.f32.mrb[0].mxu0
      %v2272 = vadd.f32 0.0, %v2271
      %2273 = vmatprep.mubr.f32.mxu0 %v2157
      %2274 = vmatmul.mubr.f32.gmra.mrb[0].mxu0 %v2088
      %v2275 = vpop.f32.mrb[0].mxu0
      %v2276 = vadd.f32 0.0, %v2275
      %v2277 = vpop.f32.mrb[0].mxu0
      %v2278 = vadd.f32 0.0, %v2277
      %2279 = vmatprep.mubr.f32.mxu0 %v2159
      %2280 = vmatmul.mubr.f32.gmra.mrb[0].mxu0 %v2092
      %v2281 = vpop.f32.mrb[0].mxu0
      %v2282 = vadd.f32 0.0, %v2281
      %v2283 = vpop.f32.mrb[0].mxu0
      %v2284 = vadd.f32 0.0, %v2283
      %2285 = vmatprep.mubr.f32.mxu0 %v2161
      %2286 = vmatmul.mubr.f32.gmra.mrb[0].mxu0 %v2096
      %v2287 = vpop.f32.mrb[0].mxu0
      %v2288 = vadd.f32 0.0, %v2287
      %v2289 = vpop.f32.mrb[0].mxu0
      %v2290 = vadd.f32 0.0, %v2289
      %2291 = vmatprep.mubr.f32.mxu0 %v2163
      %2292 = vmatmul.mubr.f32.gmra.mrb[0].mxu0 %v2100
      %v2293 = vpop.f32.mrb[0].mxu0
      %v2294 = vadd.f32 0.0, %v2293
      %v2295 = vpop.f32.mrb[0].mxu0
      %v2296 = vadd.f32 0.0, %v2295
      %2297 = vmatprep.mubr.f32.mxu0 %v2165
      %2298 = vmatmul.mubr.f32.gmra.mrb[0].mxu0 %v2104
      %v2299 = vpop.f32.mrb[0].mxu0
      %v2300 = vadd.f32 0.0, %v2299
      %v2301 = vpop.f32.mrb[0].mxu0
      %v2302 = vadd.f32 0.0, %v2301
      %2303 = vmatprep.mubr.f32.mxu0 %v2167
      %2304 = vmatmul.mubr.f32.gmra.mrb[0].mxu0 %v2108
      %v2305 = vpop.f32.mrb[0].mxu0
      %v2306 = vadd.f32 0.0, %v2305
      %v2307 = vpop.f32.mrb[0].mxu0
      %v2308 = vadd.f32 0.0, %v2307
      %2309 = vmatprep.mubr.f32.mxu0 %v2169
      %2310 = vmatmul.mubr.f32.gmra.mrb[0].mxu0 %v2112
      %v2311 = vpop.f32.mrb[0].mxu0
      %v2312 = vadd.f32 0.0, %v2311
      %v2313 = vpop.f32.mrb[0].mxu0
      %v2314 = vadd.f32 0.0, %v2313
      %2315 = vmatprep.mubr.f32.mxu0 %v2171
      %2316 = vmatmul.mubr.f32.gmra.mrb[0].mxu0 %v2116
      %v2317 = vpop.f32.mrb[0].mxu0
      %v2318 = vadd.f32 0.0, %v2317
      %v2319 = vpop.f32.mrb[0].mxu0
      %v2320 = vadd.f32 0.0, %v2319
      %2321 = vmatprep.mubr.f32.mxu0 %v2173
      %2322 = vmatmul.mubr.f32.gmra.mrb[0].mxu0 %v2120
      %v2323 = vpop.f32.mrb[0].mxu0
      %v2324 = vadd.f32 0.0, %v2323
      %v2325 = vpop.f32.mrb[0].mxu0
      %v2326 = vadd.f32 0.0, %v2325
      %2327 = vmatprep.mubr.f32.mxu0 %v2175
      %2328 = vmatmul.mubr.f32.gmra.mrb[0].mxu0 %v2124
      %v2329 = vpop.f32.mrb[0].mxu0
      %v2330 = vadd.f32 0.0, %v2329
      %v2331 = vpop.f32.mrb[0].mxu0
      %v2332 = vadd.f32 0.0, %v2331
      %2333 = vmatprep.mubr.f32.mxu0 %v2177
      %2334 = vmatmul.mubr.f32.gmra.mrb[0].mxu0 %v2128
      %v2335 = vpop.f32.mrb[0].mxu0
      %v2336 = vadd.f32 0.0, %v2335
      %v2337 = vpop.f32.mrb[0].mxu0
      %v2338 = vadd.f32 0.0, %v2337
      %2339 = vdwg.mxu0
      %v2341 = vsel %vm1863, %v1898, 0
      %v2343 = vsel %vm1863, %v1900, 0
      %v2345 = vsel %vm1863, %v1902, 0
      %v2347 = vsel %vm1863, %v1904, 0
      %v2349 = vsel %vm1863, %v1906, 0
      %v2351 = vsel %vm1863, %v1908, 0
      %v2353 = vsel %vm1863, %v1910, 0
      %v2355 = vsel %vm1863, %v1912, 0
      %v2357 = vsel %vm1863, %v1914, 0
      %v2359 = vsel %vm1863, %v1916, 0
      %v2361 = vsel %vm1863, %v1918, 0
      %v2363 = vsel %vm1863, %v1920, 0
      %v2365 = vsel %vm1863, %v1922, 0
      %v2367 = vsel %vm1863, %v1924, 0
      %v2369 = vsel %vm1863, %v1926, 0
      %v2371 = vsel %vm1863, %v1928, 0
      %2373 = vmatprep.subr.mxu0 %v1930
      %2374 = vmatpush1.msra.mxu0 %v1929
      %2375 = vmatprep.subr.mxu0 %v1932
      %2376 = vmatpush1.msra.mxu0 %v1931
      %2377 = vmatprep.subr.mxu0 %v1934
      %2378 = vmatpush1.msra.mxu0 %v1933
      %2379 = vmatprep.subr.mxu0 %v1936
      %2380 = vmatpush1.msra.mxu0 %v1935
      %2381 = vmatprep.subr.mxu0 %v1938
      %2382 = vmatpush1.msra.mxu0 %v1937
      %2383 = vmatprep.subr.mxu0 %v1940
      %2384 = vmatpush1.msra.mxu0 %v1939
      %2385 = vmatprep.subr.mxu0 %v1942
      %2386 = vmatpush1.msra.mxu0 %v1941
      %2387 = vmatprep.subr.mxu0 %v1944
      %2388 = vmatpush1.msra.mxu0 %v1943
      %2389 = vmatprep.subr.mxu0 %v1946
      %2390 = vmatpush1.msra.mxu0 %v1945
      %2391 = vmatprep.subr.mxu0 %v1948
      %2392 = vmatpush1.msra.mxu0 %v1947
      %2393 = vmatprep.subr.mxu0 %v1950
      %2394 = vmatpush1.msra.mxu0 %v1949
      %2395 = vmatprep.subr.mxu0 %v1952
      %2396 = vmatpush1.msra.mxu0 %v1951
      %2397 = vmatprep.subr.mxu0 %v1954
      %2398 = vmatpush1.msra.mxu0 %v1953
      %2399 = vmatprep.subr.mxu0 %v1956
      %2400 = vmatpush1.msra.mxu0 %v1955
      %2401 = vmatprep.subr.mxu0 %v1958
      %2402 = vmatpush1.msra.mxu0 %v1957
      %2403 = vmatprep.subr.mxu0 %v1960
      %2404 = vmatpush1.msra.mxu0 %v1959
      %2405 = vmatprep.subr.mxu0 %v1962
      %2406 = vmatpush1.msra.mxu0 %v1961
      %2407 = vmatprep.subr.mxu0 %v1964
      %2408 = vmatpush1.msra.mxu0 %v1963
      %2409 = vmatprep.subr.mxu0 %v1966
      %2410 = vmatpush1.msra.mxu0 %v1965
      %2411 = vmatprep.subr.mxu0 %v1968
      %2412 = vmatpush1.msra.mxu0 %v1967
      %2413 = vmatprep.subr.mxu0 %v1970
      %2414 = vmatpush1.msra.mxu0 %v1969
      %2415 = vmatprep.subr.mxu0 %v1972
      %2416 = vmatpush1.msra.mxu0 %v1971
      %2417 = vmatprep.subr.mxu0 %v1974
      %2418 = vmatpush1.msra.mxu0 %v1973
      %2419 = vmatprep.subr.mxu0 %v1976
      %2420 = vmatpush1.msra.mxu0 %v1975
      %2421 = vmatprep.subr.mxu0 0.0
      %2422 = vmatpush1.msra.mxu0 0.0
      %2423 = vmatprep.subr.mxu0 0.0
      %2424 = vmatpush1.msra.mxu0 0.0
      %2425 = vmatprep.subr.mxu0 0.0
      %2426 = vmatpush1.msra.mxu0 0.0
      %2427 = vmatprep.subr.mxu0 0.0
      %2428 = vmatpush1.msra.mxu0 0.0
      %2429 = vmatprep.subr.mxu0 0.0
      %2430 = vmatpush1.msra.mxu0 0.0
      %2431 = vmatprep.subr.mxu0 0.0
      %2432 = vmatpush1.msra.mxu0 0.0
      %2433 = vmatprep.subr.mxu0 0.0
      %2434 = vmatpush1.msra.mxu0 0.0
      %2435 = vmatprep.subr.mxu0 0.0
      %2436 = vmatpush1.msra.mxu0 0.0
      %2437 = vmatprep.mubr.f32.mxu0 %v2341
      %2438 = vmatmul.mubr.f32.gmra.mrb[0].mxu0 %v1897
      %v2439 = vpop.f32.mrb[0].mxu0
      %v2440 = vadd.f32 %v2246, %v2439
      %v2441 = vpop.f32.mrb[0].mxu0
      %v2442 = vadd.f32 %v2248, %v2441
      %2443 = vmatprep.mubr.f32.mxu0 %v2343
      %2444 = vmatmul.mubr.f32.gmra.mrb[0].mxu0 %v1899
      %v2445 = vpop.f32.mrb[0].mxu0
      %v2446 = vadd.f32 %v2252, %v2445
      %v2447 = vpop.f32.mrb[0].mxu0
      %v2448 = vadd.f32 %v2254, %v2447
      %2449 = vmatprep.mubr.f32.mxu0 %v2345
      %2450 = vmatmul.mubr.f32.gmra.mrb[0].mxu0 %v1901
      %v2451 = vpop.f32.mrb[0].mxu0
      %v2452 = vadd.f32 %v2258, %v2451
      %v2453 = vpop.f32.mrb[0].mxu0
      %v2454 = vadd.f32 %v2260, %v2453
      %2455 = vmatprep.mubr.f32.mxu0 %v2347
      %2456 = vmatmul.mubr.f32.gmra.mrb[0].mxu0 %v1903
      %v2457 = vpop.f32.mrb[0].mxu0
      %v2458 = vadd.f32 %v2264, %v2457
      %v2459 = vpop.f32.mrb[0].mxu0
      %v2460 = vadd.f32 %v2266, %v2459
      %2461 = vmatprep.mubr.f32.mxu0 %v2349
      %2462 = vmatmul.mubr.f32.gmra.mrb[0].mxu0 %v1905
      %v2463 = vpop.f32.mrb[0].mxu0
      %v2464 = vadd.f32 %v2270, %v2463
      %v2465 = vpop.f32.mrb[0].mxu0
      %v2466 = vadd.f32 %v2272, %v2465
      %2467 = vmatprep.mubr.f32.mxu0 %v2351
      %2468 = vmatmul.mubr.f32.gmra.mrb[0].mxu0 %v1907
      %v2469 = vpop.f32.mrb[0].mxu0
      %v2470 = vadd.f32 %v2276, %v2469
      %v2471 = vpop.f32.mrb[0].mxu0
      %v2472 = vadd.f32 %v2278, %v2471
      %2473 = vmatprep.mubr.f32.mxu0 %v2353
      %2474 = vmatmul.mubr.f32.gmra.mrb[0].mxu0 %v1909
      %v2475 = vpop.f32.mrb[0].mxu0
      %v2476 = vadd.f32 %v2282, %v2475
      %v2477 = vpop.f32.mrb[0].mxu0
      %v2478 = vadd.f32 %v2284, %v2477
      %2479 = vmatprep.mubr.f32.mxu0 %v2355
      %2480 = vmatmul.mubr.f32.gmra.mrb[0].mxu0 %v1911
      %v2481 = vpop.f32.mrb[0].mxu0
      %v2482 = vadd.f32 %v2288, %v2481
      %v2483 = vpop.f32.mrb[0].mxu0
      %v2484 = vadd.f32 %v2290, %v2483
      %2485 = vmatprep.mubr.f32.mxu0 %v2357
      %2486 = vmatmul.mubr.f32.gmra.mrb[0].mxu0 %v1913
      %v2487 = vpop.f32.mrb[0].mxu0
      %v2488 = vadd.f32 %v2294, %v2487
      %v2489 = vpop.f32.mrb[0].mxu0
      %v2490 = vadd.f32 %v2296, %v2489
      %2491 = vmatprep.mubr.f32.mxu0 %v2359
      %2492 = vmatmul.mubr.f32.gmra.mrb[0].mxu0 %v1915
      %v2493 = vpop.f32.mrb[0].mxu0
      %v2494 = vadd.f32 %v2300, %v2493
      %v2495 = vpop.f32.mrb[0].mxu0
      %v2496 = vadd.f32 %v2302, %v2495
      %2497 = vmatprep.mubr.f32.mxu0 %v2361
      %2498 = vmatmul.mubr.f32.gmra.mrb[0].mxu0 %v1917
      %v2499 = vpop.f32.mrb[0].mxu0
      %v2500 = vadd.f32 %v2306, %v2499
      %v2501 = vpop.f32.mrb[0].mxu0
      %v2502 = vadd.f32 %v2308, %v2501
      %2503 = vmatprep.mubr.f32.mxu0 %v2363
      %2504 = vmatmul.mubr.f32.gmra.mrb[0].mxu0 %v1919
      %v2505 = vpop.f32.mrb[0].mxu0
      %v2506 = vadd.f32 %v2312, %v2505
      %v2507 = vpop.f32.mrb[0].mxu0
      %v2508 = vadd.f32 %v2314, %v2507
      %2509 = vmatprep.mubr.f32.mxu0 %v2365
      %2510 = vmatmul.mubr.f32.gmra.mrb[0].mxu0 %v1921
      %v2511 = vpop.f32.mrb[0].mxu0
      %v2512 = vadd.f32 %v2318, %v2511
      %v2513 = vpop.f32.mrb[0].mxu0
      %v2514 = vadd.f32 %v2320, %v2513
      %2515 = vmatprep.mubr.f32.mxu0 %v2367
      %2516 = vmatmul.mubr.f32.gmra.mrb[0].mxu0 %v1923
      %v2517 = vpop.f32.mrb[0].mxu0
      %v2518 = vadd.f32 %v2324, %v2517
      %v2519 = vpop.f32.mrb[0].mxu0
      %v2520 = vadd.f32 %v2326, %v2519
      %2521 = vmatprep.mubr.f32.mxu0 %v2369
      %2522 = vmatmul.mubr.f32.gmra.mrb[0].mxu0 %v1925
      %v2523 = vpop.f32.mrb[0].mxu0
      %v2524 = vadd.f32 %v2330, %v2523
      %v2525 = vpop.f32.mrb[0].mxu0
      %v2526 = vadd.f32 %v2332, %v2525
      %2527 = vmatprep.mubr.f32.mxu0 %v2371
      %2528 = vmatmul.mubr.f32.gmra.mrb[0].mxu0 %v1927
      %v2529 = vpop.f32.mrb[0].mxu0
      %v2530 = vadd.f32 %v2336, %v2529
      %v2531 = vpop.f32.mrb[0].mxu0
      %v2532 = vadd.f32 %v2338, %v2531
      %2533 = vdwg.mxu0
      %v2534 = vld [vmem:[#allocation3] sm:$0xfc]
      %v2535 = vld [vmem:[#allocation3 + $0x8] sm:$0xfc]
      %v2536 = vld [vmem:[#allocation3 + $0x100] sm:$0x3]
      %v2537 = vld [vmem:[#allocation3 + $0x108] sm:$0x3]
      %s2538 = scalar_lea.vmem %s3, 768
      %v2539 = vld [vmem:[%s2538] sm:$0xff]
      %v2540 = vld [vmem:[%s2538 + $0x8] sm:$0xff]
      %v2541 = vld [vmem:[%s2538 + $0x10] sm:$0xff]
      %v2542 = vld [vmem:[%s2538 + $0x18] sm:$0xff]
      %v2543 = vld [vmem:[%s2538 + $0x20] sm:$0xff]
      %v2544 = vld [vmem:[%s2538 + $0x28] sm:$0xff]
      %v2545 = vld [vmem:[%s2538 + $0x30] sm:$0xff]
      %v2546 = vld [vmem:[%s2538 + $0x38] sm:$0xff]
      %v2547 = vld [vmem:[%s2538 + $0x40] sm:$0xff]
      %v2548 = vld [vmem:[%s2538 + $0x48] sm:$0xff]
      %v2549 = vld [vmem:[%s2538 + $0x50] sm:$0xff]
      %v2550 = vld [vmem:[%s2538 + $0x58] sm:$0xff]
      %v2551 = vld [vmem:[%s2538 + $0x60] sm:$0xff]
      %v2552 = vld [vmem:[%s2538 + $0x68] sm:$0xff]
      %v2553 = vld [vmem:[%s2538 + $0x70] sm:$0xff]
      %v2554 = vld [vmem:[%s2538 + $0x78] sm:$0xff]
      %v2555 = vld [vmem:[%s2538 + $0x80] sm:$0xff]
      %v2556 = vld [vmem:[%s2538 + $0x88] sm:$0xff]
      %v2557 = vld [vmem:[%s2538 + $0x90] sm:$0xff]
      %v2558 = vld [vmem:[%s2538 + $0x98] sm:$0xff]
      %v2559 = vld [vmem:[%s2538 + $0xa0] sm:$0xff]
      %v2560 = vld [vmem:[%s2538 + $0xa8] sm:$0xff]
      %v2561 = vld [vmem:[%s2538 + $0xb0] sm:$0xff]
      %v2562 = vld [vmem:[%s2538 + $0xb8] sm:$0xff]
      %v2563 = vld [vmem:[%s2538 + $0xc0] sm:$0xff]
      %v2564 = vld [vmem:[%s2538 + $0xc8] sm:$0xff]
      %v2565 = vld [vmem:[%s2538 + $0xd0] sm:$0xff]
      %v2566 = vld [vmem:[%s2538 + $0xd8] sm:$0xff]
      %v2567 = vld [vmem:[%s2538 + $0xe0] sm:$0xff]
      %v2568 = vld [vmem:[%s2538 + $0xe8] sm:$0xff]
      %v2569 = vld [vmem:[%s2538 + $0xf0] sm:$0xff]
      %v2570 = vld [vmem:[%s2538 + $0xf8] sm:$0xff]
      %v2571 = vld [vmem:[%s2538 + $0x100] sm:$0xff]
      %v2572 = vld [vmem:[%s2538 + $0x108] sm:$0xff]
      %v2573 = vld [vmem:[%s2538 + $0x110] sm:$0xff]
      %v2574 = vld [vmem:[%s2538 + $0x118] sm:$0xff]
      %v2575 = vld [vmem:[%s2538 + $0x120] sm:$0xff]
      %v2576 = vld [vmem:[%s2538 + $0x128] sm:$0xff]
      %v2577 = vld [vmem:[%s2538 + $0x130] sm:$0xff]
      %v2578 = vld [vmem:[%s2538 + $0x138] sm:$0xff]
      %v2579 = vld [vmem:[%s2538 + $0x140] sm:$0xff]
      %v2580 = vld [vmem:[%s2538 + $0x148] sm:$0xff]
      %v2581 = vld [vmem:[%s2538 + $0x150] sm:$0xff]
      %v2582 = vld [vmem:[%s2538 + $0x158] sm:$0xff]
      %v2583 = vld [vmem:[%s2538 + $0x160] sm:$0xff]
      %v2584 = vld [vmem:[%s2538 + $0x168] sm:$0xff]
      %v2585 = vld [vmem:[%s2538 + $0x170] sm:$0xff]
      %v2586 = vld [vmem:[%s2538 + $0x178] sm:$0xff]
      %vm2591 = vcmask 1045504
      %v2592 = vrot.slane %v2534, 2
      %v2593 = vrot.slane %v1899, 2
      %v2594 = vsel %vm2591, %v2592, %v2593
      %v2595 = vrot.slane %v2535, 2
      %v2596 = vrot.slane %v1900, 2
      %v2597 = vsel %vm2591, %v2595, %v2596
      %v2598 = vrot.slane %v1901, 2
      %v2599 = vsel %vm2591, %v2593, %v2598
      %v2600 = vrot.slane %v1902, 2
      %v2601 = vsel %vm2591, %v2596, %v2600
      %v2602 = vrot.slane %v1903, 2
      %v2603 = vsel %vm2591, %v2598, %v2602
      %v2604 = vrot.slane %v1904, 2
      %v2605 = vsel %vm2591, %v2600, %v2604
      %v2606 = vrot.slane %v1905, 2
      %v2607 = vsel %vm2591, %v2602, %v2606
      %v2608 = vrot.slane %v1906, 2
      %v2609 = vsel %vm2591, %v2604, %v2608
      %v2610 = vrot.slane %v1907, 2
      %v2611 = vsel %vm2591, %v2606, %v2610
      %v2612 = vrot.slane %v1908, 2
      %v2613 = vsel %vm2591, %v2608, %v2612
      %v2614 = vrot.slane %v1909, 2
      %v2615 = vsel %vm2591, %v2610, %v2614
      %v2616 = vrot.slane %v1910, 2
      %v2617 = vsel %vm2591, %v2612, %v2616
      %v2618 = vrot.slane %v1911, 2
      %v2619 = vsel %vm2591, %v2614, %v2618
      %v2620 = vrot.slane %v1912, 2
      %v2621 = vsel %vm2591, %v2616, %v2620
      %v2622 = vrot.slane %v1913, 2
      %v2623 = vsel %vm2591, %v2618, %v2622
      %v2624 = vrot.slane %v1914, 2
      %v2625 = vsel %vm2591, %v2620, %v2624
      %v2626 = vrot.slane %v1915, 2
      %v2627 = vsel %vm2591, %v2622, %v2626
      %v2628 = vrot.slane %v1916, 2
      %v2629 = vsel %vm2591, %v2624, %v2628
      %v2630 = vrot.slane %v1917, 2
      %v2631 = vsel %vm2591, %v2626, %v2630
      %v2632 = vrot.slane %v1918, 2
      %v2633 = vsel %vm2591, %v2628, %v2632
      %v2634 = vrot.slane %v1919, 2
      %v2635 = vsel %vm2591, %v2630, %v2634
      %v2636 = vrot.slane %v1920, 2
      %v2637 = vsel %vm2591, %v2632, %v2636
      %v2638 = vrot.slane %v1921, 2
      %v2639 = vsel %vm2591, %v2634, %v2638
      %v2640 = vrot.slane %v1922, 2
      %v2641 = vsel %vm2591, %v2636, %v2640
      %v2642 = vrot.slane %v1923, 2
      %v2643 = vsel %vm2591, %v2638, %v2642
      %v2644 = vrot.slane %v1924, 2
      %v2645 = vsel %vm2591, %v2640, %v2644
      %v2646 = vrot.slane %v1925, 2
      %v2647 = vsel %vm2591, %v2642, %v2646
      %v2648 = vrot.slane %v1926, 2
      %v2649 = vsel %vm2591, %v2644, %v2648
      %v2650 = vrot.slane %v1927, 2
      %v2651 = vsel %vm2591, %v2646, %v2650
      %v2652 = vrot.slane %v1928, 2
      %v2653 = vsel %vm2591, %v2648, %v2652
      %v2654 = vrot.slane %v2536, 2
      %v2655 = vsel %vm2591, %v2650, %v2654
      %v2656 = vrot.slane %v2537, 2
      %v2657 = vsel %vm2591, %v2652, %v2656
      %v2674 = vsel %vm1863, %v2597, 0
      %v2676 = vsel %vm1863, %v2601, 0
      %v2678 = vsel %vm1863, %v2605, 0
      %v2680 = vsel %vm1863, %v2609, 0
      %v2682 = vsel %vm1863, %v2613, 0
      %v2684 = vsel %vm1863, %v2617, 0
      %v2686 = vsel %vm1863, %v2621, 0
      %v2688 = vsel %vm1863, %v2625, 0
      %v2690 = vsel %vm1863, %v2629, 0
      %v2692 = vsel %vm1863, %v2633, 0
      %v2694 = vsel %vm1863, %v2637, 0
      %v2696 = vsel %vm1863, %v2641, 0
      %v2698 = vsel %vm1863, %v2645, 0
      %v2700 = vsel %vm1863, %v2649, 0
      %v2702 = vsel %vm1863, %v2653, 0
      %v2704 = vsel %vm1863, %v2657, 0
      %2706 = vmatprep.subr.mxu0 %v2540
      %2707 = vmatpush1.msra.mxu0 %v2539
      %2708 = vmatprep.subr.mxu0 %v2542
      %2709 = vmatpush1.msra.mxu0 %v2541
      %2710 = vmatprep.subr.mxu0 %v2544
      %2711 = vmatpush1.msra.mxu0 %v2543
      %2712 = vmatprep.subr.mxu0 %v2546
      %2713 = vmatpush1.msra.mxu0 %v2545
      %2714 = vmatprep.subr.mxu0 %v2548
      %2715 = vmatpush1.msra.mxu0 %v2547
      %2716 = vmatprep.subr.mxu0 %v2550
      %2717 = vmatpush1.msra.mxu0 %v2549
      %2718 = vmatprep.subr.mxu0 %v2552
      %2719 = vmatpush1.msra.mxu0 %v2551
      %2720 = vmatprep.subr.mxu0 %v2554
      %2721 = vmatpush1.msra.mxu0 %v2553
      %2722 = vmatprep.subr.mxu0 %v2556
      %2723 = vmatpush1.msra.mxu0 %v2555
      %2724 = vmatprep.subr.mxu0 %v2558
      %2725 = vmatpush1.msra.mxu0 %v2557
      %2726 = vmatprep.subr.mxu0 %v2560
      %2727 = vmatpush1.msra.mxu0 %v2559
      %2728 = vmatprep.subr.mxu0 %v2562
      %2729 = vmatpush1.msra.mxu0 %v2561
      %2730 = vmatprep.subr.mxu0 %v2564
      %2731 = vmatpush1.msra.mxu0 %v2563
      %2732 = vmatprep.subr.mxu0 %v2566
      %2733 = vmatpush1.msra.mxu0 %v2565
      %2734 = vmatprep.subr.mxu0 %v2568
      %2735 = vmatpush1.msra.mxu0 %v2567
      %2736 = vmatprep.subr.mxu0 %v2570
      %2737 = vmatpush1.msra.mxu0 %v2569
      %2738 = vmatprep.subr.mxu0 %v2572
      %2739 = vmatpush1.msra.mxu0 %v2571
      %2740 = vmatprep.subr.mxu0 %v2574
      %2741 = vmatpush1.msra.mxu0 %v2573
      %2742 = vmatprep.subr.mxu0 %v2576
      %2743 = vmatpush1.msra.mxu0 %v2575
      %2744 = vmatprep.subr.mxu0 %v2578
      %2745 = vmatpush1.msra.mxu0 %v2577
      %2746 = vmatprep.subr.mxu0 %v2580
      %2747 = vmatpush1.msra.mxu0 %v2579
      %2748 = vmatprep.subr.mxu0 %v2582
      %2749 = vmatpush1.msra.mxu0 %v2581
      %2750 = vmatprep.subr.mxu0 %v2584
      %2751 = vmatpush1.msra.mxu0 %v2583
      %2752 = vmatprep.subr.mxu0 %v2586
      %2753 = vmatpush1.msra.mxu0 %v2585
      %2754 = vmatprep.subr.mxu0 0.0
      %2755 = vmatpush1.msra.mxu0 0.0
      %2756 = vmatprep.subr.mxu0 0.0
      %2757 = vmatpush1.msra.mxu0 0.0
      %2758 = vmatprep.subr.mxu0 0.0
      %2759 = vmatpush1.msra.mxu0 0.0
      %2760 = vmatprep.subr.mxu0 0.0
      %2761 = vmatpush1.msra.mxu0 0.0
      %2762 = vmatprep.subr.mxu0 0.0
      %2763 = vmatpush1.msra.mxu0 0.0
      %2764 = vmatprep.subr.mxu0 0.0
      %2765 = vmatpush1.msra.mxu0 0.0
      %2766 = vmatprep.subr.mxu0 0.0
      %2767 = vmatpush1.msra.mxu0 0.0
      %2768 = vmatprep.subr.mxu0 0.0
      %2769 = vmatpush1.msra.mxu0 0.0
      %2770 = vmatprep.mubr.f32.mxu0 %v2674
      %2771 = vmatmul.mubr.f32.gmra.mrb[0].mxu0 %v2594
      %v2772 = vpop.f32.mrb[0].mxu0
      %v2773 = vadd.f32 0.0, %v2772
      %v2774 = vpop.f32.mrb[0].mxu0
      %v2775 = vadd.f32 0.0, %v2774
      %2776 = vmatprep.mubr.f32.mxu0 %v2676
      %2777 = vmatmul.mubr.f32.gmra.mrb[0].mxu0 %v2599
      %v2778 = vpop.f32.mrb[0].mxu0
      %v2779 = vadd.f32 0.0, %v2778
      %v2780 = vpop.f32.mrb[0].mxu0
      %v2781 = vadd.f32 0.0, %v2780
      %2782 = vmatprep.mubr.f32.mxu0 %v2678
      %2783 = vmatmul.mubr.f32.gmra.mrb[0].mxu0 %v2603
      %v2784 = vpop.f32.mrb[0].mxu0
      %v2785 = vadd.f32 0.0, %v2784
      %v2786 = vpop.f32.mrb[0].mxu0
      %v2787 = vadd.f32 0.0, %v2786
      %2788 = vmatprep.mubr.f32.mxu0 %v2680
      %2789 = vmatmul.mubr.f32.gmra.mrb[0].mxu0 %v2607
      %v2790 = vpop.f32.mrb[0].mxu0
      %v2791 = vadd.f32 0.0, %v2790
      %v2792 = vpop.f32.mrb[0].mxu0
      %v2793 = vadd.f32 0.0, %v2792
      %2794 = vmatprep.mubr.f32.mxu0 %v2682
      %2795 = vmatmul.mubr.f32.gmra.mrb[0].mxu0 %v2611
      %v2796 = vpop.f32.mrb[0].mxu0
      %v2797 = vadd.f32 0.0, %v2796
      %v2798 = vpop.f32.mrb[0].mxu0
      %v2799 = vadd.f32 0.0, %v2798
      %2800 = vmatprep.mubr.f32.mxu0 %v2684
      %2801 = vmatmul.mubr.f32.gmra.mrb[0].mxu0 %v2615
      %v2802 = vpop.f32.mrb[0].mxu0
      %v2803 = vadd.f32 0.0, %v2802
      %v2804 = vpop.f32.mrb[0].mxu0
      %v2805 = vadd.f32 0.0, %v2804
      %2806 = vmatprep.mubr.f32.mxu0 %v2686
      %2807 = vmatmul.mubr.f32.gmra.mrb[0].mxu0 %v2619
      %v2808 = vpop.f32.mrb[0].mxu0
      %v2809 = vadd.f32 0.0, %v2808
      %v2810 = vpop.f32.mrb[0].mxu0
      %v2811 = vadd.f32 0.0, %v2810
      %2812 = vmatprep.mubr.f32.mxu0 %v2688
      %2813 = vmatmul.mubr.f32.gmra.mrb[0].mxu0 %v2623
      %v2814 = vpop.f32.mrb[0].mxu0
      %v2815 = vadd.f32 0.0, %v2814
      %v2816 = vpop.f32.mrb[0].mxu0
      %v2817 = vadd.f32 0.0, %v2816
      %2818 = vmatprep.mubr.f32.mxu0 %v2690
      %2819 = vmatmul.mubr.f32.gmra.mrb[0].mxu0 %v2627
      %v2820 = vpop.f32.mrb[0].mxu0
      %v2821 = vadd.f32 0.0, %v2820
      %v2822 = vpop.f32.mrb[0].mxu0
      %v2823 = vadd.f32 0.0, %v2822
      %2824 = vmatprep.mubr.f32.mxu0 %v2692
      %2825 = vmatmul.mubr.f32.gmra.mrb[0].mxu0 %v2631
      %v2826 = vpop.f32.mrb[0].mxu0
      %v2827 = vadd.f32 0.0, %v2826
      %v2828 = vpop.f32.mrb[0].mxu0
      %v2829 = vadd.f32 0.0, %v2828
      %2830 = vmatprep.mubr.f32.mxu0 %v2694
      %2831 = vmatmul.mubr.f32.gmra.mrb[0].mxu0 %v2635
      %v2832 = vpop.f32.mrb[0].mxu0
      %v2833 = vadd.f32 0.0, %v2832
      %v2834 = vpop.f32.mrb[0].mxu0
      %v2835 = vadd.f32 0.0, %v2834
      %2836 = vmatprep.mubr.f32.mxu0 %v2696
      %2837 = vmatmul.mubr.f32.gmra.mrb[0].mxu0 %v2639
      %v2838 = vpop.f32.mrb[0].mxu0
      %v2839 = vadd.f32 0.0, %v2838
      %v2840 = vpop.f32.mrb[0].mxu0
      %v2841 = vadd.f32 0.0, %v2840
      %2842 = vmatprep.mubr.f32.mxu0 %v2698
      %2843 = vmatmul.mubr.f32.gmra.mrb[0].mxu0 %v2643
      %v2844 = vpop.f32.mrb[0].mxu0
      %v2845 = vadd.f32 0.0, %v2844
      %v2846 = vpop.f32.mrb[0].mxu0
      %v2847 = vadd.f32 0.0, %v2846
      %2848 = vmatprep.mubr.f32.mxu0 %v2700
      %2849 = vmatmul.mubr.f32.gmra.mrb[0].mxu0 %v2647
      %v2850 = vpop.f32.mrb[0].mxu0
      %v2851 = vadd.f32 0.0, %v2850
      %v2852 = vpop.f32.mrb[0].mxu0
      %v2853 = vadd.f32 0.0, %v2852
      %2854 = vmatprep.mubr.f32.mxu0 %v2702
      %2855 = vmatmul.mubr.f32.gmra.mrb[0].mxu0 %v2651
      %v2856 = vpop.f32.mrb[0].mxu0
      %v2857 = vadd.f32 0.0, %v2856
      %v2858 = vpop.f32.mrb[0].mxu0
      %v2859 = vadd.f32 0.0, %v2858
      %2860 = vmatprep.mubr.f32.mxu0 %v2704
      %2861 = vmatmul.mubr.f32.gmra.mrb[0].mxu0 %v2655
      %v2862 = vpop.f32.mrb[0].mxu0
      %v2863 = vadd.f32 0.0, %v2862
      %v2864 = vpop.f32.mrb[0].mxu0
      %v2865 = vadd.f32 0.0, %v2864
      %2866 = vdwg.mxu0
      %v2867 = vadd.f32 %v2440, %v2773
      %v2868 = vadd.f32 %v2442, %v2775
      %v2869 = vadd.f32 %v2446, %v2779
      %v2870 = vadd.f32 %v2448, %v2781
      %v2871 = vadd.f32 %v2452, %v2785
      %v2872 = vadd.f32 %v2454, %v2787
      %v2873 = vadd.f32 %v2458, %v2791
      %v2874 = vadd.f32 %v2460, %v2793
      %v2875 = vadd.f32 %v2464, %v2797
      %v2876 = vadd.f32 %v2466, %v2799
      %v2877 = vadd.f32 %v2470, %v2803
      %v2878 = vadd.f32 %v2472, %v2805
      %v2879 = vadd.f32 %v2476, %v2809
      %v2880 = vadd.f32 %v2478, %v2811
      %v2881 = vadd.f32 %v2482, %v2815
      %v2882 = vadd.f32 %v2484, %v2817
      %v2883 = vadd.f32 %v2488, %v2821
      %v2884 = vadd.f32 %v2490, %v2823
      %v2885 = vadd.f32 %v2494, %v2827
      %v2886 = vadd.f32 %v2496, %v2829
      %v2887 = vadd.f32 %v2500, %v2833
      %v2888 = vadd.f32 %v2502, %v2835
      %v2889 = vadd.f32 %v2506, %v2839
      %v2890 = vadd.f32 %v2508, %v2841
      %v2891 = vadd.f32 %v2512, %v2845
      %v2892 = vadd.f32 %v2514, %v2847
      %v2893 = vadd.f32 %v2518, %v2851
      %v2894 = vadd.f32 %v2520, %v2853
      %v2895 = vadd.f32 %v2524, %v2857
      %v2896 = vadd.f32 %v2526, %v2859
      %v2897 = vadd.f32 %v2530, %v2863
      %v2898 = vadd.f32 %v2532, %v2865
      %v2899 = vld [vmem:[#allocation3] sm:$0xf8]
      %v2900 = vld [vmem:[#allocation3 + $0x8] sm:$0xf8]
      %v2901 = vld [vmem:[#allocation3 + $0x100] sm:$0x7]
      %v2902 = vld [vmem:[#allocation3 + $0x108] sm:$0x7]
      %s2903 = scalar_lea.vmem %s3, 1152
      %v2904 = vld [vmem:[%s2903] sm:$0xff]
      %v2905 = vld [vmem:[%s2903 + $0x8] sm:$0xff]
      %v2906 = vld [vmem:[%s2903 + $0x10] sm:$0xff]
      %v2907 = vld [vmem:[%s2903 + $0x18] sm:$0xff]
      %v2908 = vld [vmem:[%s2903 + $0x20] sm:$0xff]
      %v2909 = vld [vmem:[%s2903 + $0x28] sm:$0xff]
      %v2910 = vld [vmem:[%s2903 + $0x30] sm:$0xff]
      %v2911 = vld [vmem:[%s2903 + $0x38] sm:$0xff]
      %v2912 = vld [vmem:[%s2903 + $0x40] sm:$0xff]
      %v2913 = vld [vmem:[%s2903 + $0x48] sm:$0xff]
      %v2914 = vld [vmem:[%s2903 + $0x50] sm:$0xff]
      %v2915 = vld [vmem:[%s2903 + $0x58] sm:$0xff]
      %v2916 = vld [vmem:[%s2903 + $0x60] sm:$0xff]
      %v2917 = vld [vmem:[%s2903 + $0x68] sm:$0xff]
      %v2918 = vld [vmem:[%s2903 + $0x70] sm:$0xff]
      %v2919 = vld [vmem:[%s2903 + $0x78] sm:$0xff]
      %v2920 = vld [vmem:[%s2903 + $0x80] sm:$0xff]
      %v2921 = vld [vmem:[%s2903 + $0x88] sm:$0xff]
      %v2922 = vld [vmem:[%s2903 + $0x90] sm:$0xff]
      %v2923 = vld [vmem:[%s2903 + $0x98] sm:$0xff]
      %v2924 = vld [vmem:[%s2903 + $0xa0] sm:$0xff]
      %v2925 = vld [vmem:[%s2903 + $0xa8] sm:$0xff]
      %v2926 = vld [vmem:[%s2903 + $0xb0] sm:$0xff]
      %v2927 = vld [vmem:[%s2903 + $0xb8] sm:$0xff]
      %v2928 = vld [vmem:[%s2903 + $0xc0] sm:$0xff]
      %v2929 = vld [vmem:[%s2903 + $0xc8] sm:$0xff]
      %v2930 = vld [vmem:[%s2903 + $0xd0] sm:$0xff]
      %v2931 = vld [vmem:[%s2903 + $0xd8] sm:$0xff]
      %v2932 = vld [vmem:[%s2903 + $0xe0] sm:$0xff]
      %v2933 = vld [vmem:[%s2903 + $0xe8] sm:$0xff]
      %v2934 = vld [vmem:[%s2903 + $0xf0] sm:$0xff]
      %v2935 = vld [vmem:[%s2903 + $0xf8] sm:$0xff]
      %v2936 = vld [vmem:[%s2903 + $0x100] sm:$0xff]
      %v2937 = vld [vmem:[%s2903 + $0x108] sm:$0xff]
      %v2938 = vld [vmem:[%s2903 + $0x110] sm:$0xff]
      %v2939 = vld [vmem:[%s2903 + $0x118] sm:$0xff]
      %v2940 = vld [vmem:[%s2903 + $0x120] sm:$0xff]
      %v2941 = vld [vmem:[%s2903 + $0x128] sm:$0xff]
      %v2942 = vld [vmem:[%s2903 + $0x130] sm:$0xff]
      %v2943 = vld [vmem:[%s2903 + $0x138] sm:$0xff]
      %v2944 = vld [vmem:[%s2903 + $0x140] sm:$0xff]
      %v2945 = vld [vmem:[%s2903 + $0x148] sm:$0xff]
      %v2946 = vld [vmem:[%s2903 + $0x150] sm:$0xff]
      %v2947 = vld [vmem:[%s2903 + $0x158] sm:$0xff]
      %v2948 = vld [vmem:[%s2903 + $0x160] sm:$0xff]
      %v2949 = vld [vmem:[%s2903 + $0x168] sm:$0xff]
      %v2950 = vld [vmem:[%s2903 + $0x170] sm:$0xff]
      %v2951 = vld [vmem:[%s2903 + $0x178] sm:$0xff]
      %vm2956 = vcmask 1044480
      %v2957 = vrot.slane %v2899, 3
      %v2958 = vrot.slane %v1899, 3
      %v2959 = vsel %vm2956, %v2957, %v2958
      %v2960 = vrot.slane %v2900, 3
      %v2961 = vrot.slane %v1900, 3
      %v2962 = vsel %vm2956, %v2960, %v2961
      %v2963 = vrot.slane %v1901, 3
      %v2964 = vsel %vm2956, %v2958, %v2963
      %v2965 = vrot.slane %v1902, 3
      %v2966 = vsel %vm2956, %v2961, %v2965
      %v2967 = vrot.slane %v1903, 3
      %v2968 = vsel %vm2956, %v2963, %v2967
      %v2969 = vrot.slane %v1904, 3
      %v2970 = vsel %vm2956, %v2965, %v2969
      %v2971 = vrot.slane %v1905, 3
      %v2972 = vsel %vm2956, %v2967, %v2971
      %v2973 = vrot.slane %v1906, 3
      %v2974 = vsel %vm2956, %v2969, %v2973
      %v2975 = vrot.slane %v1907, 3
      %v2976 = vsel %vm2956, %v2971, %v2975
      %v2977 = vrot.slane %v1908, 3
      %v2978 = vsel %vm2956, %v2973, %v2977
      %v2979 = vrot.slane %v1909, 3
      %v2980 = vsel %vm2956, %v2975, %v2979
      %v2981 = vrot.slane %v1910, 3
      %v2982 = vsel %vm2956, %v2977, %v2981
      %v2983 = vrot.slane %v1911, 3
      %v2984 = vsel %vm2956, %v2979, %v2983
      %v2985 = vrot.slane %v1912, 3
      %v2986 = vsel %vm2956, %v2981, %v2985
      %v2987 = vrot.slane %v1913, 3
      %v2988 = vsel %vm2956, %v2983, %v2987
      %v2989 = vrot.slane %v1914, 3
      %v2990 = vsel %vm2956, %v2985, %v2989
      %v2991 = vrot.slane %v1915, 3
      %v2992 = vsel %vm2956, %v2987, %v2991
      %v2993 = vrot.slane %v1916, 3
      %v2994 = vsel %vm2956, %v2989, %v2993
      %v2995 = vrot.slane %v1917, 3
      %v2996 = vsel %vm2956, %v2991, %v2995
      %v2997 = vrot.slane %v1918, 3
      %v2998 = vsel %vm2956, %v2993, %v2997
      %v2999 = vrot.slane %v1919, 3
      %v3000 = vsel %vm2956, %v2995, %v2999
      %v3001 = vrot.slane %v1920, 3
      %v3002 = vsel %vm2956, %v2997, %v3001
      %v3003 = vrot.slane %v1921, 3
      %v3004 = vsel %vm2956, %v2999, %v3003
      %v3005 = vrot.slane %v1922, 3
      %v3006 = vsel %vm2956, %v3001, %v3005
      %v3007 = vrot.slane %v1923, 3
      %v3008 = vsel %vm2956, %v3003, %v3007
      %v3009 = vrot.slane %v1924, 3
      %v3010 = vsel %vm2956, %v3005, %v3009
      %v3011 = vrot.slane %v1925, 3
      %v3012 = vsel %vm2956, %v3007, %v3011
      %v3013 = vrot.slane %v1926, 3
      %v3014 = vsel %vm2956, %v3009, %v3013
      %v3015 = vrot.slane %v1927, 3
      %v3016 = vsel %vm2956, %v3011, %v3015
      %v3017 = vrot.slane %v1928, 3
      %v3018 = vsel %vm2956, %v3013, %v3017
      %v3019 = vrot.slane %v2901, 3
      %v3020 = vsel %vm2956, %v3015, %v3019
      %v3021 = vrot.slane %v2902, 3
      %v3022 = vsel %vm2956, %v3017, %v3021
      %v3039 = vsel %vm1863, %v2962, 0
      %v3041 = vsel %vm1863, %v2966, 0
      %v3043 = vsel %vm1863, %v2970, 0
      %v3045 = vsel %vm1863, %v2974, 0
      %v3047 = vsel %vm1863, %v2978, 0
      %v3049 = vsel %vm1863, %v2982, 0
      %v3051 = vsel %vm1863, %v2986, 0
      %v3053 = vsel %vm1863, %v2990, 0
      %v3055 = vsel %vm1863, %v2994, 0
      %v3057 = vsel %vm1863, %v2998, 0
      %v3059 = vsel %vm1863, %v3002, 0
      %v3061 = vsel %vm1863, %v3006, 0
      %v3063 = vsel %vm1863, %v3010, 0
      %v3065 = vsel %vm1863, %v3014, 0
      %v3067 = vsel %vm1863, %v3018, 0
      %v3069 = vsel %vm1863, %v3022, 0
      %3071 = vmatprep.subr.mxu0 %v2905
      %3072 = vmatpush1.msra.mxu0 %v2904
      %3073 = vmatprep.subr.mxu0 %v2907
      %3074 = vmatpush1.msra.mxu0 %v2906
      %3075 = vmatprep.subr.mxu0 %v2909
      %3076 = vmatpush1.msra.mxu0 %v2908
      %3077 = vmatprep.subr.mxu0 %v2911
      %3078 = vmatpush1.msra.mxu0 %v2910
      %3079 = vmatprep.subr.mxu0 %v2913
      %3080 = vmatpush1.msra.mxu0 %v2912
      %3081 = vmatprep.subr.mxu0 %v2915
      %3082 = vmatpush1.msra.mxu0 %v2914
      %3083 = vmatprep.subr.mxu0 %v2917
      %3084 = vmatpush1.msra.mxu0 %v2916
      %3085 = vmatprep.subr.mxu0 %v2919
      %3086 = vmatpush1.msra.mxu0 %v2918
      %3087 = vmatprep.subr.mxu0 %v2921
      %3088 = vmatpush1.msra.mxu0 %v2920
      %3089 = vmatprep.subr.mxu0 %v2923
      %3090 = vmatpush1.msra.mxu0 %v2922
      %3091 = vmatprep.subr.mxu0 %v2925
      %3092 = vmatpush1.msra.mxu0 %v2924
      %3093 = vmatprep.subr.mxu0 %v2927
      %3094 = vmatpush1.msra.mxu0 %v2926
      %3095 = vmatprep.subr.mxu0 %v2929
      %3096 = vmatpush1.msra.mxu0 %v2928
      %3097 = vmatprep.subr.mxu0 %v2931
      %3098 = vmatpush1.msra.mxu0 %v2930
      %3099 = vmatprep.subr.mxu0 %v2933
      %3100 = vmatpush1.msra.mxu0 %v2932
      %3101 = vmatprep.subr.mxu0 %v2935
      %3102 = vmatpush1.msra.mxu0 %v2934
      %3103 = vmatprep.subr.mxu0 %v2937
      %3104 = vmatpush1.msra.mxu0 %v2936
      %3105 = vmatprep.subr.mxu0 %v2939
      %3106 = vmatpush1.msra.mxu0 %v2938
      %3107 = vmatprep.subr.mxu0 %v2941
      %3108 = vmatpush1.msra.mxu0 %v2940
      %3109 = vmatprep.subr.mxu0 %v2943
      %3110 = vmatpush1.msra.mxu0 %v2942
      %3111 = vmatprep.subr.mxu0 %v2945
      %3112 = vmatpush1.msra.mxu0 %v2944
      %3113 = vmatprep.subr.mxu0 %v2947
      %3114 = vmatpush1.msra.mxu0 %v2946
      %3115 = vmatprep.subr.mxu0 %v2949
      %3116 = vmatpush1.msra.mxu0 %v2948
      %3117 = vmatprep.subr.mxu0 %v2951
      %3118 = vmatpush1.msra.mxu0 %v2950
      %3119 = vmatprep.subr.mxu0 0.0
      %3120 = vmatpush1.msra.mxu0 0.0
      %3121 = vmatprep.subr.mxu0 0.0
      %3122 = vmatpush1.msra.mxu0 0.0
      %3123 = vmatprep.subr.mxu0 0.0
      %3124 = vmatpush1.msra.mxu0 0.0
      %3125 = vmatprep.subr.mxu0 0.0
      %3126 = vmatpush1.msra.mxu0 0.0
      %3127 = vmatprep.subr.mxu0 0.0
      %3128 = vmatpush1.msra.mxu0 0.0
      %3129 = vmatprep.subr.mxu0 0.0
      %3130 = vmatpush1.msra.mxu0 0.0
      %3131 = vmatprep.subr.mxu0 0.0
      %3132 = vmatpush1.msra.mxu0 0.0
      %3133 = vmatprep.subr.mxu0 0.0
      %3134 = vmatpush1.msra.mxu0 0.0
      %3135 = vmatprep.mubr.f32.mxu0 %v3039
      %3136 = vmatmul.mubr.f32.gmra.mrb[0].mxu0 %v2959
      %v3137 = vpop.f32.mrb[0].mxu0
      %v3138 = vadd.f32 0.0, %v3137
      %v3139 = vpop.f32.mrb[0].mxu0
      %v3140 = vadd.f32 0.0, %v3139
      %3141 = vmatprep.mubr.f32.mxu0 %v3041
      %3142 = vmatmul.mubr.f32.gmra.mrb[0].mxu0 %v2964
      %v3143 = vpop.f32.mrb[0].mxu0
      %v3144 = vadd.f32 0.0, %v3143
      %v3145 = vpop.f32.mrb[0].mxu0
      %v3146 = vadd.f32 0.0, %v3145
      %3147 = vmatprep.mubr.f32.mxu0 %v3043
      %3148 = vmatmul.mubr.f32.gmra.mrb[0].mxu0 %v2968
      %v3149 = vpop.f32.mrb[0].mxu0
      %v3150 = vadd.f32 0.0, %v3149
      %v3151 = vpop.f32.mrb[0].mxu0
      %v3152 = vadd.f32 0.0, %v3151
      %3153 = vmatprep.mubr.f32.mxu0 %v3045
      %3154 = vmatmul.mubr.f32.gmra.mrb[0].mxu0 %v2972
      %v3155 = vpop.f32.mrb[0].mxu0
      %v3156 = vadd.f32 0.0, %v3155
      %v3157 = vpop.f32.mrb[0].mxu0
      %v3158 = vadd.f32 0.0, %v3157
      %3159 = vmatprep.mubr.f32.mxu0 %v3047
      %3160 = vmatmul.mubr.f32.gmra.mrb[0].mxu0 %v2976
      %v3161 = vpop.f32.mrb[0].mxu0
      %v3162 = vadd.f32 0.0, %v3161
      %v3163 = vpop.f32.mrb[0].mxu0
      %v3164 = vadd.f32 0.0, %v3163
      %3165 = vmatprep.mubr.f32.mxu0 %v3049
      %3166 = vmatmul.mubr.f32.gmra.mrb[0].mxu0 %v2980
      %v3167 = vpop.f32.mrb[0].mxu0
      %v3168 = vadd.f32 0.0, %v3167
      %v3169 = vpop.f32.mrb[0].mxu0
      %v3170 = vadd.f32 0.0, %v3169
      %3171 = vmatprep.mubr.f32.mxu0 %v3051
      %3172 = vmatmul.mubr.f32.gmra.mrb[0].mxu0 %v2984
      %v3173 = vpop.f32.mrb[0].mxu0
      %v3174 = vadd.f32 0.0, %v3173
      %v3175 = vpop.f32.mrb[0].mxu0
      %v3176 = vadd.f32 0.0, %v3175
      %3177 = vmatprep.mubr.f32.mxu0 %v3053
      %3178 = vmatmul.mubr.f32.gmra.mrb[0].mxu0 %v2988
      %v3179 = vpop.f32.mrb[0].mxu0
      %v3180 = vadd.f32 0.0, %v3179
      %v3181 = vpop.f32.mrb[0].mxu0
      %v3182 = vadd.f32 0.0, %v3181
      %3183 = vmatprep.mubr.f32.mxu0 %v3055
      %3184 = vmatmul.mubr.f32.gmra.mrb[0].mxu0 %v2992
      %v3185 = vpop.f32.mrb[0].mxu0
      %v3186 = vadd.f32 0.0, %v3185
      %v3187 = vpop.f32.mrb[0].mxu0
      %v3188 = vadd.f32 0.0, %v3187
      %3189 = vmatprep.mubr.f32.mxu0 %v3057
      %3190 = vmatmul.mubr.f32.gmra.mrb[0].mxu0 %v2996
      %v3191 = vpop.f32.mrb[0].mxu0
      %v3192 = vadd.f32 0.0, %v3191
      %v3193 = vpop.f32.mrb[0].mxu0
      %v3194 = vadd.f32 0.0, %v3193
      %3195 = vmatprep.mubr.f32.mxu0 %v3059
      %3196 = vmatmul.mubr.f32.gmra.mrb[0].mxu0 %v3000
      %v3197 = vpop.f32.mrb[0].mxu0
      %v3198 = vadd.f32 0.0, %v3197
      %v3199 = vpop.f32.mrb[0].mxu0
      %v3200 = vadd.f32 0.0, %v3199
      %3201 = vmatprep.mubr.f32.mxu0 %v3061
      %3202 = vmatmul.mubr.f32.gmra.mrb[0].mxu0 %v3004
      %v3203 = vpop.f32.mrb[0].mxu0
      %v3204 = vadd.f32 0.0, %v3203
      %v3205 = vpop.f32.mrb[0].mxu0
      %v3206 = vadd.f32 0.0, %v3205
      %3207 = vmatprep.mubr.f32.mxu0 %v3063
      %3208 = vmatmul.mubr.f32.gmra.mrb[0].mxu0 %v3008
      %v3209 = vpop.f32.mrb[0].mxu0
      %v3210 = vadd.f32 0.0, %v3209
      %v3211 = vpop.f32.mrb[0].mxu0
      %v3212 = vadd.f32 0.0, %v3211
      %3213 = vmatprep.mubr.f32.mxu0 %v3065
      %3214 = vmatmul.mubr.f32.gmra.mrb[0].mxu0 %v3012
      %v3215 = vpop.f32.mrb[0].mxu0
      %v3216 = vadd.f32 0.0, %v3215
      %v3217 = vpop.f32.mrb[0].mxu0
      %v3218 = vadd.f32 0.0, %v3217
      %3219 = vmatprep.mubr.f32.mxu0 %v3067
      %3220 = vmatmul.mubr.f32.gmra.mrb[0].mxu0 %v3016
      %v3221 = vpop.f32.mrb[0].mxu0
      %v3222 = vadd.f32 0.0, %v3221
      %v3223 = vpop.f32.mrb[0].mxu0
      %v3224 = vadd.f32 0.0, %v3223
      %3225 = vmatprep.mubr.f32.mxu0 %v3069
      %3226 = vmatmul.mubr.f32.gmra.mrb[0].mxu0 %v3020
      %v3227 = vpop.f32.mrb[0].mxu0
      %v3228 = vadd.f32 0.0, %v3227
      %v3229 = vpop.f32.mrb[0].mxu0
      %v3230 = vadd.f32 0.0, %v3229
      %3231 = vdwg.mxu0
      %v3232 = vadd.f32 %v2867, %v3138
      %v3233 = vadd.f32 %v2868, %v3140
      %v3234 = vadd.f32 %v2869, %v3144
      %v3235 = vadd.f32 %v2870, %v3146
      %v3236 = vadd.f32 %v2871, %v3150
      %v3237 = vadd.f32 %v2872, %v3152
      %v3238 = vadd.f32 %v2873, %v3156
      %v3239 = vadd.f32 %v2874, %v3158
      %v3240 = vadd.f32 %v2875, %v3162
      %v3241 = vadd.f32 %v2876, %v3164
      %v3242 = vadd.f32 %v2877, %v3168
      %v3243 = vadd.f32 %v2878, %v3170
      %v3244 = vadd.f32 %v2879, %v3174
      %v3245 = vadd.f32 %v2880, %v3176
      %v3246 = vadd.f32 %v2881, %v3180
      %v3247 = vadd.f32 %v2882, %v3182
      %v3248 = vadd.f32 %v2883, %v3186
      %v3249 = vadd.f32 %v2884, %v3188
      %v3250 = vadd.f32 %v2885, %v3192
      %v3251 = vadd.f32 %v2886, %v3194
      %v3252 = vadd.f32 %v2887, %v3198
      %v3253 = vadd.f32 %v2888, %v3200
      %v3254 = vadd.f32 %v2889, %v3204
      %v3255 = vadd.f32 %v2890, %v3206
      %v3256 = vadd.f32 %v2891, %v3210
      %v3257 = vadd.f32 %v2892, %v3212
      %v3258 = vadd.f32 %v2893, %v3216
      %v3259 = vadd.f32 %v2894, %v3218
      %v3260 = vadd.f32 %v2895, %v3222
      %v3261 = vadd.f32 %v2896, %v3224
      %v3262 = vadd.f32 %v2897, %v3228
      %v3263 = vadd.f32 %v2898, %v3230
      %v3264 = vld [vmem:[#allocation3] sm:$0xf0]
      %v3265 = vld [vmem:[#allocation3 + $0x8] sm:$0xf0]
      %v3266 = vld [vmem:[#allocation3 + $0x100] sm:$0xf]
      %v3267 = vld [vmem:[#allocation3 + $0x108] sm:$0xf]
      %s3268 = scalar_lea.vmem %s3, 1536
      %v3269 = vld [vmem:[%s3268] sm:$0xff]
      %v3270 = vld [vmem:[%s3268 + $0x8] sm:$0xff]
      %v3271 = vld [vmem:[%s3268 + $0x10] sm:$0xff]
      %v3272 = vld [vmem:[%s3268 + $0x18] sm:$0xff]
      %v3273 = vld [vmem:[%s3268 + $0x20] sm:$0xff]
      %v3274 = vld [vmem:[%s3268 + $0x28] sm:$0xff]
      %v3275 = vld [vmem:[%s3268 + $0x30] sm:$0xff]
      %v3276 = vld [vmem:[%s3268 + $0x38] sm:$0xff]
      %v3277 = vld [vmem:[%s3268 + $0x40] sm:$0xff]
      %v3278 = vld [vmem:[%s3268 + $0x48] sm:$0xff]
      %v3279 = vld [vmem:[%s3268 + $0x50] sm:$0xff]
      %v3280 = vld [vmem:[%s3268 + $0x58] sm:$0xff]
      %v3281 = vld [vmem:[%s3268 + $0x60] sm:$0xff]
      %v3282 = vld [vmem:[%s3268 + $0x68] sm:$0xff]
      %v3283 = vld [vmem:[%s3268 + $0x70] sm:$0xff]
      %v3284 = vld [vmem:[%s3268 + $0x78] sm:$0xff]
      %v3285 = vld [vmem:[%s3268 + $0x80] sm:$0xff]
      %v3286 = vld [vmem:[%s3268 + $0x88] sm:$0xff]
      %v3287 = vld [vmem:[%s3268 + $0x90] sm:$0xff]
      %v3288 = vld [vmem:[%s3268 + $0x98] sm:$0xff]
      %v3289 = vld [vmem:[%s3268 + $0xa0] sm:$0xff]
      %v3290 = vld [vmem:[%s3268 + $0xa8] sm:$0xff]
      %v3291 = vld [vmem:[%s3268 + $0xb0] sm:$0xff]
      %v3292 = vld [vmem:[%s3268 + $0xb8] sm:$0xff]
      %v3293 = vld [vmem:[%s3268 + $0xc0] sm:$0xff]
      %v3294 = vld [vmem:[%s3268 + $0xc8] sm:$0xff]
      %v3295 = vld [vmem:[%s3268 + $0xd0] sm:$0xff]
      %v3296 = vld [vmem:[%s3268 + $0xd8] sm:$0xff]
      %v3297 = vld [vmem:[%s3268 + $0xe0] sm:$0xff]
      %v3298 = vld [vmem:[%s3268 + $0xe8] sm:$0xff]
      %v3299 = vld [vmem:[%s3268 + $0xf0] sm:$0xff]
      %v3300 = vld [vmem:[%s3268 + $0xf8] sm:$0xff]
      %v3301 = vld [vmem:[%s3268 + $0x100] sm:$0xff]
      %v3302 = vld [vmem:[%s3268 + $0x108] sm:$0xff]
      %v3303 = vld [vmem:[%s3268 + $0x110] sm:$0xff]
      %v3304 = vld [vmem:[%s3268 + $0x118] sm:$0xff]
      %v3305 = vld [vmem:[%s3268 + $0x120] sm:$0xff]
      %v3306 = vld [vmem:[%s3268 + $0x128] sm:$0xff]
      %v3307 = vld [vmem:[%s3268 + $0x130] sm:$0xff]
      %v3308 = vld [vmem:[%s3268 + $0x138] sm:$0xff]
      %v3309 = vld [vmem:[%s3268 + $0x140] sm:$0xff]
      %v3310 = vld [vmem:[%s3268 + $0x148] sm:$0xff]
      %v3311 = vld [vmem:[%s3268 + $0x150] sm:$0xff]
      %v3312 = vld [vmem:[%s3268 + $0x158] sm:$0xff]
      %v3313 = vld [vmem:[%s3268 + $0x160] sm:$0xff]
      %v3314 = vld [vmem:[%s3268 + $0x168] sm:$0xff]
      %v3315 = vld [vmem:[%s3268 + $0x170] sm:$0xff]
      %v3316 = vld [vmem:[%s3268 + $0x178] sm:$0xff]
      %vm3321 = vcmask 1043456
      %v3322 = vrot.slane %v3264, 4
      %v3323 = vrot.slane %v1899, 4
      %v3324 = vsel %vm3321, %v3322, %v3323
      %v3325 = vrot.slane %v3265, 4
      %v3326 = vrot.slane %v1900, 4
      %v3327 = vsel %vm3321, %v3325, %v3326
      %v3328 = vrot.slane %v1901, 4
      %v3329 = vsel %vm3321, %v3323, %v3328
      %v3330 = vrot.slane %v1902, 4
      %v3331 = vsel %vm3321, %v3326, %v3330
      %v3332 = vrot.slane %v1903, 4
      %v3333 = vsel %vm3321, %v3328, %v3332
      %v3334 = vrot.slane %v1904, 4
      %v3335 = vsel %vm3321, %v3330, %v3334
      %v3336 = vrot.slane %v1905, 4
      %v3337 = vsel %vm3321, %v3332, %v3336
      %v3338 = vrot.slane %v1906, 4
      %v3339 = vsel %vm3321, %v3334, %v3338
      %v3340 = vrot.slane %v1907, 4
      %v3341 = vsel %vm3321, %v3336, %v3340
      %v3342 = vrot.slane %v1908, 4
      %v3343 = vsel %vm3321, %v3338, %v3342
      %v3344 = vrot.slane %v1909, 4
      %v3345 = vsel %vm3321, %v3340, %v3344
      %v3346 = vrot.slane %v1910, 4
      %v3347 = vsel %vm3321, %v3342, %v3346
      %v3348 = vrot.slane %v1911, 4
      %v3349 = vsel %vm3321, %v3344, %v3348
      %v3350 = vrot.slane %v1912, 4
      %v3351 = vsel %vm3321, %v3346, %v3350
      %v3352 = vrot.slane %v1913, 4
      %v3353 = vsel %vm3321, %v3348, %v3352
      %v3354 = vrot.slane %v1914, 4
      %v3355 = vsel %vm3321, %v3350, %v3354
      %v3356 = vrot.slane %v1915, 4
      %v3357 = vsel %vm3321, %v3352, %v3356
      %v3358 = vrot.slane %v1916, 4
      %v3359 = vsel %vm3321, %v3354, %v3358
      %v3360 = vrot.slane %v1917, 4
      %v3361 = vsel %vm3321, %v3356, %v3360
      %v3362 = vrot.slane %v1918, 4
      %v3363 = vsel %vm3321, %v3358, %v3362
      %v3364 = vrot.slane %v1919, 4
      %v3365 = vsel %vm3321, %v3360, %v3364
      %v3366 = vrot.slane %v1920, 4
      %v3367 = vsel %vm3321, %v3362, %v3366
      %v3368 = vrot.slane %v1921, 4
      %v3369 = vsel %vm3321, %v3364, %v3368
      %v3370 = vrot.slane %v1922, 4
      %v3371 = vsel %vm3321, %v3366, %v3370
      %v3372 = vrot.slane %v1923, 4
      %v3373 = vsel %vm3321, %v3368, %v3372
      %v3374 = vrot.slane %v1924, 4
      %v3375 = vsel %vm3321, %v3370, %v3374
      %v3376 = vrot.slane %v1925, 4
      %v3377 = vsel %vm3321, %v3372, %v3376
      %v3378 = vrot.slane %v1926, 4
      %v3379 = vsel %vm3321, %v3374, %v3378
      %v3380 = vrot.slane %v1927, 4
      %v3381 = vsel %vm3321, %v3376, %v3380
      %v3382 = vrot.slane %v1928, 4
      %v3383 = vsel %vm3321, %v3378, %v3382
      %v3384 = vrot.slane %v3266, 4
      %v3385 = vsel %vm3321, %v3380, %v3384
      %v3386 = vrot.slane %v3267, 4
      %v3387 = vsel %vm3321, %v3382, %v3386
      %v3404 = vsel %vm1863, %v3327, 0
      %v3406 = vsel %vm1863, %v3331, 0
      %v3408 = vsel %vm1863, %v3335, 0
      %v3410 = vsel %vm1863, %v3339, 0
      %v3412 = vsel %vm1863, %v3343, 0
      %v3414 = vsel %vm1863, %v3347, 0
      %v3416 = vsel %vm1863, %v3351, 0
      %v3418 = vsel %vm1863, %v3355, 0
      %v3420 = vsel %vm1863, %v3359, 0
      %v3422 = vsel %vm1863, %v3363, 0
      %v3424 = vsel %vm1863, %v3367, 0
      %v3426 = vsel %vm1863, %v3371, 0
      %v3428 = vsel %vm1863, %v3375, 0
      %v3430 = vsel %vm1863, %v3379, 0
      %v3432 = vsel %vm1863, %v3383, 0
      %v3434 = vsel %vm1863, %v3387, 0
      %3436 = vmatprep.subr.mxu0 %v3270
      %3437 = vmatpush1.msra.mxu0 %v3269
      %3438 = vmatprep.subr.mxu0 %v3272
      %3439 = vmatpush1.msra.mxu0 %v3271
      %3440 = vmatprep.subr.mxu0 %v3274
      %3441 = vmatpush1.msra.mxu0 %v3273
      %3442 = vmatprep.subr.mxu0 %v3276
      %3443 = vmatpush1.msra.mxu0 %v3275
      %3444 = vmatprep.subr.mxu0 %v3278
      %3445 = vmatpush1.msra.mxu0 %v3277
      %3446 = vmatprep.subr.mxu0 %v3280
      %3447 = vmatpush1.msra.mxu0 %v3279
      %3448 = vmatprep.subr.mxu0 %v3282
      %3449 = vmatpush1.msra.mxu0 %v3281
      %3450 = vmatprep.subr.mxu0 %v3284
      %3451 = vmatpush1.msra.mxu0 %v3283
      %3452 = vmatprep.subr.mxu0 %v3286
      %3453 = vmatpush1.msra.mxu0 %v3285
      %3454 = vmatprep.subr.mxu0 %v3288
      %3455 = vmatpush1.msra.mxu0 %v3287
      %3456 = vmatprep.subr.mxu0 %v3290
      %3457 = vmatpush1.msra.mxu0 %v3289
      %3458 = vmatprep.subr.mxu0 %v3292
      %3459 = vmatpush1.msra.mxu0 %v3291
      %3460 = vmatprep.subr.mxu0 %v3294
      %3461 = vmatpush1.msra.mxu0 %v3293
      %3462 = vmatprep.subr.mxu0 %v3296
      %3463 = vmatpush1.msra.mxu0 %v3295
      %3464 = vmatprep.subr.mxu0 %v3298
      %3465 = vmatpush1.msra.mxu0 %v3297
      %3466 = vmatprep.subr.mxu0 %v3300
      %3467 = vmatpush1.msra.mxu0 %v3299
      %3468 = vmatprep.subr.mxu0 %v3302
      %3469 = vmatpush1.msra.mxu0 %v3301
      %3470 = vmatprep.subr.mxu0 %v3304
      %3471 = vmatpush1.msra.mxu0 %v3303
      %3472 = vmatprep.subr.mxu0 %v3306
      %3473 = vmatpush1.msra.mxu0 %v3305
      %3474 = vmatprep.subr.mxu0 %v3308
      %3475 = vmatpush1.msra.mxu0 %v3307
      %3476 = vmatprep.subr.mxu0 %v3310
      %3477 = vmatpush1.msra.mxu0 %v3309
      %3478 = vmatprep.subr.mxu0 %v3312
      %3479 = vmatpush1.msra.mxu0 %v3311
      %3480 = vmatprep.subr.mxu0 %v3314
      %3481 = vmatpush1.msra.mxu0 %v3313
      %3482 = vmatprep.subr.mxu0 %v3316
      %3483 = vmatpush1.msra.mxu0 %v3315
      %3484 = vmatprep.subr.mxu0 0.0
      %3485 = vmatpush1.msra.mxu0 0.0
      %3486 = vmatprep.subr.mxu0 0.0
      %3487 = vmatpush1.msra.mxu0 0.0
      %3488 = vmatprep.subr.mxu0 0.0
      %3489 = vmatpush1.msra.mxu0 0.0
      %3490 = vmatprep.subr.mxu0 0.0
      %3491 = vmatpush1.msra.mxu0 0.0
      %3492 = vmatprep.subr.mxu0 0.0
      %3493 = vmatpush1.msra.mxu0 0.0
      %3494 = vmatprep.subr.mxu0 0.0
      %3495 = vmatpush1.msra.mxu0 0.0
      %3496 = vmatprep.subr.mxu0 0.0
      %3497 = vmatpush1.msra.mxu0 0.0
      %3498 = vmatprep.subr.mxu0 0.0
      %3499 = vmatpush1.msra.mxu0 0.0
      %3500 = vmatprep.mubr.f32.mxu0 %v3404
      %3501 = vmatmul.mubr.f32.gmra.mrb[0].mxu0 %v3324
      %v3502 = vpop.f32.mrb[0].mxu0
      %v3503 = vadd.f32 0.0, %v3502
      %v3504 = vpop.f32.mrb[0].mxu0
      %v3505 = vadd.f32 0.0, %v3504
      %3506 = vmatprep.mubr.f32.mxu0 %v3406
      %3507 = vmatmul.mubr.f32.gmra.mrb[0].mxu0 %v3329
      %v3508 = vpop.f32.mrb[0].mxu0
      %v3509 = vadd.f32 0.0, %v3508
      %v3510 = vpop.f32.mrb[0].mxu0
      %v3511 = vadd.f32 0.0, %v3510
      %3512 = vmatprep.mubr.f32.mxu0 %v3408
      %3513 = vmatmul.mubr.f32.gmra.mrb[0].mxu0 %v3333
      %v3514 = vpop.f32.mrb[0].mxu0
      %v3515 = vadd.f32 0.0, %v3514
      %v3516 = vpop.f32.mrb[0].mxu0
      %v3517 = vadd.f32 0.0, %v3516
      %3518 = vmatprep.mubr.f32.mxu0 %v3410
      %3519 = vmatmul.mubr.f32.gmra.mrb[0].mxu0 %v3337
      %v3520 = vpop.f32.mrb[0].mxu0
      %v3521 = vadd.f32 0.0, %v3520
      %v3522 = vpop.f32.mrb[0].mxu0
      %v3523 = vadd.f32 0.0, %v3522
      %3524 = vmatprep.mubr.f32.mxu0 %v3412
      %3525 = vmatmul.mubr.f32.gmra.mrb[0].mxu0 %v3341
      %v3526 = vpop.f32.mrb[0].mxu0
      %v3527 = vadd.f32 0.0, %v3526
      %v3528 = vpop.f32.mrb[0].mxu0
      %v3529 = vadd.f32 0.0, %v3528
      %3530 = vmatprep.mubr.f32.mxu0 %v3414
      %3531 = vmatmul.mubr.f32.gmra.mrb[0].mxu0 %v3345
      %v3532 = vpop.f32.mrb[0].mxu0
      %v3533 = vadd.f32 0.0, %v3532
      %v3534 = vpop.f32.mrb[0].mxu0
      %v3535 = vadd.f32 0.0, %v3534
      %3536 = vmatprep.mubr.f32.mxu0 %v3416
      %3537 = vmatmul.mubr.f32.gmra.mrb[0].mxu0 %v3349
      %v3538 = vpop.f32.mrb[0].mxu0
      %v3539 = vadd.f32 0.0, %v3538
      %v3540 = vpop.f32.mrb[0].mxu0
      %v3541 = vadd.f32 0.0, %v3540
      %3542 = vmatprep.mubr.f32.mxu0 %v3418
      %3543 = vmatmul.mubr.f32.gmra.mrb[0].mxu0 %v3353
      %v3544 = vpop.f32.mrb[0].mxu0
      %v3545 = vadd.f32 0.0, %v3544
      %v3546 = vpop.f32.mrb[0].mxu0
      %v3547 = vadd.f32 0.0, %v3546
      %3548 = vmatprep.mubr.f32.mxu0 %v3420
      %3549 = vmatmul.mubr.f32.gmra.mrb[0].mxu0 %v3357
      %v3550 = vpop.f32.mrb[0].mxu0
      %v3551 = vadd.f32 0.0, %v3550
      %v3552 = vpop.f32.mrb[0].mxu0
      %v3553 = vadd.f32 0.0, %v3552
      %3554 = vmatprep.mubr.f32.mxu0 %v3422
      %3555 = vmatmul.mubr.f32.gmra.mrb[0].mxu0 %v3361
      %v3556 = vpop.f32.mrb[0].mxu0
      %v3557 = vadd.f32 0.0, %v3556
      %v3558 = vpop.f32.mrb[0].mxu0
      %v3559 = vadd.f32 0.0, %v3558
      %3560 = vmatprep.mubr.f32.mxu0 %v3424
      %3561 = vmatmul.mubr.f32.gmra.mrb[0].mxu0 %v3365
      %v3562 = vpop.f32.mrb[0].mxu0
      %v3563 = vadd.f32 0.0, %v3562
      %v3564 = vpop.f32.mrb[0].mxu0
      %v3565 = vadd.f32 0.0, %v3564
      %3566 = vmatprep.mubr.f32.mxu0 %v3426
      %3567 = vmatmul.mubr.f32.gmra.mrb[0].mxu0 %v3369
      %v3568 = vpop.f32.mrb[0].mxu0
      %v3569 = vadd.f32 0.0, %v3568
      %v3570 = vpop.f32.mrb[0].mxu0
      %v3571 = vadd.f32 0.0, %v3570
      %3572 = vmatprep.mubr.f32.mxu0 %v3428
      %3573 = vmatmul.mubr.f32.gmra.mrb[0].mxu0 %v3373
      %v3574 = vpop.f32.mrb[0].mxu0
      %v3575 = vadd.f32 0.0, %v3574
      %v3576 = vpop.f32.mrb[0].mxu0
      %v3577 = vadd.f32 0.0, %v3576
      %3578 = vmatprep.mubr.f32.mxu0 %v3430
      %3579 = vmatmul.mubr.f32.gmra.mrb[0].mxu0 %v3377
      %v3580 = vpop.f32.mrb[0].mxu0
      %v3581 = vadd.f32 0.0, %v3580
      %v3582 = vpop.f32.mrb[0].mxu0
      %v3583 = vadd.f32 0.0, %v3582
      %3584 = vmatprep.mubr.f32.mxu0 %v3432
      %3585 = vmatmul.mubr.f32.gmra.mrb[0].mxu0 %v3381
      %v3586 = vpop.f32.mrb[0].mxu0
      %v3587 = vadd.f32 0.0, %v3586
      %v3588 = vpop.f32.mrb[0].mxu0
      %v3589 = vadd.f32 0.0, %v3588
      %3590 = vmatprep.mubr.f32.mxu0 %v3434
      %3591 = vmatmul.mubr.f32.gmra.mrb[0].mxu0 %v3385
      %v3592 = vpop.f32.mrb[0].mxu0
      %v3593 = vadd.f32 0.0, %v3592
      %v3594 = vpop.f32.mrb[0].mxu0
      %v3595 = vadd.f32 0.0, %v3594
      %3596 = vdwg.mxu0
      %v3597 = vadd.f32 %v3232, %v3503
      %v3598 = vadd.f32 %v3233, %v3505
      %v3599 = vadd.f32 %v3234, %v3509
      %v3600 = vadd.f32 %v3235, %v3511
      %v3601 = vadd.f32 %v3236, %v3515
      %v3602 = vadd.f32 %v3237, %v3517
      %v3603 = vadd.f32 %v3238, %v3521
      %v3604 = vadd.f32 %v3239, %v3523
      %v3605 = vadd.f32 %v3240, %v3527
      %v3606 = vadd.f32 %v3241, %v3529
      %v3607 = vadd.f32 %v3242, %v3533
      %v3608 = vadd.f32 %v3243, %v3535
      %v3609 = vadd.f32 %v3244, %v3539
      %v3610 = vadd.f32 %v3245, %v3541
      %v3611 = vadd.f32 %v3246, %v3545
      %v3612 = vadd.f32 %v3247, %v3547
      %v3613 = vadd.f32 %v3248, %v3551
      %v3614 = vadd.f32 %v3249, %v3553
      %v3615 = vadd.f32 %v3250, %v3557
      %v3616 = vadd.f32 %v3251, %v3559
      %v3617 = vadd.f32 %v3252, %v3563
      %v3618 = vadd.f32 %v3253, %v3565
      %v3619 = vadd.f32 %v3254, %v3569
      %v3620 = vadd.f32 %v3255, %v3571
      %v3621 = vadd.f32 %v3256, %v3575
      %v3622 = vadd.f32 %v3257, %v3577
      %v3623 = vadd.f32 %v3258, %v3581
      %v3624 = vadd.f32 %v3259, %v3583
      %v3625 = vadd.f32 %v3260, %v3587
      %v3626 = vadd.f32 %v3261, %v3589
      %v3627 = vadd.f32 %v3262, %v3593
      %v3628 = vadd.f32 %v3263, %v3595
      %v3629 = vld [vmem:[%s4] sm:$0x3]
      %v3631 = vlaneseq
      %v3632 = vshrl.u32 %v3631, 7
      %v3633 = vsub.s32 0, %v3632
      %v3634 = vrot.slane %v3629, %v3633
      %v3635 = vlaneseq
      %v3636 = vshrl.u32 %v3635, 7
      %v3637 = vsub.s32 1, %v3636
      %v3638 = vrot.slane %v3629, %v3637
      %v3641 = vadd.f32 %v3597, %v3634
      %v3642 = vadd.f32 %v3598, %v3638
      %v3643 = vadd.f32 %v3599, %v3634
      %v3644 = vadd.f32 %v3600, %v3638
      %v3645 = vadd.f32 %v3601, %v3634
      %v3646 = vadd.f32 %v3602, %v3638
      %v3647 = vadd.f32 %v3603, %v3634
      %v3648 = vadd.f32 %v3604, %v3638
      %v3649 = vadd.f32 %v3605, %v3634
      %v3650 = vadd.f32 %v3606, %v3638
      %v3651 = vadd.f32 %v3607, %v3634
      %v3652 = vadd.f32 %v3608, %v3638
      %v3653 = vadd.f32 %v3609, %v3634
      %v3654 = vadd.f32 %v3610, %v3638
      %v3655 = vadd.f32 %v3611, %v3634
      %v3656 = vadd.f32 %v3612, %v3638
      %v3657 = vadd.f32 %v3613, %v3634
      %v3658 = vadd.f32 %v3614, %v3638
      %v3659 = vadd.f32 %v3615, %v3634
      %v3660 = vadd.f32 %v3616, %v3638
      %v3661 = vadd.f32 %v3617, %v3634
      %v3662 = vadd.f32 %v3618, %v3638
      %v3663 = vadd.f32 %v3619, %v3634
      %v3664 = vadd.f32 %v3620, %v3638
      %v3665 = vadd.f32 %v3621, %v3634
      %v3666 = vadd.f32 %v3622, %v3638
      %v3667 = vadd.f32 %v3623, %v3634
      %v3668 = vadd.f32 %v3624, %v3638
      %v3669 = vadd.f32 %v3625, %v3634
      %v3670 = vadd.f32 %v3626, %v3638
      %v3671 = vadd.f32 %v3627, %v3634
      %v3672 = vadd.f32 %v3628, %v3638
      %vm3673 = vcmp.gt.f32.partialorder %v3641, 0.0
      %vm3674 = vcmp.gt.f32.partialorder %v3642, 0.0
      %vm3675 = vcmp.gt.f32.partialorder %v3643, 0.0
      %vm3676 = vcmp.gt.f32.partialorder %v3644, 0.0
      %vm3677 = vcmp.gt.f32.partialorder %v3645, 0.0
      %vm3678 = vcmp.gt.f32.partialorder %v3646, 0.0
      %vm3679 = vcmp.gt.f32.partialorder %v3647, 0.0
      %vm3680 = vcmp.gt.f32.partialorder %v3648, 0.0
      %vm3681 = vcmp.gt.f32.partialorder %v3649, 0.0
      %vm3682 = vcmp.gt.f32.partialorder %v3650, 0.0
      %vm3683 = vcmp.gt.f32.partialorder %v3651, 0.0
      %vm3684 = vcmp.gt.f32.partialorder %v3652, 0.0
      %vm3685 = vcmp.gt.f32.partialorder %v3653, 0.0
      %vm3686 = vcmp.gt.f32.partialorder %v3654, 0.0
      %vm3687 = vcmp.gt.f32.partialorder %v3655, 0.0
      %vm3688 = vcmp.gt.f32.partialorder %v3656, 0.0
      %vm3689 = vcmp.gt.f32.partialorder %v3657, 0.0
      %vm3690 = vcmp.gt.f32.partialorder %v3658, 0.0
      %vm3691 = vcmp.gt.f32.partialorder %v3659, 0.0
      %vm3692 = vcmp.gt.f32.partialorder %v3660, 0.0
      %vm3693 = vcmp.gt.f32.partialorder %v3661, 0.0
      %vm3694 = vcmp.gt.f32.partialorder %v3662, 0.0
      %vm3695 = vcmp.gt.f32.partialorder %v3663, 0.0
      %vm3696 = vcmp.gt.f32.partialorder %v3664, 0.0
      %vm3697 = vcmp.gt.f32.partialorder %v3665, 0.0
      %vm3698 = vcmp.gt.f32.partialorder %v3666, 0.0
      %vm3699 = vcmp.gt.f32.partialorder %v3667, 0.0
      %vm3700 = vcmp.gt.f32.partialorder %v3668, 0.0
      %vm3701 = vcmp.gt.f32.partialorder %v3669, 0.0
      %vm3702 = vcmp.gt.f32.partialorder %v3670, 0.0
      %vm3703 = vcmp.gt.f32.partialorder %v3671, 0.0
      %vm3704 = vcmp.gt.f32.partialorder %v3672, 0.0
      %v3705 = vmul.f32 %v3641, 0.2
      %v3706 = vmul.f32 %v3642, 0.2
      %v3707 = vmul.f32 %v3643, 0.2
      %v3708 = vmul.f32 %v3644, 0.2
      %v3709 = vmul.f32 %v3645, 0.2
      %v3710 = vmul.f32 %v3646, 0.2
      %v3711 = vmul.f32 %v3647, 0.2
      %v3712 = vmul.f32 %v3648, 0.2
      %v3713 = vmul.f32 %v3649, 0.2
      %v3714 = vmul.f32 %v3650, 0.2
      %v3715 = vmul.f32 %v3651, 0.2
      %v3716 = vmul.f32 %v3652, 0.2
      %v3717 = vmul.f32 %v3653, 0.2
      %v3718 = vmul.f32 %v3654, 0.2
      %v3719 = vmul.f32 %v3655, 0.2
      %v3720 = vmul.f32 %v3656, 0.2
      %v3721 = vmul.f32 %v3657, 0.2
      %v3722 = vmul.f32 %v3658, 0.2
      %v3723 = vmul.f32 %v3659, 0.2
      %v3724 = vmul.f32 %v3660, 0.2
      %v3725 = vmul.f32 %v3661, 0.2
      %v3726 = vmul.f32 %v3662, 0.2
      %v3727 = vmul.f32 %v3663, 0.2
      %v3728 = vmul.f32 %v3664, 0.2
      %v3729 = vmul.f32 %v3665, 0.2
      %v3730 = vmul.f32 %v3666, 0.2
      %v3731 = vmul.f32 %v3667, 0.2
      %v3732 = vmul.f32 %v3668, 0.2
      %v3733 = vmul.f32 %v3669, 0.2
      %v3734 = vmul.f32 %v3670, 0.2
      %v3735 = vmul.f32 %v3671, 0.2
      %v3736 = vmul.f32 %v3672, 0.2
      %v3737 = vsel %vm3673, %v3641, %v3705
      %v3738 = vsel %vm3674, %v3642, %v3706
      %v3739 = vsel %vm3675, %v3643, %v3707
      %v3740 = vsel %vm3676, %v3644, %v3708
      %v3741 = vsel %vm3677, %v3645, %v3709
      %v3742 = vsel %vm3678, %v3646, %v3710
      %v3743 = vsel %vm3679, %v3647, %v3711
      %v3744 = vsel %vm3680, %v3648, %v3712
      %v3745 = vsel %vm3681, %v3649, %v3713
      %v3746 = vsel %vm3682, %v3650, %v3714
      %v3747 = vsel %vm3683, %v3651, %v3715
      %v3748 = vsel %vm3684, %v3652, %v3716
      %v3749 = vsel %vm3685, %v3653, %v3717
      %v3750 = vsel %vm3686, %v3654, %v3718
      %v3751 = vsel %vm3687, %v3655, %v3719
      %v3752 = vsel %vm3688, %v3656, %v3720
      %v3753 = vsel %vm3689, %v3657, %v3721
      %v3754 = vsel %vm3690, %v3658, %v3722
      %v3755 = vsel %vm3691, %v3659, %v3723
      %v3756 = vsel %vm3692, %v3660, %v3724
      %v3757 = vsel %vm3693, %v3661, %v3725
      %v3758 = vsel %vm3694, %v3662, %v3726
      %v3759 = vsel %vm3695, %v3663, %v3727
      %v3760 = vsel %vm3696, %v3664, %v3728
      %v3761 = vsel %vm3697, %v3665, %v3729
      %v3762 = vsel %vm3698, %v3666, %v3730
      %v3763 = vsel %vm3699, %v3667, %v3731
      %v3764 = vsel %vm3700, %v3668, %v3732
      %v3765 = vsel %vm3701, %v3669, %v3733
      %v3766 = vsel %vm3702, %v3670, %v3734
      %v3767 = vsel %vm3703, %v3671, %v3735
      %v3768 = vsel %vm3704, %v3672, %v3736
      %3769 = vst [vmem:[#allocation4] sm:$0xff] %v3737
      %3770 = vst [vmem:[#allocation4 + $0x8] sm:$0xff] %v3738
      %3771 = vst [vmem:[#allocation4 + $0x10] sm:$0xff] %v3739
      %3772 = vst [vmem:[#allocation4 + $0x18] sm:$0xff] %v3740
      %3773 = vst [vmem:[#allocation4 + $0x20] sm:$0xff] %v3741
      %3774 = vst [vmem:[#allocation4 + $0x28] sm:$0xff] %v3742
      %3775 = vst [vmem:[#allocation4 + $0x30] sm:$0xff] %v3743
      %3776 = vst [vmem:[#allocation4 + $0x38] sm:$0xff] %v3744
      %3777 = vst [vmem:[#allocation4 + $0x40] sm:$0xff] %v3745
      %3778 = vst [vmem:[#allocation4 + $0x48] sm:$0xff] %v3746
      %3779 = vst [vmem:[#allocation4 + $0x50] sm:$0xff] %v3747
      %3780 = vst [vmem:[#allocation4 + $0x58] sm:$0xff] %v3748
      %3781 = vst [vmem:[#allocation4 + $0x60] sm:$0xff] %v3749
      %3782 = vst [vmem:[#allocation4 + $0x68] sm:$0xff] %v3750
      %3783 = vst [vmem:[#allocation4 + $0x70] sm:$0xff] %v3751
      %3784 = vst [vmem:[#allocation4 + $0x78] sm:$0xff] %v3752
      %3785 = vst [vmem:[#allocation4 + $0x80] sm:$0xff] %v3753
      %3786 = vst [vmem:[#allocation4 + $0x88] sm:$0xff] %v3754
      %3787 = vst [vmem:[#allocation4 + $0x90] sm:$0xff] %v3755
      %3788 = vst [vmem:[#allocation4 + $0x98] sm:$0xff] %v3756
      %3789 = vst [vmem:[#allocation4 + $0xa0] sm:$0xff] %v3757
      %3790 = vst [vmem:[#allocation4 + $0xa8] sm:$0xff] %v3758
      %3791 = vst [vmem:[#allocation4 + $0xb0] sm:$0xff] %v3759
      %3792 = vst [vmem:[#allocation4 + $0xb8] sm:$0xff] %v3760
      %3793 = vst [vmem:[#allocation4 + $0xc0] sm:$0xff] %v3761
      %3794 = vst [vmem:[#allocation4 + $0xc8] sm:$0xff] %v3762
      %3795 = vst [vmem:[#allocation4 + $0xd0] sm:$0xff] %v3763
      %3796 = vst [vmem:[#allocation4 + $0xd8] sm:$0xff] %v3764
      %3797 = vst [vmem:[#allocation4 + $0xe0] sm:$0xff] %v3765
      %3798 = vst [vmem:[#allocation4 + $0xe8] sm:$0xff] %v3766
      %3799 = vst [vmem:[#allocation4 + $0xf0] sm:$0xff] %v3767
      %3800 = vst [vmem:[#allocation4 + $0xf8] sm:$0xff] %v3768
      %3801 = vst [vmem:[#allocation4 + $0x100] sm:$0xff] 0.0
      %3802 = vst [vmem:[#allocation4 + $0x108] sm:$0xff] 0.0
      %v3803 = vld [vmem:[#allocation4] sm:$0xff]
      %v3804 = vld [vmem:[#allocation4 + $0x8] sm:$0xff]
      %v3805 = vld [vmem:[#allocation4 + $0x10] sm:$0xff]
      %v3806 = vld [vmem:[#allocation4 + $0x18] sm:$0xff]
      %v3807 = vld [vmem:[#allocation4 + $0x20] sm:$0xff]
      %v3808 = vld [vmem:[#allocation4 + $0x28] sm:$0xff]
      %v3809 = vld [vmem:[#allocation4 + $0x30] sm:$0xff]
      %v3810 = vld [vmem:[#allocation4 + $0x38] sm:$0xff]
      %v3811 = vld [vmem:[#allocation4 + $0x40] sm:$0xff]
      %v3812 = vld [vmem:[#allocation4 + $0x48] sm:$0xff]
      %v3813 = vld [vmem:[#allocation4 + $0x50] sm:$0xff]
      %v3814 = vld [vmem:[#allocation4 + $0x58] sm:$0xff]
      %v3815 = vld [vmem:[#allocation4 + $0x60] sm:$0xff]
      %v3816 = vld [vmem:[#allocation4 + $0x68] sm:$0xff]
      %v3817 = vld [vmem:[#allocation4 + $0x70] sm:$0xff]
      %v3818 = vld [vmem:[#allocation4 + $0x78] sm:$0xff]
      %v3819 = vld [vmem:[#allocation4 + $0x80] sm:$0xff]
      %v3820 = vld [vmem:[#allocation4 + $0x88] sm:$0xff]
      %v3821 = vld [vmem:[#allocation4 + $0x90] sm:$0xff]
      %v3822 = vld [vmem:[#allocation4 + $0x98] sm:$0xff]
      %v3823 = vld [vmem:[#allocation4 + $0xa0] sm:$0xff]
      %v3824 = vld [vmem:[#allocation4 + $0xa8] sm:$0xff]
      %v3825 = vld [vmem:[#allocation4 + $0xb0] sm:$0xff]
      %v3826 = vld [vmem:[#allocation4 + $0xb8] sm:$0xff]
      %v3827 = vld [vmem:[#allocation4 + $0xc0] sm:$0xff]
      %v3828 = vld [vmem:[#allocation4 + $0xc8] sm:$0xff]
      %v3829 = vld [vmem:[#allocation4 + $0xd0] sm:$0xff]
      %v3830 = vld [vmem:[#allocation4 + $0xd8] sm:$0xff]
      %v3831 = vld [vmem:[#allocation4 + $0xe0] sm:$0xff]
      %v3832 = vld [vmem:[#allocation4 + $0xe8] sm:$0xff]
      %v3833 = vld [vmem:[#allocation4 + $0xf0] sm:$0xff]
      %v3834 = vld [vmem:[#allocation4 + $0xf8] sm:$0xff]
      %v3835 = vld [vmem:[%s5] sm:$0xff]
      %v3836 = vld [vmem:[%s5 + $0x8] sm:$0xff]
      %v3837 = vld [vmem:[%s5 + $0x10] sm:$0xff]
      %v3838 = vld [vmem:[%s5 + $0x18] sm:$0xff]
      %v3839 = vld [vmem:[%s5 + $0x20] sm:$0xff]
      %v3840 = vld [vmem:[%s5 + $0x28] sm:$0xff]
      %v3841 = vld [vmem:[%s5 + $0x30] sm:$0xff]
      %v3842 = vld [vmem:[%s5 + $0x38] sm:$0xff]
      %v3843 = vld [vmem:[%s5 + $0x40] sm:$0xff]
      %v3844 = vld [vmem:[%s5 + $0x48] sm:$0xff]
      %v3845 = vld [vmem:[%s5 + $0x50] sm:$0xff]
      %v3846 = vld [vmem:[%s5 + $0x58] sm:$0xff]
      %v3847 = vld [vmem:[%s5 + $0x60] sm:$0xff]
      %v3848 = vld [vmem:[%s5 + $0x68] sm:$0xff]
      %v3849 = vld [vmem:[%s5 + $0x70] sm:$0xff]
      %v3850 = vld [vmem:[%s5 + $0x78] sm:$0xff]
      %v3851 = vld [vmem:[%s5 + $0x80] sm:$0xff]
      %v3852 = vld [vmem:[%s5 + $0x88] sm:$0xff]
      %v3853 = vld [vmem:[%s5 + $0x90] sm:$0xff]
      %v3854 = vld [vmem:[%s5 + $0x98] sm:$0xff]
      %v3855 = vld [vmem:[%s5 + $0xa0] sm:$0xff]
      %v3856 = vld [vmem:[%s5 + $0xa8] sm:$0xff]
      %v3857 = vld [vmem:[%s5 + $0xb0] sm:$0xff]
      %v3858 = vld [vmem:[%s5 + $0xb8] sm:$0xff]
      %v3859 = vld [vmem:[%s5 + $0xc0] sm:$0xff]
      %v3860 = vld [vmem:[%s5 + $0xc8] sm:$0xff]
      %v3861 = vld [vmem:[%s5 + $0xd0] sm:$0xff]
      %v3862 = vld [vmem:[%s5 + $0xd8] sm:$0xff]
      %v3863 = vld [vmem:[%s5 + $0xe0] sm:$0xff]
      %v3864 = vld [vmem:[%s5 + $0xe8] sm:$0xff]
      %v3865 = vld [vmem:[%s5 + $0xf0] sm:$0xff]
      %v3866 = vld [vmem:[%s5 + $0xf8] sm:$0xff]
      %v3867 = vld [vmem:[#allocation4] sm:$0xfe]
      %v3868 = vld [vmem:[#allocation4 + $0x8] sm:$0xfe]
      %v3869 = vld [vmem:[#allocation4 + $0x10] sm:$0xff]
      %v3870 = vld [vmem:[#allocation4 + $0x18] sm:$0xff]
      %v3871 = vld [vmem:[#allocation4 + $0x20] sm:$0xff]
      %v3872 = vld [vmem:[#allocation4 + $0x28] sm:$0xff]
      %v3873 = vld [vmem:[#allocation4 + $0x30] sm:$0xff]
      %v3874 = vld [vmem:[#allocation4 + $0x38] sm:$0xff]
      %v3875 = vld [vmem:[#allocation4 + $0x40] sm:$0xff]
      %v3876 = vld [vmem:[#allocation4 + $0x48] sm:$0xff]
      %v3877 = vld [vmem:[#allocation4 + $0x50] sm:$0xff]
      %v3878 = vld [vmem:[#allocation4 + $0x58] sm:$0xff]
      %v3879 = vld [vmem:[#allocation4 + $0x60] sm:$0xff]
      %v3880 = vld [vmem:[#allocation4 + $0x68] sm:$0xff]
      %v3881 = vld [vmem:[#allocation4 + $0x70] sm:$0xff]
      %v3882 = vld [vmem:[#allocation4 + $0x78] sm:$0xff]
      %v3883 = vld [vmem:[#allocation4 + $0x80] sm:$0xff]
      %v3884 = vld [vmem:[#allocation4 + $0x88] sm:$0xff]
      %v3885 = vld [vmem:[#allocation4 + $0x90] sm:$0xff]
      %v3886 = vld [vmem:[#allocation4 + $0x98] sm:$0xff]
      %v3887 = vld [vmem:[#allocation4 + $0xa0] sm:$0xff]
      %v3888 = vld [vmem:[#allocation4 + $0xa8] sm:$0xff]
      %v3889 = vld [vmem:[#allocation4 + $0xb0] sm:$0xff]
      %v3890 = vld [vmem:[#allocation4 + $0xb8] sm:$0xff]
      %v3891 = vld [vmem:[#allocation4 + $0xc0] sm:$0xff]
      %v3892 = vld [vmem:[#allocation4 + $0xc8] sm:$0xff]
      %v3893 = vld [vmem:[#allocation4 + $0xd0] sm:$0xff]
      %v3894 = vld [vmem:[#allocation4 + $0xd8] sm:$0xff]
      %v3895 = vld [vmem:[#allocation4 + $0xe0] sm:$0xff]
      %v3896 = vld [vmem:[#allocation4 + $0xe8] sm:$0xff]
      %v3897 = vld [vmem:[#allocation4 + $0xf0] sm:$0xff]
      %v3898 = vld [vmem:[#allocation4 + $0xf8] sm:$0xff]
      %v3899 = vld [vmem:[#allocation4 + $0x100] sm:$0x1]
      %v3900 = vld [vmem:[#allocation4 + $0x108] sm:$0x1]
      %s3901 = scalar_lea.vmem %s5, 256
      %v3902 = vld [vmem:[%s3901] sm:$0xff]
      %v3903 = vld [vmem:[%s3901 + $0x8] sm:$0xff]
      %v3904 = vld [vmem:[%s3901 + $0x10] sm:$0xff]
      %v3905 = vld [vmem:[%s3901 + $0x18] sm:$0xff]
      %v3906 = vld [vmem:[%s3901 + $0x20] sm:$0xff]
      %v3907 = vld [vmem:[%s3901 + $0x28] sm:$0xff]
      %v3908 = vld [vmem:[%s3901 + $0x30] sm:$0xff]
      %v3909 = vld [vmem:[%s3901 + $0x38] sm:$0xff]
      %v3910 = vld [vmem:[%s3901 + $0x40] sm:$0xff]
      %v3911 = vld [vmem:[%s3901 + $0x48] sm:$0xff]
      %v3912 = vld [vmem:[%s3901 + $0x50] sm:$0xff]
      %v3913 = vld [vmem:[%s3901 + $0x58] sm:$0xff]
      %v3914 = vld [vmem:[%s3901 + $0x60] sm:$0xff]
      %v3915 = vld [vmem:[%s3901 + $0x68] sm:$0xff]
      %v3916 = vld [vmem:[%s3901 + $0x70] sm:$0xff]
      %v3917 = vld [vmem:[%s3901 + $0x78] sm:$0xff]
      %v3918 = vld [vmem:[%s3901 + $0x80] sm:$0xff]
      %v3919 = vld [vmem:[%s3901 + $0x88] sm:$0xff]
      %v3920 = vld [vmem:[%s3901 + $0x90] sm:$0xff]
      %v3921 = vld [vmem:[%s3901 + $0x98] sm:$0xff]
      %v3922 = vld [vmem:[%s3901 + $0xa0] sm:$0xff]
      %v3923 = vld [vmem:[%s3901 + $0xa8] sm:$0xff]
      %v3924 = vld [vmem:[%s3901 + $0xb0] sm:$0xff]
      %v3925 = vld [vmem:[%s3901 + $0xb8] sm:$0xff]
      %v3926 = vld [vmem:[%s3901 + $0xc0] sm:$0xff]
      %v3927 = vld [vmem:[%s3901 + $0xc8] sm:$0xff]
      %v3928 = vld [vmem:[%s3901 + $0xd0] sm:$0xff]
      %v3929 = vld [vmem:[%s3901 + $0xd8] sm:$0xff]
      %v3930 = vld [vmem:[%s3901 + $0xe0] sm:$0xff]
      %v3931 = vld [vmem:[%s3901 + $0xe8] sm:$0xff]
      %v3932 = vld [vmem:[%s3901 + $0xf0] sm:$0xff]
      %v3933 = vld [vmem:[%s3901 + $0xf8] sm:$0xff]
      %v3968 = vrot.slane %v3867, 1
      %v3969 = vrot.slane %v3869, 1
      %v3970 = vsel %vm2064, %v3968, %v3969
      %v3971 = vrot.slane %v3868, 1
      %v3972 = vrot.slane %v3870, 1
      %v3973 = vsel %vm2064, %v3971, %v3972
      %v3974 = vrot.slane %v3871, 1
      %v3975 = vsel %vm2064, %v3969, %v3974
      %v3976 = vrot.slane %v3872, 1
      %v3977 = vsel %vm2064, %v3972, %v3976
      %v3978 = vrot.slane %v3873, 1
      %v3979 = vsel %vm2064, %v3974, %v3978
      %v3980 = vrot.slane %v3874, 1
      %v3981 = vsel %vm2064, %v3976, %v3980
      %v3982 = vrot.slane %v3875, 1
      %v3983 = vsel %vm2064, %v3978, %v3982
      %v3984 = vrot.slane %v3876, 1
      %v3985 = vsel %vm2064, %v3980, %v3984
      %v3986 = vrot.slane %v3877, 1
      %v3987 = vsel %vm2064, %v3982, %v3986
      %v3988 = vrot.slane %v3878, 1
      %v3989 = vsel %vm2064, %v3984, %v3988
      %v3990 = vrot.slane %v3879, 1
      %v3991 = vsel %vm2064, %v3986, %v3990
      %v3992 = vrot.slane %v3880, 1
      %v3993 = vsel %vm2064, %v3988, %v3992
      %v3994 = vrot.slane %v3881, 1
      %v3995 = vsel %vm2064, %v3990, %v3994
      %v3996 = vrot.slane %v3882, 1
      %v3997 = vsel %vm2064, %v3992, %v3996
      %v3998 = vrot.slane %v3883, 1
      %v3999 = vsel %vm2064, %v3994, %v3998
      %v4000 = vrot.slane %v3884, 1
      %v4001 = vsel %vm2064, %v3996, %v4000
      %v4002 = vrot.slane %v3885, 1
      %v4003 = vsel %vm2064, %v3998, %v4002
      %v4004 = vrot.slane %v3886, 1
      %v4005 = vsel %vm2064, %v4000, %v4004
      %v4006 = vrot.slane %v3887, 1
      %v4007 = vsel %vm2064, %v4002, %v4006
      %v4008 = vrot.slane %v3888, 1
      %v4009 = vsel %vm2064, %v4004, %v4008
      %v4010 = vrot.slane %v3889, 1
      %v4011 = vsel %vm2064, %v4006, %v4010
      %v4012 = vrot.slane %v3890, 1
      %v4013 = vsel %vm2064, %v4008, %v4012
      %v4014 = vrot.slane %v3891, 1
      %v4015 = vsel %vm2064, %v4010, %v4014
      %v4016 = vrot.slane %v3892, 1
      %v4017 = vsel %vm2064, %v4012, %v4016
      %v4018 = vrot.slane %v3893, 1
      %v4019 = vsel %vm2064, %v4014, %v4018
      %v4020 = vrot.slane %v3894, 1
      %v4021 = vsel %vm2064, %v4016, %v4020
      %v4022 = vrot.slane %v3895, 1
      %v4023 = vsel %vm2064, %v4018, %v4022
      %v4024 = vrot.slane %v3896, 1
      %v4025 = vsel %vm2064, %v4020, %v4024
      %v4026 = vrot.slane %v3897, 1
      %v4027 = vsel %vm2064, %v4022, %v4026
      %v4028 = vrot.slane %v3898, 1
      %v4029 = vsel %vm2064, %v4024, %v4028
      %v4030 = vrot.slane %v3899, 1
      %v4031 = vsel %vm2064, %v4026, %v4030
      %v4032 = vrot.slane %v3900, 1
      %v4033 = vsel %vm2064, %v4028, %v4032
      %4066 = vmatprep.subr.mxu0 0.0
      %4067 = vmatpush1.msra.mxu0 %v3902
      %4068 = vmatprep.subr.mxu0 0.0
      %4069 = vmatpush1.msra.mxu0 %v3903
      %4070 = vmatprep.subr.mxu0 0.0
      %4071 = vmatpush1.msra.mxu0 %v3904
      %4072 = vmatprep.subr.mxu0 0.0
      %4073 = vmatpush1.msra.mxu0 %v3905
      %4074 = vmatprep.subr.mxu0 0.0
      %4075 = vmatpush1.msra.mxu0 %v3906
      %4076 = vmatprep.subr.mxu0 0.0
      %4077 = vmatpush1.msra.mxu0 %v3907
      %4078 = vmatprep.subr.mxu0 0.0
      %4079 = vmatpush1.msra.mxu0 %v3908
      %4080 = vmatprep.subr.mxu0 0.0
      %4081 = vmatpush1.msra.mxu0 %v3909
      %4082 = vmatprep.subr.mxu0 0.0
      %4083 = vmatpush1.msra.mxu0 %v3910
      %4084 = vmatprep.subr.mxu0 0.0
      %4085 = vmatpush1.msra.mxu0 %v3911
      %4086 = vmatprep.subr.mxu0 0.0
      %4087 = vmatpush1.msra.mxu0 %v3912
      %4088 = vmatprep.subr.mxu0 0.0
      %4089 = vmatpush1.msra.mxu0 %v3913
      %4090 = vmatprep.subr.mxu0 0.0
      %4091 = vmatpush1.msra.mxu0 %v3914
      %4092 = vmatprep.subr.mxu0 0.0
      %4093 = vmatpush1.msra.mxu0 %v3915
      %4094 = vmatprep.subr.mxu0 0.0
      %4095 = vmatpush1.msra.mxu0 %v3916
      %4096 = vmatprep.subr.mxu0 0.0
      %4097 = vmatpush1.msra.mxu0 %v3917
      %4098 = vmatprep.subr.mxu0 0.0
      %4099 = vmatpush1.msra.mxu0 %v3918
      %4100 = vmatprep.subr.mxu0 0.0
      %4101 = vmatpush1.msra.mxu0 %v3919
      %4102 = vmatprep.subr.mxu0 0.0
      %4103 = vmatpush1.msra.mxu0 %v3920
      %4104 = vmatprep.subr.mxu0 0.0
      %4105 = vmatpush1.msra.mxu0 %v3921
      %4106 = vmatprep.subr.mxu0 0.0
      %4107 = vmatpush1.msra.mxu0 %v3922
      %4108 = vmatprep.subr.mxu0 0.0
      %4109 = vmatpush1.msra.mxu0 %v3923
      %4110 = vmatprep.subr.mxu0 0.0
      %4111 = vmatpush1.msra.mxu0 %v3924
      %4112 = vmatprep.subr.mxu0 0.0
      %4113 = vmatpush1.msra.mxu0 %v3925
      %4114 = vmatprep.subr.mxu0 0.0
      %4115 = vmatpush1.msra.mxu0 %v3926
      %4116 = vmatprep.subr.mxu0 0.0
      %4117 = vmatpush1.msra.mxu0 %v3927
      %4118 = vmatprep.subr.mxu0 0.0
      %4119 = vmatpush1.msra.mxu0 %v3928
      %4120 = vmatprep.subr.mxu0 0.0
      %4121 = vmatpush1.msra.mxu0 %v3929
      %4122 = vmatprep.subr.mxu0 0.0
      %4123 = vmatpush1.msra.mxu0 %v3930
      %4124 = vmatprep.subr.mxu0 0.0
      %4125 = vmatpush1.msra.mxu0 %v3931
      %4126 = vmatprep.subr.mxu0 0.0
      %4127 = vmatpush1.msra.mxu0 %v3932
      %4128 = vmatprep.subr.mxu0 0.0
      %4129 = vmatpush1.msra.mxu0 %v3933
      %4130 = vmatprep.mubr.f32.mxu0 %v3973
      %4131 = vmatmul.mubr.f32.gmra.mrb[0].mxu0 %v3970
      %v4132 = vpop.f32.mrb[0].mxu0
      %v4133 = vadd.f32 0.0, %v4132
      %v4134 = vpop.f32.mrb[0].mxu0
      %4135 = vmatprep.mubr.f32.mxu0 %v3977
      %4136 = vmatmul.mubr.f32.gmra.mrb[0].mxu0 %v3975
      %v4137 = vpop.f32.mrb[0].mxu0
      %v4138 = vpop.f32.mrb[0].mxu0
      %4139 = vmatprep.mubr.f32.mxu0 %v3981
      %4140 = vmatmul.mubr.f32.gmra.mrb[0].mxu0 %v3979
      %v4141 = vpop.f32.mrb[0].mxu0
      %v4142 = vadd.f32 0.0, %v4141
      %v4143 = vpop.f32.mrb[0].mxu0
      %4144 = vmatprep.mubr.f32.mxu0 %v3985
      %4145 = vmatmul.mubr.f32.gmra.mrb[0].mxu0 %v3983
      %v4146 = vpop.f32.mrb[0].mxu0
      %v4147 = vpop.f32.mrb[0].mxu0
      %4148 = vmatprep.mubr.f32.mxu0 %v3989
      %4149 = vmatmul.mubr.f32.gmra.mrb[0].mxu0 %v3987
      %v4150 = vpop.f32.mrb[0].mxu0
      %v4151 = vadd.f32 0.0, %v4150
      %v4152 = vpop.f32.mrb[0].mxu0
      %4153 = vmatprep.mubr.f32.mxu0 %v3993
      %4154 = vmatmul.mubr.f32.gmra.mrb[0].mxu0 %v3991
      %v4155 = vpop.f32.mrb[0].mxu0
      %v4156 = vpop.f32.mrb[0].mxu0
      %4157 = vmatprep.mubr.f32.mxu0 %v3997
      %4158 = vmatmul.mubr.f32.gmra.mrb[0].mxu0 %v3995
      %v4159 = vpop.f32.mrb[0].mxu0
      %v4160 = vadd.f32 0.0, %v4159
      %v4161 = vpop.f32.mrb[0].mxu0
      %4162 = vmatprep.mubr.f32.mxu0 %v4001
      %4163 = vmatmul.mubr.f32.gmra.mrb[0].mxu0 %v3999
      %v4164 = vpop.f32.mrb[0].mxu0
      %v4165 = vpop.f32.mrb[0].mxu0
      %4166 = vmatprep.mubr.f32.mxu0 %v4005
      %4167 = vmatmul.mubr.f32.gmra.mrb[0].mxu0 %v4003
      %v4168 = vpop.f32.mrb[0].mxu0
      %v4169 = vadd.f32 0.0, %v4168
      %v4170 = vpop.f32.mrb[0].mxu0
      %4171 = vmatprep.mubr.f32.mxu0 %v4009
      %4172 = vmatmul.mubr.f32.gmra.mrb[0].mxu0 %v4007
      %v4173 = vpop.f32.mrb[0].mxu0
      %v4174 = vpop.f32.mrb[0].mxu0
      %4175 = vmatprep.mubr.f32.mxu0 %v4013
      %4176 = vmatmul.mubr.f32.gmra.mrb[0].mxu0 %v4011
      %v4177 = vpop.f32.mrb[0].mxu0
      %v4178 = vadd.f32 0.0, %v4177
      %v4179 = vpop.f32.mrb[0].mxu0
      %4180 = vmatprep.mubr.f32.mxu0 %v4017
      %4181 = vmatmul.mubr.f32.gmra.mrb[0].mxu0 %v4015
      %v4182 = vpop.f32.mrb[0].mxu0
      %v4183 = vpop.f32.mrb[0].mxu0
      %4184 = vmatprep.mubr.f32.mxu0 %v4021
      %4185 = vmatmul.mubr.f32.gmra.mrb[0].mxu0 %v4019
      %v4186 = vpop.f32.mrb[0].mxu0
      %v4187 = vadd.f32 0.0, %v4186
      %v4188 = vpop.f32.mrb[0].mxu0
      %4189 = vmatprep.mubr.f32.mxu0 %v4025
      %4190 = vmatmul.mubr.f32.gmra.mrb[0].mxu0 %v4023
      %v4191 = vpop.f32.mrb[0].mxu0
      %v4192 = vpop.f32.mrb[0].mxu0
      %4193 = vmatprep.mubr.f32.mxu0 %v4029
      %4194 = vmatmul.mubr.f32.gmra.mrb[0].mxu0 %v4027
      %v4195 = vpop.f32.mrb[0].mxu0
      %v4196 = vadd.f32 0.0, %v4195
      %v4197 = vpop.f32.mrb[0].mxu0
      %4198 = vmatprep.mubr.f32.mxu0 %v4033
      %4199 = vmatmul.mubr.f32.gmra.mrb[0].mxu0 %v4031
      %v4200 = vpop.f32.mrb[0].mxu0
      %v4201 = vpop.f32.mrb[0].mxu0
      %4202 = vdwg.mxu0
      %4203 = vmatprep.subr.mxu0 0.0
      %4204 = vmatpush1.msra.mxu0 %v3835
      %4205 = vmatprep.subr.mxu0 0.0
      %4206 = vmatpush1.msra.mxu0 %v3836
      %4207 = vmatprep.subr.mxu0 0.0
      %4208 = vmatpush1.msra.mxu0 %v3837
      %4209 = vmatprep.subr.mxu0 0.0
      %4210 = vmatpush1.msra.mxu0 %v3838
      %4211 = vmatprep.subr.mxu0 0.0
      %4212 = vmatpush1.msra.mxu0 %v3839
      %4213 = vmatprep.subr.mxu0 0.0
      %4214 = vmatpush1.msra.mxu0 %v3840
      %4215 = vmatprep.subr.mxu0 0.0
      %4216 = vmatpush1.msra.mxu0 %v3841
      %4217 = vmatprep.subr.mxu0 0.0
      %4218 = vmatpush1.msra.mxu0 %v3842
      %4219 = vmatprep.subr.mxu0 0.0
      %4220 = vmatpush1.msra.mxu0 %v3843
      %4221 = vmatprep.subr.mxu0 0.0
      %4222 = vmatpush1.msra.mxu0 %v3844
      %4223 = vmatprep.subr.mxu0 0.0
      %4224 = vmatpush1.msra.mxu0 %v3845
      %4225 = vmatprep.subr.mxu0 0.0
      %4226 = vmatpush1.msra.mxu0 %v3846
      %4227 = vmatprep.subr.mxu0 0.0
      %4228 = vmatpush1.msra.mxu0 %v3847
      %4229 = vmatprep.subr.mxu0 0.0
      %4230 = vmatpush1.msra.mxu0 %v3848
      %4231 = vmatprep.subr.mxu0 0.0
      %4232 = vmatpush1.msra.mxu0 %v3849
      %4233 = vmatprep.subr.mxu0 0.0
      %4234 = vmatpush1.msra.mxu0 %v3850
      %4235 = vmatprep.subr.mxu0 0.0
      %4236 = vmatpush1.msra.mxu0 %v3851
      %4237 = vmatprep.subr.mxu0 0.0
      %4238 = vmatpush1.msra.mxu0 %v3852
      %4239 = vmatprep.subr.mxu0 0.0
      %4240 = vmatpush1.msra.mxu0 %v3853
      %4241 = vmatprep.subr.mxu0 0.0
      %4242 = vmatpush1.msra.mxu0 %v3854
      %4243 = vmatprep.subr.mxu0 0.0
      %4244 = vmatpush1.msra.mxu0 %v3855
      %4245 = vmatprep.subr.mxu0 0.0
      %4246 = vmatpush1.msra.mxu0 %v3856
      %4247 = vmatprep.subr.mxu0 0.0
      %4248 = vmatpush1.msra.mxu0 %v3857
      %4249 = vmatprep.subr.mxu0 0.0
      %4250 = vmatpush1.msra.mxu0 %v3858
      %4251 = vmatprep.subr.mxu0 0.0
      %4252 = vmatpush1.msra.mxu0 %v3859
      %4253 = vmatprep.subr.mxu0 0.0
      %4254 = vmatpush1.msra.mxu0 %v3860
      %4255 = vmatprep.subr.mxu0 0.0
      %4256 = vmatpush1.msra.mxu0 %v3861
      %4257 = vmatprep.subr.mxu0 0.0
      %4258 = vmatpush1.msra.mxu0 %v3862
      %4259 = vmatprep.subr.mxu0 0.0
      %4260 = vmatpush1.msra.mxu0 %v3863
      %4261 = vmatprep.subr.mxu0 0.0
      %4262 = vmatpush1.msra.mxu0 %v3864
      %4263 = vmatprep.subr.mxu0 0.0
      %4264 = vmatpush1.msra.mxu0 %v3865
      %4265 = vmatprep.subr.mxu0 0.0
      %4266 = vmatpush1.msra.mxu0 %v3866
      %4267 = vmatprep.mubr.f32.mxu0 %v3804
      %4268 = vmatmul.mubr.f32.gmra.mrb[0].mxu0 %v3803
      %v4269 = vpop.f32.mrb[0].mxu0
      %v4270 = vadd.f32 %v4133, %v4269
      %v4271 = vpop.f32.mrb[0].mxu0
      %4272 = vmatprep.mubr.f32.mxu0 %v3806
      %4273 = vmatmul.mubr.f32.gmra.mrb[0].mxu0 %v3805
      %v4274 = vpop.f32.mrb[0].mxu0
      %v4275 = vpop.f32.mrb[0].mxu0
      %4276 = vmatprep.mubr.f32.mxu0 %v3808
      %4277 = vmatmul.mubr.f32.gmra.mrb[0].mxu0 %v3807
      %v4278 = vpop.f32.mrb[0].mxu0
      %v4279 = vadd.f32 %v4142, %v4278
      %v4280 = vpop.f32.mrb[0].mxu0
      %4281 = vmatprep.mubr.f32.mxu0 %v3810
      %4282 = vmatmul.mubr.f32.gmra.mrb[0].mxu0 %v3809
      %v4283 = vpop.f32.mrb[0].mxu0
      %v4284 = vpop.f32.mrb[0].mxu0
      %4285 = vmatprep.mubr.f32.mxu0 %v3812
      %4286 = vmatmul.mubr.f32.gmra.mrb[0].mxu0 %v3811
      %v4287 = vpop.f32.mrb[0].mxu0
      %v4288 = vadd.f32 %v4151, %v4287
      %v4289 = vpop.f32.mrb[0].mxu0
      %4290 = vmatprep.mubr.f32.mxu0 %v3814
      %4291 = vmatmul.mubr.f32.gmra.mrb[0].mxu0 %v3813
      %v4292 = vpop.f32.mrb[0].mxu0
      %v4293 = vpop.f32.mrb[0].mxu0
      %4294 = vmatprep.mubr.f32.mxu0 %v3816
      %4295 = vmatmul.mubr.f32.gmra.mrb[0].mxu0 %v3815
      %v4296 = vpop.f32.mrb[0].mxu0
      %v4297 = vadd.f32 %v4160, %v4296
      %v4298 = vpop.f32.mrb[0].mxu0
      %4299 = vmatprep.mubr.f32.mxu0 %v3818
      %4300 = vmatmul.mubr.f32.gmra.mrb[0].mxu0 %v3817
      %v4301 = vpop.f32.mrb[0].mxu0
      %v4302 = vpop.f32.mrb[0].mxu0
      %4303 = vmatprep.mubr.f32.mxu0 %v3820
      %4304 = vmatmul.mubr.f32.gmra.mrb[0].mxu0 %v3819
      %v4305 = vpop.f32.mrb[0].mxu0
      %v4306 = vadd.f32 %v4169, %v4305
      %v4307 = vpop.f32.mrb[0].mxu0
      %4308 = vmatprep.mubr.f32.mxu0 %v3822
      %4309 = vmatmul.mubr.f32.gmra.mrb[0].mxu0 %v3821
      %v4310 = vpop.f32.mrb[0].mxu0
      %v4311 = vpop.f32.mrb[0].mxu0
      %4312 = vmatprep.mubr.f32.mxu0 %v3824
      %4313 = vmatmul.mubr.f32.gmra.mrb[0].mxu0 %v3823
      %v4314 = vpop.f32.mrb[0].mxu0
      %v4315 = vadd.f32 %v4178, %v4314
      %v4316 = vpop.f32.mrb[0].mxu0
      %4317 = vmatprep.mubr.f32.mxu0 %v3826
      %4318 = vmatmul.mubr.f32.gmra.mrb[0].mxu0 %v3825
      %v4319 = vpop.f32.mrb[0].mxu0
      %v4320 = vpop.f32.mrb[0].mxu0
      %4321 = vmatprep.mubr.f32.mxu0 %v3828
      %4322 = vmatmul.mubr.f32.gmra.mrb[0].mxu0 %v3827
      %v4323 = vpop.f32.mrb[0].mxu0
      %v4324 = vadd.f32 %v4187, %v4323
      %v4325 = vpop.f32.mrb[0].mxu0
      %4326 = vmatprep.mubr.f32.mxu0 %v3830
      %4327 = vmatmul.mubr.f32.gmra.mrb[0].mxu0 %v3829
      %v4328 = vpop.f32.mrb[0].mxu0
      %v4329 = vpop.f32.mrb[0].mxu0
      %4330 = vmatprep.mubr.f32.mxu0 %v3832
      %4331 = vmatmul.mubr.f32.gmra.mrb[0].mxu0 %v3831
      %v4332 = vpop.f32.mrb[0].mxu0
      %v4333 = vadd.f32 %v4196, %v4332
      %v4334 = vpop.f32.mrb[0].mxu0
      %4335 = vmatprep.mubr.f32.mxu0 %v3834
      %4336 = vmatmul.mubr.f32.gmra.mrb[0].mxu0 %v3833
      %v4337 = vpop.f32.mrb[0].mxu0
      %v4338 = vpop.f32.mrb[0].mxu0
      %4339 = vdwg.mxu0
      %v4340 = vld [vmem:[#allocation4] sm:$0xfc]
      %v4341 = vld [vmem:[#allocation4 + $0x8] sm:$0xfc]
      %v4342 = vld [vmem:[#allocation4 + $0x100] sm:$0x3]
      %v4343 = vld [vmem:[#allocation4 + $0x108] sm:$0x3]
      %s4344 = scalar_lea.vmem %s5, 512
      %v4345 = vld [vmem:[%s4344] sm:$0xff]
      %v4346 = vld [vmem:[%s4344 + $0x8] sm:$0xff]
      %v4347 = vld [vmem:[%s4344 + $0x10] sm:$0xff]
      %v4348 = vld [vmem:[%s4344 + $0x18] sm:$0xff]
      %v4349 = vld [vmem:[%s4344 + $0x20] sm:$0xff]
      %v4350 = vld [vmem:[%s4344 + $0x28] sm:$0xff]
      %v4351 = vld [vmem:[%s4344 + $0x30] sm:$0xff]
      %v4352 = vld [vmem:[%s4344 + $0x38] sm:$0xff]
      %v4353 = vld [vmem:[%s4344 + $0x40] sm:$0xff]
      %v4354 = vld [vmem:[%s4344 + $0x48] sm:$0xff]
      %v4355 = vld [vmem:[%s4344 + $0x50] sm:$0xff]
      %v4356 = vld [vmem:[%s4344 + $0x58] sm:$0xff]
      %v4357 = vld [vmem:[%s4344 + $0x60] sm:$0xff]
      %v4358 = vld [vmem:[%s4344 + $0x68] sm:$0xff]
      %v4359 = vld [vmem:[%s4344 + $0x70] sm:$0xff]
      %v4360 = vld [vmem:[%s4344 + $0x78] sm:$0xff]
      %v4361 = vld [vmem:[%s4344 + $0x80] sm:$0xff]
      %v4362 = vld [vmem:[%s4344 + $0x88] sm:$0xff]
      %v4363 = vld [vmem:[%s4344 + $0x90] sm:$0xff]
      %v4364 = vld [vmem:[%s4344 + $0x98] sm:$0xff]
      %v4365 = vld [vmem:[%s4344 + $0xa0] sm:$0xff]
      %v4366 = vld [vmem:[%s4344 + $0xa8] sm:$0xff]
      %v4367 = vld [vmem:[%s4344 + $0xb0] sm:$0xff]
      %v4368 = vld [vmem:[%s4344 + $0xb8] sm:$0xff]
      %v4369 = vld [vmem:[%s4344 + $0xc0] sm:$0xff]
      %v4370 = vld [vmem:[%s4344 + $0xc8] sm:$0xff]
      %v4371 = vld [vmem:[%s4344 + $0xd0] sm:$0xff]
      %v4372 = vld [vmem:[%s4344 + $0xd8] sm:$0xff]
      %v4373 = vld [vmem:[%s4344 + $0xe0] sm:$0xff]
      %v4374 = vld [vmem:[%s4344 + $0xe8] sm:$0xff]
      %v4375 = vld [vmem:[%s4344 + $0xf0] sm:$0xff]
      %v4376 = vld [vmem:[%s4344 + $0xf8] sm:$0xff]
      %v4381 = vrot.slane %v4340, 2
      %v4382 = vrot.slane %v3869, 2
      %v4383 = vsel %vm2591, %v4381, %v4382
      %v4384 = vrot.slane %v4341, 2
      %v4385 = vrot.slane %v3870, 2
      %v4386 = vsel %vm2591, %v4384, %v4385
      %v4387 = vrot.slane %v3871, 2
      %v4388 = vsel %vm2591, %v4382, %v4387
      %v4389 = vrot.slane %v3872, 2
      %v4390 = vsel %vm2591, %v4385, %v4389
      %v4391 = vrot.slane %v3873, 2
      %v4392 = vsel %vm2591, %v4387, %v4391
      %v4393 = vrot.slane %v3874, 2
      %v4394 = vsel %vm2591, %v4389, %v4393
      %v4395 = vrot.slane %v3875, 2
      %v4396 = vsel %vm2591, %v4391, %v4395
      %v4397 = vrot.slane %v3876, 2
      %v4398 = vsel %vm2591, %v4393, %v4397
      %v4399 = vrot.slane %v3877, 2
      %v4400 = vsel %vm2591, %v4395, %v4399
      %v4401 = vrot.slane %v3878, 2
      %v4402 = vsel %vm2591, %v4397, %v4401
      %v4403 = vrot.slane %v3879, 2
      %v4404 = vsel %vm2591, %v4399, %v4403
      %v4405 = vrot.slane %v3880, 2
      %v4406 = vsel %vm2591, %v4401, %v4405
      %v4407 = vrot.slane %v3881, 2
      %v4408 = vsel %vm2591, %v4403, %v4407
      %v4409 = vrot.slane %v3882, 2
      %v4410 = vsel %vm2591, %v4405, %v4409
      %v4411 = vrot.slane %v3883, 2
      %v4412 = vsel %vm2591, %v4407, %v4411
      %v4413 = vrot.slane %v3884, 2
      %v4414 = vsel %vm2591, %v4409, %v4413
      %v4415 = vrot.slane %v3885, 2
      %v4416 = vsel %vm2591, %v4411, %v4415
      %v4417 = vrot.slane %v3886, 2
      %v4418 = vsel %vm2591, %v4413, %v4417
      %v4419 = vrot.slane %v3887, 2
      %v4420 = vsel %vm2591, %v4415, %v4419
      %v4421 = vrot.slane %v3888, 2
      %v4422 = vsel %vm2591, %v4417, %v4421
      %v4423 = vrot.slane %v3889, 2
      %v4424 = vsel %vm2591, %v4419, %v4423
      %v4425 = vrot.slane %v3890, 2
      %v4426 = vsel %vm2591, %v4421, %v4425
      %v4427 = vrot.slane %v3891, 2
      %v4428 = vsel %vm2591, %v4423, %v4427
      %v4429 = vrot.slane %v3892, 2
      %v4430 = vsel %vm2591, %v4425, %v4429
      %v4431 = vrot.slane %v3893, 2
      %v4432 = vsel %vm2591, %v4427, %v4431
      %v4433 = vrot.slane %v3894, 2
      %v4434 = vsel %vm2591, %v4429, %v4433
      %v4435 = vrot.slane %v3895, 2
      %v4436 = vsel %vm2591, %v4431, %v4435
      %v4437 = vrot.slane %v3896, 2
      %v4438 = vsel %vm2591, %v4433, %v4437
      %v4439 = vrot.slane %v3897, 2
      %v4440 = vsel %vm2591, %v4435, %v4439
      %v4441 = vrot.slane %v3898, 2
      %v4442 = vsel %vm2591, %v4437, %v4441
      %v4443 = vrot.slane %v4342, 2
      %v4444 = vsel %vm2591, %v4439, %v4443
      %v4445 = vrot.slane %v4343, 2
      %v4446 = vsel %vm2591, %v4441, %v4445
      %4479 = vmatprep.subr.mxu0 0.0
      %4480 = vmatpush1.msra.mxu0 %v4345
      %4481 = vmatprep.subr.mxu0 0.0
      %4482 = vmatpush1.msra.mxu0 %v4346
      %4483 = vmatprep.subr.mxu0 0.0
      %4484 = vmatpush1.msra.mxu0 %v4347
      %4485 = vmatprep.subr.mxu0 0.0
      %4486 = vmatpush1.msra.mxu0 %v4348
      %4487 = vmatprep.subr.mxu0 0.0
      %4488 = vmatpush1.msra.mxu0 %v4349
      %4489 = vmatprep.subr.mxu0 0.0
      %4490 = vmatpush1.msra.mxu0 %v4350
      %4491 = vmatprep.subr.mxu0 0.0
      %4492 = vmatpush1.msra.mxu0 %v4351
      %4493 = vmatprep.subr.mxu0 0.0
      %4494 = vmatpush1.msra.mxu0 %v4352
      %4495 = vmatprep.subr.mxu0 0.0
      %4496 = vmatpush1.msra.mxu0 %v4353
      %4497 = vmatprep.subr.mxu0 0.0
      %4498 = vmatpush1.msra.mxu0 %v4354
      %4499 = vmatprep.subr.mxu0 0.0
      %4500 = vmatpush1.msra.mxu0 %v4355
      %4501 = vmatprep.subr.mxu0 0.0
      %4502 = vmatpush1.msra.mxu0 %v4356
      %4503 = vmatprep.subr.mxu0 0.0
      %4504 = vmatpush1.msra.mxu0 %v4357
      %4505 = vmatprep.subr.mxu0 0.0
      %4506 = vmatpush1.msra.mxu0 %v4358
      %4507 = vmatprep.subr.mxu0 0.0
      %4508 = vmatpush1.msra.mxu0 %v4359
      %4509 = vmatprep.subr.mxu0 0.0
      %4510 = vmatpush1.msra.mxu0 %v4360
      %4511 = vmatprep.subr.mxu0 0.0
      %4512 = vmatpush1.msra.mxu0 %v4361
      %4513 = vmatprep.subr.mxu0 0.0
      %4514 = vmatpush1.msra.mxu0 %v4362
      %4515 = vmatprep.subr.mxu0 0.0
      %4516 = vmatpush1.msra.mxu0 %v4363
      %4517 = vmatprep.subr.mxu0 0.0
      %4518 = vmatpush1.msra.mxu0 %v4364
      %4519 = vmatprep.subr.mxu0 0.0
      %4520 = vmatpush1.msra.mxu0 %v4365
      %4521 = vmatprep.subr.mxu0 0.0
      %4522 = vmatpush1.msra.mxu0 %v4366
      %4523 = vmatprep.subr.mxu0 0.0
      %4524 = vmatpush1.msra.mxu0 %v4367
      %4525 = vmatprep.subr.mxu0 0.0
      %4526 = vmatpush1.msra.mxu0 %v4368
      %4527 = vmatprep.subr.mxu0 0.0
      %4528 = vmatpush1.msra.mxu0 %v4369
      %4529 = vmatprep.subr.mxu0 0.0
      %4530 = vmatpush1.msra.mxu0 %v4370
      %4531 = vmatprep.subr.mxu0 0.0
      %4532 = vmatpush1.msra.mxu0 %v4371
      %4533 = vmatprep.subr.mxu0 0.0
      %4534 = vmatpush1.msra.mxu0 %v4372
      %4535 = vmatprep.subr.mxu0 0.0
      %4536 = vmatpush1.msra.mxu0 %v4373
      %4537 = vmatprep.subr.mxu0 0.0
      %4538 = vmatpush1.msra.mxu0 %v4374
      %4539 = vmatprep.subr.mxu0 0.0
      %4540 = vmatpush1.msra.mxu0 %v4375
      %4541 = vmatprep.subr.mxu0 0.0
      %4542 = vmatpush1.msra.mxu0 %v4376
      %4543 = vmatprep.mubr.f32.mxu0 %v4386
      %4544 = vmatmul.mubr.f32.gmra.mrb[0].mxu0 %v4383
      %v4545 = vpop.f32.mrb[0].mxu0
      %v4546 = vadd.f32 0.0, %v4545
      %v4547 = vpop.f32.mrb[0].mxu0
      %4548 = vmatprep.mubr.f32.mxu0 %v4390
      %4549 = vmatmul.mubr.f32.gmra.mrb[0].mxu0 %v4388
      %v4550 = vpop.f32.mrb[0].mxu0
      %v4551 = vpop.f32.mrb[0].mxu0
      %4552 = vmatprep.mubr.f32.mxu0 %v4394
      %4553 = vmatmul.mubr.f32.gmra.mrb[0].mxu0 %v4392
      %v4554 = vpop.f32.mrb[0].mxu0
      %v4555 = vadd.f32 0.0, %v4554
      %v4556 = vpop.f32.mrb[0].mxu0
      %4557 = vmatprep.mubr.f32.mxu0 %v4398
      %4558 = vmatmul.mubr.f32.gmra.mrb[0].mxu0 %v4396
      %v4559 = vpop.f32.mrb[0].mxu0
      %v4560 = vpop.f32.mrb[0].mxu0
      %4561 = vmatprep.mubr.f32.mxu0 %v4402
      %4562 = vmatmul.mubr.f32.gmra.mrb[0].mxu0 %v4400
      %v4563 = vpop.f32.mrb[0].mxu0
      %v4564 = vadd.f32 0.0, %v4563
      %v4565 = vpop.f32.mrb[0].mxu0
      %4566 = vmatprep.mubr.f32.mxu0 %v4406
      %4567 = vmatmul.mubr.f32.gmra.mrb[0].mxu0 %v4404
      %v4568 = vpop.f32.mrb[0].mxu0
      %v4569 = vpop.f32.mrb[0].mxu0
      %4570 = vmatprep.mubr.f32.mxu0 %v4410
      %4571 = vmatmul.mubr.f32.gmra.mrb[0].mxu0 %v4408
      %v4572 = vpop.f32.mrb[0].mxu0
      %v4573 = vadd.f32 0.0, %v4572
      %v4574 = vpop.f32.mrb[0].mxu0
      %4575 = vmatprep.mubr.f32.mxu0 %v4414
      %4576 = vmatmul.mubr.f32.gmra.mrb[0].mxu0 %v4412
      %v4577 = vpop.f32.mrb[0].mxu0
      %v4578 = vpop.f32.mrb[0].mxu0
      %4579 = vmatprep.mubr.f32.mxu0 %v4418
      %4580 = vmatmul.mubr.f32.gmra.mrb[0].mxu0 %v4416
      %v4581 = vpop.f32.mrb[0].mxu0
      %v4582 = vadd.f32 0.0, %v4581
      %v4583 = vpop.f32.mrb[0].mxu0
      %4584 = vmatprep.mubr.f32.mxu0 %v4422
      %4585 = vmatmul.mubr.f32.gmra.mrb[0].mxu0 %v4420
      %v4586 = vpop.f32.mrb[0].mxu0
      %v4587 = vpop.f32.mrb[0].mxu0
      %4588 = vmatprep.mubr.f32.mxu0 %v4426
      %4589 = vmatmul.mubr.f32.gmra.mrb[0].mxu0 %v4424
      %v4590 = vpop.f32.mrb[0].mxu0
      %v4591 = vadd.f32 0.0, %v4590
      %v4592 = vpop.f32.mrb[0].mxu0
      %4593 = vmatprep.mubr.f32.mxu0 %v4430
      %4594 = vmatmul.mubr.f32.gmra.mrb[0].mxu0 %v4428
      %v4595 = vpop.f32.mrb[0].mxu0
      %v4596 = vpop.f32.mrb[0].mxu0
      %4597 = vmatprep.mubr.f32.mxu0 %v4434
      %4598 = vmatmul.mubr.f32.gmra.mrb[0].mxu0 %v4432
      %v4599 = vpop.f32.mrb[0].mxu0
      %v4600 = vadd.f32 0.0, %v4599
      %v4601 = vpop.f32.mrb[0].mxu0
      %4602 = vmatprep.mubr.f32.mxu0 %v4438
      %4603 = vmatmul.mubr.f32.gmra.mrb[0].mxu0 %v4436
      %v4604 = vpop.f32.mrb[0].mxu0
      %v4605 = vpop.f32.mrb[0].mxu0
      %4606 = vmatprep.mubr.f32.mxu0 %v4442
      %4607 = vmatmul.mubr.f32.gmra.mrb[0].mxu0 %v4440
      %v4608 = vpop.f32.mrb[0].mxu0
      %v4609 = vadd.f32 0.0, %v4608
      %v4610 = vpop.f32.mrb[0].mxu0
      %4611 = vmatprep.mubr.f32.mxu0 %v4446
      %4612 = vmatmul.mubr.f32.gmra.mrb[0].mxu0 %v4444
      %v4613 = vpop.f32.mrb[0].mxu0
      %v4614 = vpop.f32.mrb[0].mxu0
      %4615 = vdwg.mxu0
      %v4616 = vadd.f32 %v4270, %v4546
      %v4617 = vadd.f32 %v4279, %v4555
      %v4618 = vadd.f32 %v4288, %v4564
      %v4619 = vadd.f32 %v4297, %v4573
      %v4620 = vadd.f32 %v4306, %v4582
      %v4621 = vadd.f32 %v4315, %v4591
      %v4622 = vadd.f32 %v4324, %v4600
      %v4623 = vadd.f32 %v4333, %v4609
      %v4624 = vld [vmem:[#allocation4] sm:$0xf8]
      %v4625 = vld [vmem:[#allocation4 + $0x8] sm:$0xf8]
      %v4626 = vld [vmem:[#allocation4 + $0x100] sm:$0x7]
      %v4627 = vld [vmem:[#allocation4 + $0x108] sm:$0x7]
      %s4628 = scalar_lea.vmem %s5, 768
      %v4629 = vld [vmem:[%s4628] sm:$0xff]
      %v4630 = vld [vmem:[%s4628 + $0x8] sm:$0xff]
      %v4631 = vld [vmem:[%s4628 + $0x10] sm:$0xff]
      %v4632 = vld [vmem:[%s4628 + $0x18] sm:$0xff]
      %v4633 = vld [vmem:[%s4628 + $0x20] sm:$0xff]
      %v4634 = vld [vmem:[%s4628 + $0x28] sm:$0xff]
      %v4635 = vld [vmem:[%s4628 + $0x30] sm:$0xff]
      %v4636 = vld [vmem:[%s4628 + $0x38] sm:$0xff]
      %v4637 = vld [vmem:[%s4628 + $0x40] sm:$0xff]
      %v4638 = vld [vmem:[%s4628 + $0x48] sm:$0xff]
      %v4639 = vld [vmem:[%s4628 + $0x50] sm:$0xff]
      %v4640 = vld [vmem:[%s4628 + $0x58] sm:$0xff]
      %v4641 = vld [vmem:[%s4628 + $0x60] sm:$0xff]
      %v4642 = vld [vmem:[%s4628 + $0x68] sm:$0xff]
      %v4643 = vld [vmem:[%s4628 + $0x70] sm:$0xff]
      %v4644 = vld [vmem:[%s4628 + $0x78] sm:$0xff]
      %v4645 = vld [vmem:[%s4628 + $0x80] sm:$0xff]
      %v4646 = vld [vmem:[%s4628 + $0x88] sm:$0xff]
      %v4647 = vld [vmem:[%s4628 + $0x90] sm:$0xff]
      %v4648 = vld [vmem:[%s4628 + $0x98] sm:$0xff]
      %v4649 = vld [vmem:[%s4628 + $0xa0] sm:$0xff]
      %v4650 = vld [vmem:[%s4628 + $0xa8] sm:$0xff]
      %v4651 = vld [vmem:[%s4628 + $0xb0] sm:$0xff]
      %v4652 = vld [vmem:[%s4628 + $0xb8] sm:$0xff]
      %v4653 = vld [vmem:[%s4628 + $0xc0] sm:$0xff]
      %v4654 = vld [vmem:[%s4628 + $0xc8] sm:$0xff]
      %v4655 = vld [vmem:[%s4628 + $0xd0] sm:$0xff]
      %v4656 = vld [vmem:[%s4628 + $0xd8] sm:$0xff]
      %v4657 = vld [vmem:[%s4628 + $0xe0] sm:$0xff]
      %v4658 = vld [vmem:[%s4628 + $0xe8] sm:$0xff]
      %v4659 = vld [vmem:[%s4628 + $0xf0] sm:$0xff]
      %v4660 = vld [vmem:[%s4628 + $0xf8] sm:$0xff]
      %v4665 = vrot.slane %v4624, 3
      %v4666 = vrot.slane %v3869, 3
      %v4667 = vsel %vm2956, %v4665, %v4666
      %v4668 = vrot.slane %v4625, 3
      %v4669 = vrot.slane %v3870, 3
      %v4670 = vsel %vm2956, %v4668, %v4669
      %v4671 = vrot.slane %v3871, 3
      %v4672 = vsel %vm2956, %v4666, %v4671
      %v4673 = vrot.slane %v3872, 3
      %v4674 = vsel %vm2956, %v4669, %v4673
      %v4675 = vrot.slane %v3873, 3
      %v4676 = vsel %vm2956, %v4671, %v4675
      %v4677 = vrot.slane %v3874, 3
      %v4678 = vsel %vm2956, %v4673, %v4677
      %v4679 = vrot.slane %v3875, 3
      %v4680 = vsel %vm2956, %v4675, %v4679
      %v4681 = vrot.slane %v3876, 3
      %v4682 = vsel %vm2956, %v4677, %v4681
      %v4683 = vrot.slane %v3877, 3
      %v4684 = vsel %vm2956, %v4679, %v4683
      %v4685 = vrot.slane %v3878, 3
      %v4686 = vsel %vm2956, %v4681, %v4685
      %v4687 = vrot.slane %v3879, 3
      %v4688 = vsel %vm2956, %v4683, %v4687
      %v4689 = vrot.slane %v3880, 3
      %v4690 = vsel %vm2956, %v4685, %v4689
      %v4691 = vrot.slane %v3881, 3
      %v4692 = vsel %vm2956, %v4687, %v4691
      %v4693 = vrot.slane %v3882, 3
      %v4694 = vsel %vm2956, %v4689, %v4693
      %v4695 = vrot.slane %v3883, 3
      %v4696 = vsel %vm2956, %v4691, %v4695
      %v4697 = vrot.slane %v3884, 3
      %v4698 = vsel %vm2956, %v4693, %v4697
      %v4699 = vrot.slane %v3885, 3
      %v4700 = vsel %vm2956, %v4695, %v4699
      %v4701 = vrot.slane %v3886, 3
      %v4702 = vsel %vm2956, %v4697, %v4701
      %v4703 = vrot.slane %v3887, 3
      %v4704 = vsel %vm2956, %v4699, %v4703
      %v4705 = vrot.slane %v3888, 3
      %v4706 = vsel %vm2956, %v4701, %v4705
      %v4707 = vrot.slane %v3889, 3
      %v4708 = vsel %vm2956, %v4703, %v4707
      %v4709 = vrot.slane %v3890, 3
      %v4710 = vsel %vm2956, %v4705, %v4709
      %v4711 = vrot.slane %v3891, 3
      %v4712 = vsel %vm2956, %v4707, %v4711
      %v4713 = vrot.slane %v3892, 3
      %v4714 = vsel %vm2956, %v4709, %v4713
      %v4715 = vrot.slane %v3893, 3
      %v4716 = vsel %vm2956, %v4711, %v4715
      %v4717 = vrot.slane %v3894, 3
      %v4718 = vsel %vm2956, %v4713, %v4717
      %v4719 = vrot.slane %v3895, 3
      %v4720 = vsel %vm2956, %v4715, %v4719
      %v4721 = vrot.slane %v3896, 3
      %v4722 = vsel %vm2956, %v4717, %v4721
      %v4723 = vrot.slane %v3897, 3
      %v4724 = vsel %vm2956, %v4719, %v4723
      %v4725 = vrot.slane %v3898, 3
      %v4726 = vsel %vm2956, %v4721, %v4725
      %v4727 = vrot.slane %v4626, 3
      %v4728 = vsel %vm2956, %v4723, %v4727
      %v4729 = vrot.slane %v4627, 3
      %v4730 = vsel %vm2956, %v4725, %v4729
      %4763 = vmatprep.subr.mxu0 0.0
      %4764 = vmatpush1.msra.mxu0 %v4629
      %4765 = vmatprep.subr.mxu0 0.0
      %4766 = vmatpush1.msra.mxu0 %v4630
      %4767 = vmatprep.subr.mxu0 0.0
      %4768 = vmatpush1.msra.mxu0 %v4631
      %4769 = vmatprep.subr.mxu0 0.0
      %4770 = vmatpush1.msra.mxu0 %v4632
      %4771 = vmatprep.subr.mxu0 0.0
      %4772 = vmatpush1.msra.mxu0 %v4633
      %4773 = vmatprep.subr.mxu0 0.0
      %4774 = vmatpush1.msra.mxu0 %v4634
      %4775 = vmatprep.subr.mxu0 0.0
      %4776 = vmatpush1.msra.mxu0 %v4635
      %4777 = vmatprep.subr.mxu0 0.0
      %4778 = vmatpush1.msra.mxu0 %v4636
      %4779 = vmatprep.subr.mxu0 0.0
      %4780 = vmatpush1.msra.mxu0 %v4637
      %4781 = vmatprep.subr.mxu0 0.0
      %4782 = vmatpush1.msra.mxu0 %v4638
      %4783 = vmatprep.subr.mxu0 0.0
      %4784 = vmatpush1.msra.mxu0 %v4639
      %4785 = vmatprep.subr.mxu0 0.0
      %4786 = vmatpush1.msra.mxu0 %v4640
      %4787 = vmatprep.subr.mxu0 0.0
      %4788 = vmatpush1.msra.mxu0 %v4641
      %4789 = vmatprep.subr.mxu0 0.0
      %4790 = vmatpush1.msra.mxu0 %v4642
      %4791 = vmatprep.subr.mxu0 0.0
      %4792 = vmatpush1.msra.mxu0 %v4643
      %4793 = vmatprep.subr.mxu0 0.0
      %4794 = vmatpush1.msra.mxu0 %v4644
      %4795 = vmatprep.subr.mxu0 0.0
      %4796 = vmatpush1.msra.mxu0 %v4645
      %4797 = vmatprep.subr.mxu0 0.0
      %4798 = vmatpush1.msra.mxu0 %v4646
      %4799 = vmatprep.subr.mxu0 0.0
      %4800 = vmatpush1.msra.mxu0 %v4647
      %4801 = vmatprep.subr.mxu0 0.0
      %4802 = vmatpush1.msra.mxu0 %v4648
      %4803 = vmatprep.subr.mxu0 0.0
      %4804 = vmatpush1.msra.mxu0 %v4649
      %4805 = vmatprep.subr.mxu0 0.0
      %4806 = vmatpush1.msra.mxu0 %v4650
      %4807 = vmatprep.subr.mxu0 0.0
      %4808 = vmatpush1.msra.mxu0 %v4651
      %4809 = vmatprep.subr.mxu0 0.0
      %4810 = vmatpush1.msra.mxu0 %v4652
      %4811 = vmatprep.subr.mxu0 0.0
      %4812 = vmatpush1.msra.mxu0 %v4653
      %4813 = vmatprep.subr.mxu0 0.0
      %4814 = vmatpush1.msra.mxu0 %v4654
      %4815 = vmatprep.subr.mxu0 0.0
      %4816 = vmatpush1.msra.mxu0 %v4655
      %4817 = vmatprep.subr.mxu0 0.0
      %4818 = vmatpush1.msra.mxu0 %v4656
      %4819 = vmatprep.subr.mxu0 0.0
      %4820 = vmatpush1.msra.mxu0 %v4657
      %4821 = vmatprep.subr.mxu0 0.0
      %4822 = vmatpush1.msra.mxu0 %v4658
      %4823 = vmatprep.subr.mxu0 0.0
      %4824 = vmatpush1.msra.mxu0 %v4659
      %4825 = vmatprep.subr.mxu0 0.0
      %4826 = vmatpush1.msra.mxu0 %v4660
      %4827 = vmatprep.mubr.f32.mxu0 %v4670
      %4828 = vmatmul.mubr.f32.gmra.mrb[0].mxu0 %v4667
      %v4829 = vpop.f32.mrb[0].mxu0
      %v4830 = vadd.f32 0.0, %v4829
      %v4831 = vpop.f32.mrb[0].mxu0
      %4832 = vmatprep.mubr.f32.mxu0 %v4674
      %4833 = vmatmul.mubr.f32.gmra.mrb[0].mxu0 %v4672
      %v4834 = vpop.f32.mrb[0].mxu0
      %v4835 = vpop.f32.mrb[0].mxu0
      %4836 = vmatprep.mubr.f32.mxu0 %v4678
      %4837 = vmatmul.mubr.f32.gmra.mrb[0].mxu0 %v4676
      %v4838 = vpop.f32.mrb[0].mxu0
      %v4839 = vadd.f32 0.0, %v4838
      %v4840 = vpop.f32.mrb[0].mxu0
      %4841 = vmatprep.mubr.f32.mxu0 %v4682
      %4842 = vmatmul.mubr.f32.gmra.mrb[0].mxu0 %v4680
      %v4843 = vpop.f32.mrb[0].mxu0
      %v4844 = vpop.f32.mrb[0].mxu0
      %4845 = vmatprep.mubr.f32.mxu0 %v4686
      %4846 = vmatmul.mubr.f32.gmra.mrb[0].mxu0 %v4684
      %v4847 = vpop.f32.mrb[0].mxu0
      %v4848 = vadd.f32 0.0, %v4847
      %v4849 = vpop.f32.mrb[0].mxu0
      %4850 = vmatprep.mubr.f32.mxu0 %v4690
      %4851 = vmatmul.mubr.f32.gmra.mrb[0].mxu0 %v4688
      %v4852 = vpop.f32.mrb[0].mxu0
      %v4853 = vpop.f32.mrb[0].mxu0
      %4854 = vmatprep.mubr.f32.mxu0 %v4694
      %4855 = vmatmul.mubr.f32.gmra.mrb[0].mxu0 %v4692
      %v4856 = vpop.f32.mrb[0].mxu0
      %v4857 = vadd.f32 0.0, %v4856
      %v4858 = vpop.f32.mrb[0].mxu0
      %4859 = vmatprep.mubr.f32.mxu0 %v4698
      %4860 = vmatmul.mubr.f32.gmra.mrb[0].mxu0 %v4696
      %v4861 = vpop.f32.mrb[0].mxu0
      %v4862 = vpop.f32.mrb[0].mxu0
      %4863 = vmatprep.mubr.f32.mxu0 %v4702
      %4864 = vmatmul.mubr.f32.gmra.mrb[0].mxu0 %v4700
      %v4865 = vpop.f32.mrb[0].mxu0
      %v4866 = vadd.f32 0.0, %v4865
      %v4867 = vpop.f32.mrb[0].mxu0
      %4868 = vmatprep.mubr.f32.mxu0 %v4706
      %4869 = vmatmul.mubr.f32.gmra.mrb[0].mxu0 %v4704
      %v4870 = vpop.f32.mrb[0].mxu0
      %v4871 = vpop.f32.mrb[0].mxu0
      %4872 = vmatprep.mubr.f32.mxu0 %v4710
      %4873 = vmatmul.mubr.f32.gmra.mrb[0].mxu0 %v4708
      %v4874 = vpop.f32.mrb[0].mxu0
      %v4875 = vadd.f32 0.0, %v4874
      %v4876 = vpop.f32.mrb[0].mxu0
      %4877 = vmatprep.mubr.f32.mxu0 %v4714
      %4878 = vmatmul.mubr.f32.gmra.mrb[0].mxu0 %v4712
      %v4879 = vpop.f32.mrb[0].mxu0
      %v4880 = vpop.f32.mrb[0].mxu0
      %4881 = vmatprep.mubr.f32.mxu0 %v4718
      %4882 = vmatmul.mubr.f32.gmra.mrb[0].mxu0 %v4716
      %v4883 = vpop.f32.mrb[0].mxu0
      %v4884 = vadd.f32 0.0, %v4883
      %v4885 = vpop.f32.mrb[0].mxu0
      %4886 = vmatprep.mubr.f32.mxu0 %v4722
      %4887 = vmatmul.mubr.f32.gmra.mrb[0].mxu0 %v4720
      %v4888 = vpop.f32.mrb[0].mxu0
      %v4889 = vpop.f32.mrb[0].mxu0
      %4890 = vmatprep.mubr.f32.mxu0 %v4726
      %4891 = vmatmul.mubr.f32.gmra.mrb[0].mxu0 %v4724
      %v4892 = vpop.f32.mrb[0].mxu0
      %v4893 = vadd.f32 0.0, %v4892
      %v4894 = vpop.f32.mrb[0].mxu0
      %4895 = vmatprep.mubr.f32.mxu0 %v4730
      %4896 = vmatmul.mubr.f32.gmra.mrb[0].mxu0 %v4728
      %v4897 = vpop.f32.mrb[0].mxu0
      %v4898 = vpop.f32.mrb[0].mxu0
      %4899 = vdwg.mxu0
      %v4900 = vadd.f32 %v4616, %v4830
      %v4901 = vadd.f32 %v4617, %v4839
      %v4902 = vadd.f32 %v4618, %v4848
      %v4903 = vadd.f32 %v4619, %v4857
      %v4904 = vadd.f32 %v4620, %v4866
      %v4905 = vadd.f32 %v4621, %v4875
      %v4906 = vadd.f32 %v4622, %v4884
      %v4907 = vadd.f32 %v4623, %v4893
      %v4908 = vld [vmem:[#allocation4] sm:$0xf0]
      %v4909 = vld [vmem:[#allocation4 + $0x8] sm:$0xf0]
      %v4910 = vld [vmem:[#allocation4 + $0x100] sm:$0xf]
      %v4911 = vld [vmem:[#allocation4 + $0x108] sm:$0xf]
      %s4912 = scalar_lea.vmem %s5, 1024
      %v4913 = vld [vmem:[%s4912] sm:$0xff]
      %v4914 = vld [vmem:[%s4912 + $0x8] sm:$0xff]
      %v4915 = vld [vmem:[%s4912 + $0x10] sm:$0xff]
      %v4916 = vld [vmem:[%s4912 + $0x18] sm:$0xff]
      %v4917 = vld [vmem:[%s4912 + $0x20] sm:$0xff]
      %v4918 = vld [vmem:[%s4912 + $0x28] sm:$0xff]
      %v4919 = vld [vmem:[%s4912 + $0x30] sm:$0xff]
      %v4920 = vld [vmem:[%s4912 + $0x38] sm:$0xff]
      %v4921 = vld [vmem:[%s4912 + $0x40] sm:$0xff]
      %v4922 = vld [vmem:[%s4912 + $0x48] sm:$0xff]
      %v4923 = vld [vmem:[%s4912 + $0x50] sm:$0xff]
      %v4924 = vld [vmem:[%s4912 + $0x58] sm:$0xff]
      %v4925 = vld [vmem:[%s4912 + $0x60] sm:$0xff]
      %v4926 = vld [vmem:[%s4912 + $0x68] sm:$0xff]
      %v4927 = vld [vmem:[%s4912 + $0x70] sm:$0xff]
      %v4928 = vld [vmem:[%s4912 + $0x78] sm:$0xff]
      %v4929 = vld [vmem:[%s4912 + $0x80] sm:$0xff]
      %v4930 = vld [vmem:[%s4912 + $0x88] sm:$0xff]
      %v4931 = vld [vmem:[%s4912 + $0x90] sm:$0xff]
      %v4932 = vld [vmem:[%s4912 + $0x98] sm:$0xff]
      %v4933 = vld [vmem:[%s4912 + $0xa0] sm:$0xff]
      %v4934 = vld [vmem:[%s4912 + $0xa8] sm:$0xff]
      %v4935 = vld [vmem:[%s4912 + $0xb0] sm:$0xff]
      %v4936 = vld [vmem:[%s4912 + $0xb8] sm:$0xff]
      %v4937 = vld [vmem:[%s4912 + $0xc0] sm:$0xff]
      %v4938 = vld [vmem:[%s4912 + $0xc8] sm:$0xff]
      %v4939 = vld [vmem:[%s4912 + $0xd0] sm:$0xff]
      %v4940 = vld [vmem:[%s4912 + $0xd8] sm:$0xff]
      %v4941 = vld [vmem:[%s4912 + $0xe0] sm:$0xff]
      %v4942 = vld [vmem:[%s4912 + $0xe8] sm:$0xff]
      %v4943 = vld [vmem:[%s4912 + $0xf0] sm:$0xff]
      %v4944 = vld [vmem:[%s4912 + $0xf8] sm:$0xff]
      %v4949 = vrot.slane %v4908, 4
      %v4950 = vrot.slane %v3869, 4
      %v4951 = vsel %vm3321, %v4949, %v4950
      %v4952 = vrot.slane %v4909, 4
      %v4953 = vrot.slane %v3870, 4
      %v4954 = vsel %vm3321, %v4952, %v4953
      %v4955 = vrot.slane %v3871, 4
      %v4956 = vsel %vm3321, %v4950, %v4955
      %v4957 = vrot.slane %v3872, 4
      %v4958 = vsel %vm3321, %v4953, %v4957
      %v4959 = vrot.slane %v3873, 4
      %v4960 = vsel %vm3321, %v4955, %v4959
      %v4961 = vrot.slane %v3874, 4
      %v4962 = vsel %vm3321, %v4957, %v4961
      %v4963 = vrot.slane %v3875, 4
      %v4964 = vsel %vm3321, %v4959, %v4963
      %v4965 = vrot.slane %v3876, 4
      %v4966 = vsel %vm3321, %v4961, %v4965
      %v4967 = vrot.slane %v3877, 4
      %v4968 = vsel %vm3321, %v4963, %v4967
      %v4969 = vrot.slane %v3878, 4
      %v4970 = vsel %vm3321, %v4965, %v4969
      %v4971 = vrot.slane %v3879, 4
      %v4972 = vsel %vm3321, %v4967, %v4971
      %v4973 = vrot.slane %v3880, 4
      %v4974 = vsel %vm3321, %v4969, %v4973
      %v4975 = vrot.slane %v3881, 4
      %v4976 = vsel %vm3321, %v4971, %v4975
      %v4977 = vrot.slane %v3882, 4
      %v4978 = vsel %vm3321, %v4973, %v4977
      %v4979 = vrot.slane %v3883, 4
      %v4980 = vsel %vm3321, %v4975, %v4979
      %v4981 = vrot.slane %v3884, 4
      %v4982 = vsel %vm3321, %v4977, %v4981
      %v4983 = vrot.slane %v3885, 4
      %v4984 = vsel %vm3321, %v4979, %v4983
      %v4985 = vrot.slane %v3886, 4
      %v4986 = vsel %vm3321, %v4981, %v4985
      %v4987 = vrot.slane %v3887, 4
      %v4988 = vsel %vm3321, %v4983, %v4987
      %v4989 = vrot.slane %v3888, 4
      %v4990 = vsel %vm3321, %v4985, %v4989
      %v4991 = vrot.slane %v3889, 4
      %v4992 = vsel %vm3321, %v4987, %v4991
      %v4993 = vrot.slane %v3890, 4
      %v4994 = vsel %vm3321, %v4989, %v4993
      %v4995 = vrot.slane %v3891, 4
      %v4996 = vsel %vm3321, %v4991, %v4995
      %v4997 = vrot.slane %v3892, 4
      %v4998 = vsel %vm3321, %v4993, %v4997
      %v4999 = vrot.slane %v3893, 4
      %v5000 = vsel %vm3321, %v4995, %v4999
      %v5001 = vrot.slane %v3894, 4
      %v5002 = vsel %vm3321, %v4997, %v5001
      %v5003 = vrot.slane %v3895, 4
      %v5004 = vsel %vm3321, %v4999, %v5003
      %v5005 = vrot.slane %v3896, 4
      %v5006 = vsel %vm3321, %v5001, %v5005
      %v5007 = vrot.slane %v3897, 4
      %v5008 = vsel %vm3321, %v5003, %v5007
      %v5009 = vrot.slane %v3898, 4
      %v5010 = vsel %vm3321, %v5005, %v5009
      %v5011 = vrot.slane %v4910, 4
      %v5012 = vsel %vm3321, %v5007, %v5011
      %v5013 = vrot.slane %v4911, 4
      %v5014 = vsel %vm3321, %v5009, %v5013
      %5047 = vmatprep.subr.mxu0 0.0
      %5048 = vmatpush1.msra.mxu0 %v4913
      %5049 = vmatprep.subr.mxu0 0.0
      %5050 = vmatpush1.msra.mxu0 %v4914
      %5051 = vmatprep.subr.mxu0 0.0
      %5052 = vmatpush1.msra.mxu0 %v4915
      %5053 = vmatprep.subr.mxu0 0.0
      %5054 = vmatpush1.msra.mxu0 %v4916
      %5055 = vmatprep.subr.mxu0 0.0
      %5056 = vmatpush1.msra.mxu0 %v4917
      %5057 = vmatprep.subr.mxu0 0.0
      %5058 = vmatpush1.msra.mxu0 %v4918
      %5059 = vmatprep.subr.mxu0 0.0
      %5060 = vmatpush1.msra.mxu0 %v4919
      %5061 = vmatprep.subr.mxu0 0.0
      %5062 = vmatpush1.msra.mxu0 %v4920
      %5063 = vmatprep.subr.mxu0 0.0
      %5064 = vmatpush1.msra.mxu0 %v4921
      %5065 = vmatprep.subr.mxu0 0.0
      %5066 = vmatpush1.msra.mxu0 %v4922
      %5067 = vmatprep.subr.mxu0 0.0
      %5068 = vmatpush1.msra.mxu0 %v4923
      %5069 = vmatprep.subr.mxu0 0.0
      %5070 = vmatpush1.msra.mxu0 %v4924
      %5071 = vmatprep.subr.mxu0 0.0
      %5072 = vmatpush1.msra.mxu0 %v4925
      %5073 = vmatprep.subr.mxu0 0.0
      %5074 = vmatpush1.msra.mxu0 %v4926
      %5075 = vmatprep.subr.mxu0 0.0
      %5076 = vmatpush1.msra.mxu0 %v4927
      %5077 = vmatprep.subr.mxu0 0.0
      %5078 = vmatpush1.msra.mxu0 %v4928
      %5079 = vmatprep.subr.mxu0 0.0
      %5080 = vmatpush1.msra.mxu0 %v4929
      %5081 = vmatprep.subr.mxu0 0.0
      %5082 = vmatpush1.msra.mxu0 %v4930
      %5083 = vmatprep.subr.mxu0 0.0
      %5084 = vmatpush1.msra.mxu0 %v4931
      %5085 = vmatprep.subr.mxu0 0.0
      %5086 = vmatpush1.msra.mxu0 %v4932
      %5087 = vmatprep.subr.mxu0 0.0
      %5088 = vmatpush1.msra.mxu0 %v4933
      %5089 = vmatprep.subr.mxu0 0.0
      %5090 = vmatpush1.msra.mxu0 %v4934
      %5091 = vmatprep.subr.mxu0 0.0
      %5092 = vmatpush1.msra.mxu0 %v4935
      %5093 = vmatprep.subr.mxu0 0.0
      %5094 = vmatpush1.msra.mxu0 %v4936
      %5095 = vmatprep.subr.mxu0 0.0
      %5096 = vmatpush1.msra.mxu0 %v4937
      %5097 = vmatprep.subr.mxu0 0.0
      %5098 = vmatpush1.msra.mxu0 %v4938
      %5099 = vmatprep.subr.mxu0 0.0
      %5100 = vmatpush1.msra.mxu0 %v4939
      %5101 = vmatprep.subr.mxu0 0.0
      %5102 = vmatpush1.msra.mxu0 %v4940
      %5103 = vmatprep.subr.mxu0 0.0
      %5104 = vmatpush1.msra.mxu0 %v4941
      %5105 = vmatprep.subr.mxu0 0.0
      %5106 = vmatpush1.msra.mxu0 %v4942
      %5107 = vmatprep.subr.mxu0 0.0
      %5108 = vmatpush1.msra.mxu0 %v4943
      %5109 = vmatprep.subr.mxu0 0.0
      %5110 = vmatpush1.msra.mxu0 %v4944
      %5111 = vmatprep.mubr.f32.mxu0 %v4954
      %5112 = vmatmul.mubr.f32.gmra.mrb[0].mxu0 %v4951
      %v5113 = vpop.f32.mrb[0].mxu0
      %v5114 = vadd.f32 0.0, %v5113
      %v5115 = vpop.f32.mrb[0].mxu0
      %5116 = vmatprep.mubr.f32.mxu0 %v4958
      %5117 = vmatmul.mubr.f32.gmra.mrb[0].mxu0 %v4956
      %v5118 = vpop.f32.mrb[0].mxu0
      %v5119 = vpop.f32.mrb[0].mxu0
      %5120 = vmatprep.mubr.f32.mxu0 %v4962
      %5121 = vmatmul.mubr.f32.gmra.mrb[0].mxu0 %v4960
      %v5122 = vpop.f32.mrb[0].mxu0
      %v5123 = vadd.f32 0.0, %v5122
      %v5124 = vpop.f32.mrb[0].mxu0
      %5125 = vmatprep.mubr.f32.mxu0 %v4966
      %5126 = vmatmul.mubr.f32.gmra.mrb[0].mxu0 %v4964
      %v5127 = vpop.f32.mrb[0].mxu0
      %v5128 = vpop.f32.mrb[0].mxu0
      %5129 = vmatprep.mubr.f32.mxu0 %v4970
      %5130 = vmatmul.mubr.f32.gmra.mrb[0].mxu0 %v4968
      %v5131 = vpop.f32.mrb[0].mxu0
      %v5132 = vadd.f32 0.0, %v5131
      %v5133 = vpop.f32.mrb[0].mxu0
      %5134 = vmatprep.mubr.f32.mxu0 %v4974
      %5135 = vmatmul.mubr.f32.gmra.mrb[0].mxu0 %v4972
      %v5136 = vpop.f32.mrb[0].mxu0
      %v5137 = vpop.f32.mrb[0].mxu0
      %5138 = vmatprep.mubr.f32.mxu0 %v4978
      %5139 = vmatmul.mubr.f32.gmra.mrb[0].mxu0 %v4976
      %v5140 = vpop.f32.mrb[0].mxu0
      %v5141 = vadd.f32 0.0, %v5140
      %v5142 = vpop.f32.mrb[0].mxu0
      %5143 = vmatprep.mubr.f32.mxu0 %v4982
      %5144 = vmatmul.mubr.f32.gmra.mrb[0].mxu0 %v4980
      %v5145 = vpop.f32.mrb[0].mxu0
      %v5146 = vpop.f32.mrb[0].mxu0
      %5147 = vmatprep.mubr.f32.mxu0 %v4986
      %5148 = vmatmul.mubr.f32.gmra.mrb[0].mxu0 %v4984
      %v5149 = vpop.f32.mrb[0].mxu0
      %v5150 = vadd.f32 0.0, %v5149
      %v5151 = vpop.f32.mrb[0].mxu0
      %5152 = vmatprep.mubr.f32.mxu0 %v4990
      %5153 = vmatmul.mubr.f32.gmra.mrb[0].mxu0 %v4988
      %v5154 = vpop.f32.mrb[0].mxu0
      %v5155 = vpop.f32.mrb[0].mxu0
      %5156 = vmatprep.mubr.f32.mxu0 %v4994
      %5157 = vmatmul.mubr.f32.gmra.mrb[0].mxu0 %v4992
      %v5158 = vpop.f32.mrb[0].mxu0
      %v5159 = vadd.f32 0.0, %v5158
      %v5160 = vpop.f32.mrb[0].mxu0
      %5161 = vmatprep.mubr.f32.mxu0 %v4998
      %5162 = vmatmul.mubr.f32.gmra.mrb[0].mxu0 %v4996
      %v5163 = vpop.f32.mrb[0].mxu0
      %v5164 = vpop.f32.mrb[0].mxu0
      %5165 = vmatprep.mubr.f32.mxu0 %v5002
      %5166 = vmatmul.mubr.f32.gmra.mrb[0].mxu0 %v5000
      %v5167 = vpop.f32.mrb[0].mxu0
      %v5168 = vadd.f32 0.0, %v5167
      %v5169 = vpop.f32.mrb[0].mxu0
      %5170 = vmatprep.mubr.f32.mxu0 %v5006
      %5171 = vmatmul.mubr.f32.gmra.mrb[0].mxu0 %v5004
      %v5172 = vpop.f32.mrb[0].mxu0
      %v5173 = vpop.f32.mrb[0].mxu0
      %5174 = vmatprep.mubr.f32.mxu0 %v5010
      %5175 = vmatmul.mubr.f32.gmra.mrb[0].mxu0 %v5008
      %v5176 = vpop.f32.mrb[0].mxu0
      %v5177 = vadd.f32 0.0, %v5176
      %v5178 = vpop.f32.mrb[0].mxu0
      %5179 = vmatprep.mubr.f32.mxu0 %v5014
      %5180 = vmatmul.mubr.f32.gmra.mrb[0].mxu0 %v5012
      %v5181 = vpop.f32.mrb[0].mxu0
      %v5182 = vpop.f32.mrb[0].mxu0
      %5183 = vdwg.mxu0
      %v5184 = vadd.f32 %v4900, %v5114
      %v5185 = vadd.f32 %v4901, %v5123
      %v5186 = vadd.f32 %v4902, %v5132
      %v5187 = vadd.f32 %v4903, %v5141
      %v5188 = vadd.f32 %v4904, %v5150
      %v5189 = vadd.f32 %v4905, %v5159
      %v5190 = vadd.f32 %v4906, %v5168
      %v5191 = vadd.f32 %v4907, %v5177
      %v5192 = vld [vmem:[%s6] sm:$0x1]
      %v5194 = vlaneseq
      %v5195 = vshrl.u32 %v5194, 7
      %v5196 = vsub.s32 0, %v5195
      %v5197 = vrot.slane %v5192, %v5196
      %v5199 = vadd.f32 %v5184, %v5197
      %v5200 = vadd.f32 %v5185, %v5197
      %v5201 = vadd.f32 %v5186, %v5197
      %v5202 = vadd.f32 %v5187, %v5197
      %v5203 = vadd.f32 %v5188, %v5197
      %v5204 = vadd.f32 %v5189, %v5197
      %v5205 = vadd.f32 %v5190, %v5197
      %v5206 = vadd.f32 %v5191, %v5197
      %vm5207 = vcmp.gt.f32.partialorder %v5199, 0.0
      %vm5208 = vcmp.gt.f32.partialorder %v5200, 0.0
      %vm5209 = vcmp.gt.f32.partialorder %v5201, 0.0
      %vm5210 = vcmp.gt.f32.partialorder %v5202, 0.0
      %vm5211 = vcmp.gt.f32.partialorder %v5203, 0.0
      %vm5212 = vcmp.gt.f32.partialorder %v5204, 0.0
      %vm5213 = vcmp.gt.f32.partialorder %v5205, 0.0
      %vm5214 = vcmp.gt.f32.partialorder %v5206, 0.0
      %v5215 = vmul.f32 %v5199, 0.2
      %v5216 = vmul.f32 %v5200, 0.2
      %v5217 = vmul.f32 %v5201, 0.2
      %v5218 = vmul.f32 %v5202, 0.2
      %v5219 = vmul.f32 %v5203, 0.2
      %v5220 = vmul.f32 %v5204, 0.2
      %v5221 = vmul.f32 %v5205, 0.2
      %v5222 = vmul.f32 %v5206, 0.2
      %v5223 = vsel %vm5207, %v5199, %v5215
      %v5224 = vsel %vm5208, %v5200, %v5216
      %v5225 = vsel %vm5209, %v5201, %v5217
      %v5226 = vsel %vm5210, %v5202, %v5218
      %v5227 = vsel %vm5211, %v5203, %v5219
      %v5228 = vsel %vm5212, %v5204, %v5220
      %v5229 = vsel %vm5213, %v5205, %v5221
      %v5230 = vsel %vm5214, %v5206, %v5222
      %5239 = vrot.lane.b32.xlu0 %v5223, 96
      %v5240 = vpop.permute.xlu0 %5239
      %5241 = vrot.lane.b32.xlu0 %v5224, 96
      %v5242 = vpop.permute.xlu0 %5241
      %5243 = vrot.lane.b32.xlu0 %v5225, 96
      %v5244 = vpop.permute.xlu0 %5243
      %5245 = vrot.lane.b32.xlu0 %v5226, 96
      %v5246 = vpop.permute.xlu0 %5245
      %5247 = vrot.lane.b32.xlu0 %v5227, 96
      %v5248 = vpop.permute.xlu0 %5247
      %5249 = vrot.lane.b32.xlu0 %v5228, 96
      %v5250 = vpop.permute.xlu0 %5249
      %5251 = vrot.lane.b32.xlu0 %v5229, 96
      %v5252 = vpop.permute.xlu0 %5251
      %5253 = vrot.lane.b32.xlu0 %v5230, 96
      %v5254 = vpop.permute.xlu0 %5253
      %v5263 = vmax.f32 %v5223, %v5240
      %v5264 = vmax.f32 %v5224, %v5242
      %v5265 = vmax.f32 %v5225, %v5244
      %v5266 = vmax.f32 %v5226, %v5246
      %v5267 = vmax.f32 %v5227, %v5248
      %v5268 = vmax.f32 %v5228, %v5250
      %v5269 = vmax.f32 %v5229, %v5252
      %v5270 = vmax.f32 %v5230, %v5254
      %5271 = vrot.lane.b32.xlu0 %v5223, 64
      %v5272 = vpop.permute.xlu0 %5271
      %5273 = vrot.lane.b32.xlu0 %v5224, 64
      %v5274 = vpop.permute.xlu0 %5273
      %5275 = vrot.lane.b32.xlu0 %v5225, 64
      %v5276 = vpop.permute.xlu0 %5275
      %5277 = vrot.lane.b32.xlu0 %v5226, 64
      %v5278 = vpop.permute.xlu0 %5277
      %5279 = vrot.lane.b32.xlu0 %v5227, 64
      %v5280 = vpop.permute.xlu0 %5279
      %5281 = vrot.lane.b32.xlu0 %v5228, 64
      %v5282 = vpop.permute.xlu0 %5281
      %5283 = vrot.lane.b32.xlu0 %v5229, 64
      %v5284 = vpop.permute.xlu0 %5283
      %5285 = vrot.lane.b32.xlu0 %v5230, 64
      %v5286 = vpop.permute.xlu0 %5285
      %v5295 = vmax.f32 %v5263, %v5272
      %v5296 = vmax.f32 %v5264, %v5274
      %v5297 = vmax.f32 %v5265, %v5276
      %v5298 = vmax.f32 %v5266, %v5278
      %v5299 = vmax.f32 %v5267, %v5280
      %v5300 = vmax.f32 %v5268, %v5282
      %v5301 = vmax.f32 %v5269, %v5284
      %v5302 = vmax.f32 %v5270, %v5286
      %5303 = vrot.lane.b32.xlu0 %v5223, 32
      %v5304 = vpop.permute.xlu0 %5303
      %5305 = vrot.lane.b32.xlu0 %v5224, 32
      %v5306 = vpop.permute.xlu0 %5305
      %5307 = vrot.lane.b32.xlu0 %v5225, 32
      %v5308 = vpop.permute.xlu0 %5307
      %5309 = vrot.lane.b32.xlu0 %v5226, 32
      %v5310 = vpop.permute.xlu0 %5309
      %5311 = vrot.lane.b32.xlu0 %v5227, 32
      %v5312 = vpop.permute.xlu0 %5311
      %5313 = vrot.lane.b32.xlu0 %v5228, 32
      %v5314 = vpop.permute.xlu0 %5313
      %5315 = vrot.lane.b32.xlu0 %v5229, 32
      %v5316 = vpop.permute.xlu0 %5315
      %5317 = vrot.lane.b32.xlu0 %v5230, 32
      %v5318 = vpop.permute.xlu0 %5317
      %v5327 = vmax.f32 %v5295, %v5304
      %v5328 = vmax.f32 %v5296, %v5306
      %v5329 = vmax.f32 %v5297, %v5308
      %v5330 = vmax.f32 %v5298, %v5310
      %v5331 = vmax.f32 %v5299, %v5312
      %v5332 = vmax.f32 %v5300, %v5314
      %v5333 = vmax.f32 %v5301, %v5316
      %v5334 = vmax.f32 %v5302, %v5318
      %vm5335 = vcmask 257024
      %v5336 = vsel %vm5335, %v5327, -inf
      %v5337 = vrot.slane %v5336, 4
      %v5338 = vmax.f32 %v5336, %v5337
      %v5339 = vrot.slane %v5338, 2
      %v5340 = vmax.f32 %v5338, %v5339
      %v5341 = vrot.slane %v5340, 1
      %v5342 = vmax.f32 %v5340, %v5341
      %v5343 = vsel %vm5335, %v5328, -inf
      %v5344 = vrot.slane %v5343, 4
      %v5345 = vmax.f32 %v5343, %v5344
      %v5346 = vrot.slane %v5345, 2
      %v5347 = vmax.f32 %v5345, %v5346
      %v5348 = vrot.slane %v5347, 1
      %v5349 = vmax.f32 %v5347, %v5348
      %v5350 = vsel %vm5335, %v5329, -inf
      %v5351 = vrot.slane %v5350, 4
      %v5352 = vmax.f32 %v5350, %v5351
      %v5353 = vrot.slane %v5352, 2
      %v5354 = vmax.f32 %v5352, %v5353
      %v5355 = vrot.slane %v5354, 1
      %v5356 = vmax.f32 %v5354, %v5355
      %v5357 = vsel %vm5335, %v5330, -inf
      %v5358 = vrot.slane %v5357, 4
      %v5359 = vmax.f32 %v5357, %v5358
      %v5360 = vrot.slane %v5359, 2
      %v5361 = vmax.f32 %v5359, %v5360
      %v5362 = vrot.slane %v5361, 1
      %v5363 = vmax.f32 %v5361, %v5362
      %v5364 = vsel %vm5335, %v5331, -inf
      %v5365 = vrot.slane %v5364, 4
      %v5366 = vmax.f32 %v5364, %v5365
      %v5367 = vrot.slane %v5366, 2
      %v5368 = vmax.f32 %v5366, %v5367
      %v5369 = vrot.slane %v5368, 1
      %v5370 = vmax.f32 %v5368, %v5369
      %v5371 = vsel %vm5335, %v5332, -inf
      %v5372 = vrot.slane %v5371, 4
      %v5373 = vmax.f32 %v5371, %v5372
      %v5374 = vrot.slane %v5373, 2
      %v5375 = vmax.f32 %v5373, %v5374
      %v5376 = vrot.slane %v5375, 1
      %v5377 = vmax.f32 %v5375, %v5376
      %v5378 = vsel %vm5335, %v5333, -inf
      %v5379 = vrot.slane %v5378, 4
      %v5380 = vmax.f32 %v5378, %v5379
      %v5381 = vrot.slane %v5380, 2
      %v5382 = vmax.f32 %v5380, %v5381
      %v5383 = vrot.slane %v5382, 1
      %v5384 = vmax.f32 %v5382, %v5383
      %v5385 = vsel %vm5335, %v5334, -inf
      %v5386 = vrot.slane %v5385, 4
      %v5387 = vmax.f32 %v5385, %v5386
      %v5388 = vrot.slane %v5387, 2
      %v5389 = vmax.f32 %v5387, %v5388
      %v5390 = vrot.slane %v5389, 1
      %v5391 = vmax.f32 %v5389, %v5390
      %vm5392 = vcmask 1040384
      %v5393 = vsel %vm5392, %v5342, %v5349
      %vm5394 = vcmask 1041408
      %v5395 = vsel %vm5394, %v5393, %v5356
      %vm5396 = vcmask 1042432
      %v5397 = vsel %vm5396, %v5395, %v5363
      %v5398 = vsel %vm3321, %v5397, %v5370
      %v5399 = vsel %vm2956, %v5398, %v5377
      %v5400 = vsel %vm2591, %v5399, %v5384
      %v5401 = vsel %vm2064, %v5400, %v5391
      %v5402 = vld [vmem:[%s7] sm:$0xff]
      %v5403 = vld [vmem:[%s7 + $0x8] sm:$0xff]
      %v5404 = vld [vmem:[%s7 + $0x10] sm:$0xff]
      %v5405 = vld [vmem:[%s7 + $0x18] sm:$0xff]
      %v5406 = vld [vmem:[%s8] sm:$0x1]
      %v5408 = vlaneseq
      %v5409 = vshrl.u32 %v5408, 7
      %v5410 = vsub.s32 0, %v5409
      %v5411 = vrot.slane %v5406, %v5410
      %vm5413 = vcmask 261120
      %v5415 = vsel %vm5413, %v5401, 0
      %5417 = vmatprep.subr.mxu0 0.0
      %5418 = vmatpush1.msra.mxu0 %v5402
      %5419 = vmatprep.subr.mxu0 0.0
      %5420 = vmatpush1.msra.mxu0 %v5403
      %5421 = vmatprep.subr.mxu0 0.0
      %5422 = vmatpush1.msra.mxu0 %v5404
      %5423 = vmatprep.subr.mxu0 0.0
      %5424 = vmatpush1.msra.mxu0 %v5405
      %5425 = vmatprep.subr.mxu0 0.0
      %5426 = vmatpush1.msra.mxu0 0.0
      %5427 = vmatprep.subr.mxu0 0.0
      %5428 = vmatpush1.msra.mxu0 0.0
      %5429 = vmatprep.subr.mxu0 0.0
      %5430 = vmatpush1.msra.mxu0 0.0
      %5431 = vmatprep.subr.mxu0 0.0
      %5432 = vmatpush1.msra.mxu0 0.0
      %5433 = vmatprep.subr.mxu0 0.0
      %5434 = vmatpush1.msra.mxu0 0.0
      %5435 = vmatprep.subr.mxu0 0.0
      %5436 = vmatpush1.msra.mxu0 0.0
      %5437 = vmatprep.subr.mxu0 0.0
      %5438 = vmatpush1.msra.mxu0 0.0
      %5439 = vmatprep.subr.mxu0 0.0
      %5440 = vmatpush1.msra.mxu0 0.0
      %5441 = vmatprep.subr.mxu0 0.0
      %5442 = vmatpush1.msra.mxu0 0.0
      %5443 = vmatprep.subr.mxu0 0.0
      %5444 = vmatpush1.msra.mxu0 0.0
      %5445 = vmatprep.subr.mxu0 0.0
      %5446 = vmatpush1.msra.mxu0 0.0
      %5447 = vmatprep.subr.mxu0 0.0
      %5448 = vmatpush1.msra.mxu0 0.0
      %5449 = vmatprep.subr.mxu0 0.0
      %5450 = vmatpush1.msra.mxu0 0.0
      %5451 = vmatprep.subr.mxu0 0.0
      %5452 = vmatpush1.msra.mxu0 0.0
      %5453 = vmatprep.subr.mxu0 0.0
      %5454 = vmatpush1.msra.mxu0 0.0
      %5455 = vmatprep.subr.mxu0 0.0
      %5456 = vmatpush1.msra.mxu0 0.0
      %5457 = vmatprep.subr.mxu0 0.0
      %5458 = vmatpush1.msra.mxu0 0.0
      %5459 = vmatprep.subr.mxu0 0.0
      %5460 = vmatpush1.msra.mxu0 0.0
      %5461 = vmatprep.subr.mxu0 0.0
      %5462 = vmatpush1.msra.mxu0 0.0
      %5463 = vmatprep.subr.mxu0 0.0
      %5464 = vmatpush1.msra.mxu0 0.0
      %5465 = vmatprep.subr.mxu0 0.0
      %5466 = vmatpush1.msra.mxu0 0.0
      %5467 = vmatprep.subr.mxu0 0.0
      %5468 = vmatpush1.msra.mxu0 0.0
      %5469 = vmatprep.subr.mxu0 0.0
      %5470 = vmatpush1.msra.mxu0 0.0
      %5471 = vmatprep.subr.mxu0 0.0
      %5472 = vmatpush1.msra.mxu0 0.0
      %5473 = vmatprep.subr.mxu0 0.0
      %5474 = vmatpush1.msra.mxu0 0.0
      %5475 = vmatprep.subr.mxu0 0.0
      %5476 = vmatpush1.msra.mxu0 0.0
      %5477 = vmatprep.subr.mxu0 0.0
      %5478 = vmatpush1.msra.mxu0 0.0
      %5479 = vmatprep.subr.mxu0 0.0
      %5480 = vmatpush1.msra.mxu0 0.0
      %5481 = vmatprep.mubr.f32.mxu0 0.0
      %5482 = vmatmul.mubr.f32.gmra.mrb[0].mxu0 %v5415
      %v5483 = vpop.f32.mrb[0].mxu0
      %v5484 = vadd.f32 %v5411, %v5483
      %v5485 = vpop.f32.mrb[0].mxu0
      %5486 = vdwg.mxu0
      %vm5487 = vcmp.gt.f32.partialorder %v5484, 0.0
      %v5488 = vmul.f32 %v5484, 0.2
      %v5489 = vsel %vm5487, %v5484, %v5488
      %v5490 = vld [vmem:[%s9] sm:$0xff]
      %v5491 = vld [vmem:[%s9 + $0x8] sm:$0xff]
      %v5492 = vld [vmem:[%s9 + $0x10] sm:$0xff]
      %v5493 = vld [vmem:[%s9 + $0x18] sm:$0xff]
      %v5494 = vld [vmem:[%s9 + $0x20] sm:$0xff]
      %v5495 = vld [vmem:[%s9 + $0x28] sm:$0xff]
      %v5496 = vld [vmem:[%s9 + $0x30] sm:$0xff]
      %v5497 = vld [vmem:[%s9 + $0x38] sm:$0xff]
      %v5498 = vld [vmem:[%s9 + $0x40] sm:$0xff]
      %v5499 = vld [vmem:[%s9 + $0x48] sm:$0xff]
      %v5500 = vld [vmem:[%s9 + $0x50] sm:$0xff]
      %v5501 = vld [vmem:[%s9 + $0x58] sm:$0xff]
      %v5502 = vld [vmem:[%s9 + $0x60] sm:$0xff]
      %v5503 = vld [vmem:[%s9 + $0x68] sm:$0xff]
      %v5504 = vld [vmem:[%s9 + $0x70] sm:$0xff]
      %v5505 = vld [vmem:[%s9 + $0x78] sm:$0xff]
      %v5506 = vld [vmem:[%s10] sm:$0x1]
      %v5508 = vlaneseq
      %v5509 = vshrl.u32 %v5508, 7
      %v5510 = vsub.s32 0, %v5509
      %v5511 = vrot.slane %v5506, %v5510
      %5513 = vmatprep.subr.mxu0 0.0
      %5514 = vmatpush1.msra.mxu0 %v5490
      %5515 = vmatprep.subr.mxu0 0.0
      %5516 = vmatpush1.msra.mxu0 %v5491
      %5517 = vmatprep.subr.mxu0 0.0
      %5518 = vmatpush1.msra.mxu0 %v5492
      %5519 = vmatprep.subr.mxu0 0.0
      %5520 = vmatpush1.msra.mxu0 %v5493
      %5521 = vmatprep.subr.mxu0 0.0
      %5522 = vmatpush1.msra.mxu0 %v5494
      %5523 = vmatprep.subr.mxu0 0.0
      %5524 = vmatpush1.msra.mxu0 %v5495
      %5525 = vmatprep.subr.mxu0 0.0
      %5526 = vmatpush1.msra.mxu0 %v5496
      %5527 = vmatprep.subr.mxu0 0.0
      %5528 = vmatpush1.msra.mxu0 %v5497
      %5529 = vmatprep.subr.mxu0 0.0
      %5530 = vmatpush1.msra.mxu0 %v5498
      %5531 = vmatprep.subr.mxu0 0.0
      %5532 = vmatpush1.msra.mxu0 %v5499
      %5533 = vmatprep.subr.mxu0 0.0
      %5534 = vmatpush1.msra.mxu0 %v5500
      %5535 = vmatprep.subr.mxu0 0.0
      %5536 = vmatpush1.msra.mxu0 %v5501
      %5537 = vmatprep.subr.mxu0 0.0
      %5538 = vmatpush1.msra.mxu0 %v5502
      %5539 = vmatprep.subr.mxu0 0.0
      %5540 = vmatpush1.msra.mxu0 %v5503
      %5541 = vmatprep.subr.mxu0 0.0
      %5542 = vmatpush1.msra.mxu0 %v5504
      %5543 = vmatprep.subr.mxu0 0.0
      %5544 = vmatpush1.msra.mxu0 %v5505
      %5545 = vmatprep.subr.mxu0 0.0
      %5546 = vmatpush1.msra.mxu0 0.0
      %5547 = vmatprep.subr.mxu0 0.0
      %5548 = vmatpush1.msra.mxu0 0.0
      %5549 = vmatprep.subr.mxu0 0.0
      %5550 = vmatpush1.msra.mxu0 0.0
      %5551 = vmatprep.subr.mxu0 0.0
      %5552 = vmatpush1.msra.mxu0 0.0
      %5553 = vmatprep.subr.mxu0 0.0
      %5554 = vmatpush1.msra.mxu0 0.0
      %5555 = vmatprep.subr.mxu0 0.0
      %5556 = vmatpush1.msra.mxu0 0.0
      %5557 = vmatprep.subr.mxu0 0.0
      %5558 = vmatpush1.msra.mxu0 0.0
      %5559 = vmatprep.subr.mxu0 0.0
      %5560 = vmatpush1.msra.mxu0 0.0
      %5561 = vmatprep.subr.mxu0 0.0
      %5562 = vmatpush1.msra.mxu0 0.0
      %5563 = vmatprep.subr.mxu0 0.0
      %5564 = vmatpush1.msra.mxu0 0.0
      %5565 = vmatprep.subr.mxu0 0.0
      %5566 = vmatpush1.msra.mxu0 0.0
      %5567 = vmatprep.subr.mxu0 0.0
      %5568 = vmatpush1.msra.mxu0 0.0
      %5569 = vmatprep.subr.mxu0 0.0
      %5570 = vmatpush1.msra.mxu0 0.0
      %5571 = vmatprep.subr.mxu0 0.0
      %5572 = vmatpush1.msra.mxu0 0.0
      %5573 = vmatprep.subr.mxu0 0.0
      %5574 = vmatpush1.msra.mxu0 0.0
      %5575 = vmatprep.subr.mxu0 0.0
      %5576 = vmatpush1.msra.mxu0 0.0
      %5577 = vmatprep.mubr.f32.mxu0 0.0
      %5578 = vmatmul.mubr.f32.gmra.mrb[0].mxu0 %v5489
      %v5579 = vpop.f32.mrb[0].mxu0
      %v5580 = vadd.f32 %v5511, %v5579
      %v5581 = vpop.f32.mrb[0].mxu0
      %5582 = vdwg.mxu0
      %vm5583 = vcmp.gt.f32.partialorder %v5580, 0.0
      %v5584 = vmul.f32 %v5580, 0.2
      %v5585 = vsel %vm5583, %v5580, %v5584
      %v5586 = vld [vmem:[%s11] sm:$0x1]
      %v5588 = vlaneseq
      %v5589 = vshrl.u32 %v5588, 7
      %v5590 = vsub.s32 0, %v5589
      %v5591 = vrot.slane %v5586, %v5590
      %v5593 = vmul.f32 %v5585, %v5591
      %5594 = vadd.xlane.f32.xlu0 %v5593
      %v5595 = vpop.xlane.xlu0 %5594
      %v5596 = vld [vmem:[#allocation5] sm:$0x1]
      %v5598 = vlaneseq
      %v5599 = vshrl.u32 %v5598, 7
      %v5600 = vsub.s32 0, %v5599
      %v5601 = vrot.slane %v5596, %v5600
      %v5603 = vadd.f32 %v5595, %v5601
      %v5604 = vsub.f32 0.0, %v5603
      %v5605 = vmul.f32 %v5604, 1.442695
      %v5606 = vpow.pop %v5605
      %v5607 = vadd.f32 %v5606, 1.0
      %v5608 = vrcp.pop %v5607
      %v5609 = vmul.f32 1.0, %v5608
      %vm5610 = vcmask 7168
      %5611 = vst.msk [vmem:[%s442] sm:$0xff] %vm5610, %v5609
      %p5612 = scmp.lt.s32.totalorder %s26, 1
      %s5613 = scalar_select %p5612, %s26, 1
      %s5614 = smul.addr %s5613, 8
      %s5615 = scalar_lea.vmem %s13, %s5614
      // Predicated region
      $region73: #{discriminator3_forward.1} parent=71 // pred_check
        %p5616 = pneg %p322
      $region74: #{discriminator3_forward.1} parent=71 // pred_check_branch
        %5618 = sbr.rel (%p5616) target = $region76
      $region75: #{discriminator3_forward.1} parent=71 // pred_region
        _
      $region76: #{discriminator3_forward.1} parent=71 // pred_fallthru
        _
    $region72: #{discriminator3_forward.1} parent=5 // pred_fallthru
      _
    %p5619 = scmp.le.s32.totalorder 2, %s21
    // Predicated region
    $region77: #{discriminator3_forward.1} parent=5 // pred_check
      %p5620 = pneg %p5619
    $region78: #{discriminator3_forward.1} parent=5 // pred_check_branch
      %5622 = sbr.rel (%p5620) target = $region80
    $region79: #{discriminator3_forward.1} parent=5 // pred_region
      %s5623 = ssub.s32 %s21, 2
      // Predicated region
      $region81: #{discriminator3_forward.1} parent=79 // pred_check
        %p5624 = pneg %p328
      $region82: #{discriminator3_forward.1} parent=79 // pred_check_branch
        %5626 = sbr.rel (%p5624) target = $region84
      $region83: #{discriminator3_forward.1} parent=79 // pred_region
        %p5627 = scmp.lt.s32.totalorder %s27, 1
        %s5628 = scalar_select %p5627, %s27, 1
        %s5629 = smul.addr %s5628, 8
        %s5630 = scalar_lea.vmem %s13, %s5629
      $region84: #{discriminator3_forward.1} parent=79 // pred_fallthru
        _
    $region80: #{discriminator3_forward.1} parent=5 // pred_fallthru
      _
  $region6: #{discriminator3_forward.1} parent=0 // loop_footer
    %s25 = sadd.s32 1, %s21
  $region7: #{discriminator3_forward.1} parent=0 // loop_footer_branch
    %20 = sbr.rel target = $region3
  $region8: #{discriminator3_forward.1} parent=0 // loop_exit
    _

</llo_original>
